<compile_context>
chip_gen: v5e
topology: v5e:2x2
jax: 0.10.0
libtpu: 0.0.40
codegen_flags: <defaults>
</compile_context>

<pallas_src>
import functools

import jax
import jax.numpy as jnp
from jax.experimental import pallas as pl
from jax.experimental.pallas import tpu as pltpu


_FALLBACK_VMEM_LIMIT_BYTES = 48 * 1024 * 1024
_DEFAULT_COMPUTE_DTYPE = jnp.bfloat16    # MXU operand dtype (accumulation stays f32)

_VMEM_SPEC = pl.BlockSpec(memory_space=pltpu.MemorySpace.VMEM)


def _make_divisible(v, divisor, min_value=None):
    if min_value is None:
        min_value = divisor
    new_v = max(min_value, int(v + divisor / 2) // divisor * divisor)
    if new_v < 0.9 * v:
        new_v += divisor
    return new_v


def _silu(x):
    return x * jax.nn.sigmoid(x)


def _row_tile(n):
    # Largest row tile (<= 512, sublane friendly) that divides n.
    for t in (512, 256, 128, 64, 32, 16, 8):
        if n % t == 0:
            return t
    return n


def _expand_row_chunk(h):
    # Row-chunk for the 1x1 expand matmul -> keeps the f32 live value small.
    for t in (8, 7, 4):
        if h % t == 0:
            return t
    return h


def _vmem_limit_bytes():
    # Generation-aware scoped-VMEM limit (~60% of physical capacity).
    try:
        info = pltpu.get_tpu_info()
        cap = getattr(info, "vmem_capacity_bytes", None)
        if cap:
            return int(cap * 0.6)
    except Exception:
        pass
    return _FALLBACK_VMEM_LIMIT_BYTES


def _full_spec(shape):
    nd = len(shape)
    return pl.BlockSpec(shape, lambda *_: (0,) * nd)


def _zero_border(pad_ref, H, W):
    # Zero only the 1-pixel halo border; the interior is fully overwritten
    # every grid step, so this is both cheap and megacore-safe.
    ch = pad_ref.shape[-1]
    zrow = jnp.zeros((1, W + 2, ch), pad_ref.dtype)
    pad_ref[0:1, :, :] = zrow
    pad_ref[H + 1:H + 2, :, :] = zrow
    zcol = jnp.zeros((H, 1, ch), pad_ref.dtype)
    pad_ref[1:H + 1, 0:1, :] = zcol
    pad_ref[1:H + 1, W + 1:W + 2, :] = zcol


def _read_tap(pad_ref, kh, kw, Ho, Wo, stride):
    # Read one (Ho, Wo, C) shifted tap from the padded scratch.
    if stride == 1:
        return pad_ref[kh:kh + Ho, kw:kw + Wo, :]
    # Strided rows read directly from the ref (avoids loading ~2x the rows);
    # column decimation done on the loaded value.
    win = pad_ref[pl.ds(kh, Ho, stride), pl.ds(kw, (Wo - 1) * stride + 1), :]
    return jax.lax.slice(win, (0, 0, 0), win.shape, (1, stride, 1))


# ----------------------------------------------------------------- kernels
def _expand_dw_kernel(x_ref, we_ref, s1_ref, b1_ref, wdw_ref, s2_ref, b2_ref,
                      h_ref, hsum_ref, pad_ref, *, stride, out_hw):
    # Fused: 1x1 expand (MXU) + BN + SiLU -> 3x3 depthwise (VPU) + BN + SiLU.
    H, W, Cin = x_ref.shape
    Ho, Wo = out_hw
    Ch = h_ref.shape[-1]

    _zero_border(pad_ref, H, W)

    s1 = s1_ref[...]
    b1 = b1_ref[...]
    we = we_ref[...]                                      # already compute dtype
    # 1x1 expand written straight into the halo scratch in row chunks
    # (avoids a full-image f32 temporary + extra copy).
    rc = _expand_row_chunk(H)
    for r0 in range(0, H, rc):
        xc = x_ref[r0:r0 + rc].reshape(rc * W, Cin)
        ec = jnp.dot(xc, we, preferred_element_type=jnp.float32)
        ec = _silu(ec * s1 + b1)
        pad_ref[1 + r0:1 + r0 + rc, 1:W + 1, :] = (
            ec.reshape(rc, W, Ch).astype(pad_ref.dtype))

    # 3x3 depthwise conv: shifted reads of the padded scratch, f32 accumulate.
    wdw = wdw_ref[...]                                    # (3, 3, Ch) f32
    acc = jnp.zeros((Ho, Wo, Ch), jnp.float32)
    for kh in range(3):
        for kw in range(3):
            patch = _read_tap(pad_ref, kh, kw, Ho, Wo, stride)
            acc = acc + patch.astype(jnp.float32) * wdw[kh, kw]
    y = _silu(acc * s2_ref[...] + b2_ref[...])

    h_ref[...] = y.reshape(Ho * Wo, Ch).astype(h_ref.dtype)
    # Per-image channel sums for SE (f32) -> SE never re-reads h from HBM.
    hsum_ref[...] = jnp.sum(y, axis=(0, 1)).reshape(1, Ch).astype(hsum_ref.dtype)


def _fused_conv_kernel(x_ref, w_ref, s1_ref, b1_ref, h_ref, hsum_ref, pad_ref,
                       *, stride, out_hw):
    # Fused-MBConv branch: dense 3x3 conv as one im2col MXU dot (K = 9*Cin).
    H, W, Cin = x_ref.shape
    Ho, Wo = out_hw

    _zero_border(pad_ref, H, W)
    pad_ref[1:H + 1, 1:W + 1, :] = x_ref[...]             # x already compute dtype

    taps = []
    for kh in range(3):
        for kw in range(3):
            patch = _read_tap(pad_ref, kh, kw, Ho, Wo, stride)
            taps.append(patch.reshape(Ho * Wo, Cin))
    patches = jnp.concatenate(taps, axis=-1)              # (Ho*Wo, 9*Cin)

    acc = jnp.dot(patches, w_ref[...], preferred_element_type=jnp.float32)
    y = _silu(acc * s1_ref[...] + b1_ref[...])

    h_ref[...] = y.astype(h_ref.dtype)
    hsum_ref[...] = jnp.sum(y, axis=0, keepdims=True).astype(hsum_ref.dtype)


def _se_fc_kernel(hsum_ref, w1_ref, b1_ref, w2_ref, b2_ref, s_ref, *, inv_hw):
    # SE excitation on pooled stats only: mean -> FC -> SiLU -> FC -> sigmoid.
    bsz, _, ch = hsum_ref.shape
    y = hsum_ref[...].reshape(bsz, ch) * inv_hw
    h1 = _silu(jnp.dot(y, w1_ref[...], preferred_element_type=jnp.float32)
               + b1_ref[...])
    s = jax.nn.sigmoid(jnp.dot(h1, w2_ref[...], preferred_element_type=jnp.float32)
                       + b2_ref[...])
    s_ref[...] = s.reshape(bsz, 1, ch).astype(s_ref.dtype)


def _proj_kernel(h_ref, s_ref, w_ref, s3_ref, b3_ref, o_ref):
    # 1x1 projection + BN; SE channel-scale applied in compute dtype on the load.
    hh = h_ref[...] * s_ref[...].astype(h_ref.dtype)
    y = jnp.dot(hh, w_ref[...], preferred_element_type=jnp.float32)
    o_ref[...] = (y * s3_ref[...] + b3_ref[...]).astype(o_ref.dtype)


def _proj_res_kernel(h_ref, s_ref, w_ref, s3_ref, b3_ref, r_ref, o_ref):
    # Projection + BN + SE scale + fused residual add (identity blocks).
    hh = h_ref[...] * s_ref[...].astype(h_ref.dtype)
    y = jnp.dot(hh, w_ref[...], preferred_element_type=jnp.float32)
    y = y * s3_ref[...] + b3_ref[...] + r_ref[...].astype(jnp.float32)
    o_ref[...] = y.astype(o_ref.dtype)


# ----------------------------------------------------------- params / forward
def init_mbconv_params(key, inp, oup, expand_ratio, not_fuse):
    hidden = round(inp * expand_ratio)
    red = _make_divisible(inp // 4, 8)
    keys = iter(jax.random.split(key, 32))

    def w(shape, scale=0.1):
        return jax.random.normal(next(keys), shape, jnp.float32) * scale

    def bn(c):  # fold BN (inference mode) into per-channel scale / bias
        gamma = jax.random.uniform(next(keys), (c,), jnp.float32, 0.8, 1.2)
        beta = jax.random.normal(next(keys), (c,), jnp.float32) * 0.05
        mean = jax.random.normal(next(keys), (c,), jnp.float32) * 0.05
        var = jax.random.uniform(next(keys), (c,), jnp.float32, 0.8, 1.2)
        scale = gamma * jax.lax.rsqrt(var + 1e-5)
        bias = beta - mean * scale
        return scale.reshape(1, c), bias.reshape(1, c)

    p = {'hidden': hidden, 'not_fuse': not_fuse}
    if not_fuse:
        p['w_expand'] = w((inp, hidden))          # 1x1 expand
        p['bn1'] = bn(hidden)
        p['w_dw'] = w((3, 3, hidden))             # depthwise 3x3
        p['bn2'] = bn(hidden)
    else:
        p['w_fused'] = w((3, 3, inp, hidden))     # fused dense 3x3
        p['bn1'] = bn(hidden)
    p['se_w1'] = w((hidden, red))
    p['se_b1'] = w((1, red))
    p['se_w2'] = w((red, hidden))
    p['se_b2'] = w((1, hidden))
    p['w_proj'] = w((hidden, oup))                # 1x1 project
    p['bn3'] = bn(oup)
    return p


def mbconv_forward(params, x_nchw, stride, compute_dtype=_DEFAULT_COMPUTE_DTYPE):
    inp = x_nchw.shape[1]
    # Feed the big input stream in compute dtype (halves DMA / VMEM in bf16).
    x = jnp.transpose(x_nchw, (0, 2, 3, 1)).astype(compute_dtype)   # NHWC
    B, H, W, _ = x.shape
    hidden = params['hidden']
    Ho = (H + 2 - 3) // stride + 1
    Wo = (W + 2 - 3) // stride + 1
    h_dtype = compute_dtype       # halve HBM traffic of h when using bf16

    vmem_limit = _vmem_limit_bytes()
    cp_batch = pltpu.CompilerParams(
        dimension_semantics=("parallel",), vmem_limit_bytes=vmem_limit)

    conv_out_shape = (jax.ShapeDtypeStruct((B, Ho * Wo, hidden), h_dtype),
                      jax.ShapeDtypeStruct((B, 1, hidden), jnp.float32))
    conv_out_specs = (pl.BlockSpec((None, Ho * Wo, hidden), lambda b: (b, 0, 0)),
                      pl.BlockSpec((None, 1, hidden), lambda b: (b, 0, 0)))

    if params['not_fuse']:
        # ---- fused: 1x1 expand + BN + SiLU + 3x3 depthwise + BN + SiLU ----
        s1, b1 = params['bn1']
        s2, b2 = params['bn2']
        w_expand = params['w_expand'].astype(compute_dtype)   # cast once, host side
        kern = functools.partial(_expand_dw_kernel, stride=stride,
                                 out_hw=(Ho, Wo))
        h, hsum = pl.pallas_call(
            kern,
            out_shape=conv_out_shape,
            grid_spec=pltpu.PrefetchScalarGridSpec(
                num_scalar_prefetch=0,
                grid=(B,),
                in_specs=[
                    pl.BlockSpec((None, H, W, inp), lambda b: (b, 0, 0, 0)),
                    _full_spec((inp, hidden)),
                    _full_spec((1, hidden)),
                    _full_spec((1, hidden)),
                    _full_spec((3, 3, hidden)),
                    _full_spec((1, hidden)),
                    _full_spec((1, hidden)),
                ],
                out_specs=conv_out_specs,
                scratch_shapes=[pltpu.VMEM((H + 2, W + 2, hidden), compute_dtype)]),
            compiler_params=cp_batch,
        )(x, w_expand, s1, b1, params['w_dw'], s2, b2)
    else:
        # ---- fused-MBConv: dense 3x3 conv (im2col single dot) + BN + SiLU ----
        s1, b1 = params['bn1']
        w_fused = params['w_fused'].reshape(9 * inp, hidden).astype(compute_dtype)
        kern = functools.partial(_fused_conv_kernel, stride=stride,
                                 out_hw=(Ho, Wo))
        h, hsum = pl.pallas_call(
            kern,
            out_shape=conv_out_shape,
            grid_spec=pltpu.PrefetchScalarGridSpec(
                num_scalar_prefetch=0,
                grid=(B,),
                in_specs=[
                    pl.BlockSpec((None, H, W, inp), lambda b: (b, 0, 0, 0)),
                    _full_spec((9 * inp, hidden)),
                    _full_spec((1, hidden)),
                    _full_spec((1, hidden)),
                ],
                out_specs=conv_out_specs,
                scratch_shapes=[pltpu.VMEM((H + 2, W + 2, inp), compute_dtype)]),
            compiler_params=cp_batch,
        )(x, w_fused, s1, b1)

    # ---- SE excitation on pooled stats only (tiny, grid-less) ----
    s_se = pl.pallas_call(
        functools.partial(_se_fc_kernel, inv_hw=1.0 / float(Ho * Wo)),
        out_shape=jax.ShapeDtypeStruct((B, 1, hidden), jnp.float32),
        in_specs=[_VMEM_SPEC] * 5,
        out_specs=_VMEM_SPEC,
        compiler_params=pltpu.CompilerParams(vmem_limit_bytes=vmem_limit),
    )(hsum, params['se_w1'], params['se_b1'], params['se_w2'], params['se_b2'])

    # ---- 1x1 projection + BN (+ SE scale, + residual), tiled grid ----
    oup = params['w_proj'].shape[1]
    w_proj = params['w_proj'].astype(compute_dtype)        # cast once, host side
    s3, b3 = params['bn3']
    rows = Ho * Wo
    tr = _row_tile(rows)
    grid = (B, rows // tr)
    identity = (stride == 1 and inp == oup)

    cp_proj = pltpu.CompilerParams(
        dimension_semantics=("parallel", "parallel"),
        vmem_limit_bytes=vmem_limit)
    base_in_specs = [
        pl.BlockSpec((None, tr, hidden), lambda b, r: (b, r, 0)),
        pl.BlockSpec((None, 1, hidden), lambda b, r: (b, 0, 0)),
        _full_spec((hidden, oup)),
        _full_spec((1, oup)),
        _full_spec((1, oup)),
    ]
    out_spec = pl.BlockSpec((None, tr, oup), lambda b, r: (b, r, 0))
    out_shape = jax.ShapeDtypeStruct((B, rows, oup), jnp.float32)

    if identity:
        res = x.reshape(B, H * W, inp)                     # compute dtype residual
        y = pl.pallas_call(
            _proj_res_kernel,
            out_shape=out_shape,
            grid_spec=pltpu.PrefetchScalarGridSpec(
                num_scalar_prefetch=0,
                grid=grid,
                in_specs=base_in_specs
                + [pl.BlockSpec((None, tr, oup), lambda b, r: (b, r, 0))],
                out_specs=out_spec),
            compiler_params=cp_proj,
        )(h, s_se, w_proj, s3, b3, res)
    else:
        y = pl.pallas_call(
            _proj_kernel,
            out_shape=out_shape,
            grid_spec=pltpu.PrefetchScalarGridSpec(
                num_scalar_prefetch=0,
                grid=grid,
                in_specs=base_in_specs,
                out_specs=out_spec),
            compiler_params=cp_proj,
        )(h, s_se, w_proj, s3, b3)

    y = y.reshape(B, Ho, Wo, oup)
    return jnp.transpose(y, (0, 3, 1, 2))                 # back to NCHW


# ------------------------------------------------------------- pure-JAX ref
def mbconv_reference(params, x_nchw, stride):
    x = jnp.transpose(x_nchw, (0, 2, 3, 1)).astype(jnp.float32)
    dn = ('NHWC', 'HWIO', 'NHWC')
    hidden = params['hidden']

    def bn(y, sb):
        return y * sb[0] + sb[1]

    if params['not_fuse']:
        h = jnp.einsum('bhwc,cd->bhwd', x, params['w_expand'])
        h = _silu(bn(h, params['bn1']))
        wdw = params['w_dw'].reshape(3, 3, 1, hidden)
        h = jax.lax.conv_general_dilated(h, wdw, (stride, stride),
                                         ((1, 1), (1, 1)),
                                         dimension_numbers=dn,
                                         feature_group_count=hidden)
        h = _silu(bn(h, params['bn2']))
    else:
        h = jax.lax.conv_general_dilated(x, params['w_fused'], (stride, stride),
                                         ((1, 1), (1, 1)),
                                         dimension_numbers=dn)
        h = _silu(bn(h, params['bn1']))

    y = jnp.mean(h, axis=(1, 2))
    t = _silu(y @ params['se_w1'] + params['se_b1'])
    s = jax.nn.sigmoid(t @ params['se_w2'] + params['se_b2'])
    h = h * s[:, None, None, :]

    out = bn(jnp.einsum('bhwc,cd->bhwd', h, params['w_proj']), params['bn3'])
    if stride == 1 and x.shape[-1] == out.shape[-1]:
        out = out + x
    return jnp.transpose(out, (0, 3, 1, 2))


if __name__ == "__main__":
    key = jax.random.PRNGKey(0)
    kp, kx = jax.random.split(key)
    inp, oup, expand_ratio = 4, 4, 4
    x = jax.random.normal(kx, (2, inp, 16, 16), jnp.float32)

    # 1) Classic MBConv (not_fuse=True), stride=1, identity residual. f32 MXU.
    params = init_mbconv_params(kp, inp, oup, expand_ratio, not_fuse=True)
    out = mbconv_forward(params, x, stride=1, compute_dtype=jnp.float32)
    jax.block_until_ready(out)
    ref = mbconv_reference(params, x, 1)
    assert out.shape == (2, oup, 16, 16)
    assert jnp.allclose(out, ref, atol=1e-4, rtol=1e-4), "mismatch (not_fuse, f32)"

    # 2) Same block with bf16 streams + bf16 MXU operands (production mode).
    out_bf = mbconv_forward(params, x, stride=1, compute_dtype=jnp.bfloat16)
    jax.block_until_ready(out_bf)
    assert jnp.allclose(out_bf, ref, atol=3e-2, rtol=3e-2), "mismatch (not_fuse, bf16)"

    # 3) Fused-MBConv branch (not_fuse=False), stride=1, identity. f32 MXU.
    params_f = init_mbconv_params(kp, inp, oup, expand_ratio, not_fuse=False)
    out_f = mbconv_forward(params_f, x, stride=1, compute_dtype=jnp.float32)
    jax.block_until_ready(out_f)
    ref_f = mbconv_reference(params_f, x, 1)
    assert jnp.allclose(out_f, ref_f, atol=1e-4, rtol=1e-4), "mismatch (fused, f32)"

    # 4) Classic MBConv, stride=2, inp != oup (no residual path). f32 MXU.
    params_s2 = init_mbconv_params(kp, inp, 8, expand_ratio, not_fuse=True)
    out_s2 = mbconv_forward(params_s2, x, stride=2, compute_dtype=jnp.float32)
    jax.block_until_ready(out_s2)
    ref_s2 = mbconv_reference(params_s2, x, 2)
    assert out_s2.shape == (2, 8, 8, 8)
    assert jnp.allclose(out_s2, ref_s2, atol=1e-4, rtol=1e-4), "mismatch (stride=2)"

    print("KERNEL_OK")
</pallas_src>

<mosaic_0001>
module attributes {stable_mosaic.version = 11 : i64} {
  func.func @_expand_dw_kernel(%arg0: i32, %arg1: memref<1x16x16x4xf32, #tpu.memory_space<vmem>>, %arg2: memref<4x16xf32, #tpu.memory_space<vmem>>, %arg3: memref<1x16xf32, #tpu.memory_space<vmem>>, %arg4: memref<1x16xf32, #tpu.memory_space<vmem>>, %arg5: memref<3x3x16xf32, #tpu.memory_space<vmem>>, %arg6: memref<1x16xf32, #tpu.memory_space<vmem>>, %arg7: memref<1x16xf32, #tpu.memory_space<vmem>>, %arg8: memref<1x256x16xf32, #tpu.memory_space<vmem>>, %arg9: memref<1x1x16xf32, #tpu.memory_space<vmem>>, %arg10: memref<18x18x16xf32, #tpu.memory_space<vmem>>) attributes {dimension_semantics = [#tpu.dimension_semantics<parallel>], iteration_bounds = array<i64: 2>, scalar_prefetch = 0 : i64, scratch_operands = 1 : i64, tpu.core_type = #tpu.core_type<tc>, window_params = [{transform_indices = @transform_0, window_bounds = array<i64: 1, 16, 16, 4>}, {pipeline_mode = #tpu.pipeline_mode<synchronous>, transform_indices = @transform_1, window_bounds = array<i64: 4, 16>}, {pipeline_mode = #tpu.pipeline_mode<synchronous>, transform_indices = @transform_2, window_bounds = array<i64: 1, 16>}, {pipeline_mode = #tpu.pipeline_mode<synchronous>, transform_indices = @transform_3, window_bounds = array<i64: 1, 16>}, {pipeline_mode = #tpu.pipeline_mode<synchronous>, transform_indices = @transform_4, window_bounds = array<i64: 3, 3, 16>}, {pipeline_mode = #tpu.pipeline_mode<synchronous>, transform_indices = @transform_5, window_bounds = array<i64: 1, 16>}, {pipeline_mode = #tpu.pipeline_mode<synchronous>, transform_indices = @transform_6, window_bounds = array<i64: 1, 16>}, {transform_indices = @transform_7, window_bounds = array<i64: 1, 256, 16>}, {transform_indices = @transform_8, window_bounds = array<i64: 1, 1, 16>}]} {
    %cst = arith.constant 0.000000e+00 : f32
    %0 = vector.broadcast %cst : f32 to vector<1x18x16xf32>
    %c0 = arith.constant 0 : index
    %c0_0 = arith.constant 0 : index
    %c0_1 = arith.constant 0 : index
    %1 = vector.load %arg10[%c0, %c0_0, %c0_1] : memref<18x18x16xf32, #tpu.memory_space<vmem>>, vector<1x18x16xf32>
    tpu.vector_store %arg10[%c0, %c0_0, %c0_1], %0 {strides = array<i32>} : memref<18x18x16xf32, #tpu.memory_space<vmem>>, vector<1x18x16xf32>,
    %c17 = arith.constant 17 : index
    %c0_2 = arith.constant 0 : index
    %c0_3 = arith.constant 0 : index
    %2 = vector.load %arg10[%c17, %c0_2, %c0_3] : memref<18x18x16xf32, #tpu.memory_space<vmem>>, vector<1x18x16xf32>
    tpu.vector_store %arg10[%c17, %c0_2, %c0_3], %0 {strides = array<i32>} : memref<18x18x16xf32, #tpu.memory_space<vmem>>, vector<1x18x16xf32>,
    %cst_4 = arith.constant 0.000000e+00 : f32
    %3 = vector.broadcast %cst_4 : f32 to vector<16x1x16xf32>
    %c1 = arith.constant 1 : index
    %c0_5 = arith.constant 0 : index
    %c0_6 = arith.constant 0 : index
    %4 = vector.load %arg10[%c1, %c0_5, %c0_6] : memref<18x18x16xf32, #tpu.memory_space<vmem>>, vector<16x1x16xf32>
    tpu.vector_store %arg10[%c1, %c0_5, %c0_6], %3 {strides = array<i32>} : memref<18x18x16xf32, #tpu.memory_space<vmem>>, vector<16x1x16xf32>,
    %c1_7 = arith.constant 1 : index
    %c17_8 = arith.constant 17 : index
    %c0_9 = arith.constant 0 : index
    %5 = vector.load %arg10[%c1_7, %c17_8, %c0_9] : memref<18x18x16xf32, #tpu.memory_space<vmem>>, vector<16x1x16xf32>
    tpu.vector_store %arg10[%c1_7, %c17_8, %c0_9], %3 {strides = array<i32>} : memref<18x18x16xf32, #tpu.memory_space<vmem>>, vector<16x1x16xf32>,
    %c0_10 = arith.constant 0 : index
    %c0_11 = arith.constant 0 : index
    %6 = vector.load %arg3[%c0_10, %c0_11] : memref<1x16xf32, #tpu.memory_space<vmem>>, vector<1x16xf32>
    %c0_12 = arith.constant 0 : index
    %c0_13 = arith.constant 0 : index
    %7 = vector.load %arg4[%c0_12, %c0_13] : memref<1x16xf32, #tpu.memory_space<vmem>>, vector<1x16xf32>
    %c0_14 = arith.constant 0 : index
    %c0_15 = arith.constant 0 : index
    %8 = vector.load %arg2[%c0_14, %c0_15] : memref<4x16xf32, #tpu.memory_space<vmem>>, vector<4x16xf32>
    %c0_16 = arith.constant 0 : index
    %c0_17 = arith.constant 0 : index
    %c0_18 = arith.constant 0 : index
    %c0_19 = arith.constant 0 : index
    %9 = vector.load %arg1[%c0_16, %c0_17, %c0_18, %c0_19] : memref<1x16x16x4xf32, #tpu.memory_space<vmem>>, vector<1x8x16x4xf32>
    %10 = vector.shape_cast %9 : vector<1x8x16x4xf32> to vector<8x16x4xf32>
    %11 = vector.shape_cast %10 : vector<8x16x4xf32> to vector<128x4xf32>
    %cst_20 = arith.constant dense<0.000000e+00> : vector<128x16xf32>
    %12 = tpu.matmul %11, %8, %cst_20 {dimension_numbers = #tpu.dot_dimension_numbers<[1], [0], [0], [1], [0, 0, 1, 1], [], []>} : vector<128x4xf32>, vector<4x16xf32>, vector<128x16xf32> -> vector<128x16xf32>
    %13 = vector.broadcast %6 : vector<1x16xf32> to vector<128x16xf32>
    %14 = arith.mulf %12, %13 : vector<128x16xf32>
    %15 = vector.broadcast %7 : vector<1x16xf32> to vector<128x16xf32>
    %16 = arith.addf %14, %15 : vector<128x16xf32>
    %17 = arith.negf %16 : vector<128x16xf32>
    %18 = math.exp %17 : vector<128x16xf32>
    %cst_21 = arith.constant 1.000000e+00 : f32
    %19 = vector.broadcast %cst_21 : f32 to vector<128x16xf32>
    %20 = arith.addf %19, %18 : vector<128x16xf32>
    %21 = arith.divf %19, %20 : vector<128x16xf32>
    %22 = arith.mulf %16, %21 : vector<128x16xf32>
    %23 = vector.shape_cast %22 : vector<128x16xf32> to vector<8x16x16xf32>
    %c1_22 = arith.constant 1 : index
    %c1_23 = arith.constant 1 : index
    %c0_24 = arith.constant 0 : index
    %24 = vector.load %arg10[%c1_22, %c1_23, %c0_24] : memref<18x18x16xf32, #tpu.memory_space<vmem>>, vector<8x16x16xf32>
    tpu.vector_store %arg10[%c1_22, %c1_23, %c0_24], %23 {strides = array<i32>} : memref<18x18x16xf32, #tpu.memory_space<vmem>>, vector<8x16x16xf32>,
    %c0_25 = arith.constant 0 : index
    %c8 = arith.constant 8 : index
    %c0_26 = arith.constant 0 : index
    %c0_27 = arith.constant 0 : index
    %25 = vector.load %arg1[%c0_25, %c8, %c0_26, %c0_27] : memref<1x16x16x4xf32, #tpu.memory_space<vmem>>, vector<1x8x16x4xf32>
    %26 = vector.shape_cast %25 : vector<1x8x16x4xf32> to vector<8x16x4xf32>
    %27 = vector.shape_cast %26 : vector<8x16x4xf32> to vector<128x4xf32>
    %cst_28 = arith.constant dense<0.000000e+00> : vector<128x16xf32>
    %28 = tpu.matmul %27, %8, %cst_28 {dimension_numbers = #tpu.dot_dimension_numbers<[1], [0], [0], [1], [0, 0, 1, 1], [], []>} : vector<128x4xf32>, vector<4x16xf32>, vector<128x16xf32> -> vector<128x16xf32>
    %29 = vector.broadcast %6 : vector<1x16xf32> to vector<128x16xf32>
    %30 = arith.mulf %28, %29 : vector<128x16xf32>
    %31 = vector.broadcast %7 : vector<1x16xf32> to vector<128x16xf32>
    %32 = arith.addf %30, %31 : vector<128x16xf32>
    %33 = arith.negf %32 : vector<128x16xf32>
    %34 = math.exp %33 : vector<128x16xf32>
    %cst_29 = arith.constant 1.000000e+00 : f32
    %35 = vector.broadcast %cst_29 : f32 to vector<128x16xf32>
    %36 = arith.addf %35, %34 : vector<128x16xf32>
    %37 = arith.divf %35, %36 : vector<128x16xf32>
    %38 = arith.mulf %32, %37 : vector<128x16xf32>
    %39 = vector.shape_cast %38 : vector<128x16xf32> to vector<8x16x16xf32>
    %c9 = arith.constant 9 : index
    %c1_30 = arith.constant 1 : index
    %c0_31 = arith.constant 0 : index
    %40 = vector.load %arg10[%c9, %c1_30, %c0_31] : memref<18x18x16xf32, #tpu.memory_space<vmem>>, vector<8x16x16xf32>
    tpu.vector_store %arg10[%c9, %c1_30, %c0_31], %39 {strides = array<i32>} : memref<18x18x16xf32, #tpu.memory_space<vmem>>, vector<8x16x16xf32>,
    %c0_32 = arith.constant 0 : index
    %c0_33 = arith.constant 0 : index
    %c0_34 = arith.constant 0 : index
    %41 = vector.load %arg5[%c0_32, %c0_33, %c0_34] : memref<3x3x16xf32, #tpu.memory_space<vmem>>, vector<3x3x16xf32>
    %cst_35 = arith.constant 0.000000e+00 : f32
    %42 = vector.broadcast %cst_35 : f32 to vector<16x16x16xf32>
    %c0_36 = arith.constant 0 : index
    %c0_37 = arith.constant 0 : index
    %c0_38 = arith.constant 0 : index
    %43 = vector.load %arg10[%c0_36, %c0_37, %c0_38] : memref<18x18x16xf32, #tpu.memory_space<vmem>>, vector<16x16x16xf32>
    %44 = vector.extract_strided_slice %41 {offsets = [0, 0, 0], sizes = [1, 1, 16], strides = [1, 1, 1]} : vector<3x3x16xf32> to vector<1x1x16xf32>
    %45 = vector.shape_cast %44 : vector<1x1x16xf32> to vector<16xf32>
    %46 = vector.shape_cast %45 : vector<16xf32> to vector<1x1x16xf32>
    %47 = vector.broadcast %46 : vector<1x1x16xf32> to vector<16x16x16xf32>
    %48 = arith.mulf %43, %47 : vector<16x16x16xf32>
    %49 = arith.addf %42, %48 : vector<16x16x16xf32>
    %c0_39 = arith.constant 0 : index
    %c1_40 = arith.constant 1 : index
    %c0_41 = arith.constant 0 : index
    %50 = vector.load %arg10[%c0_39, %c1_40, %c0_41] : memref<18x18x16xf32, #tpu.memory_space<vmem>>, vector<16x16x16xf32>
    %51 = vector.extract_strided_slice %41 {offsets = [0, 1, 0], sizes = [1, 1, 16], strides = [1, 1, 1]} : vector<3x3x16xf32> to vector<1x1x16xf32>
    %52 = vector.shape_cast %51 : vector<1x1x16xf32> to vector<16xf32>
    %53 = vector.shape_cast %52 : vector<16xf32> to vector<1x1x16xf32>
    %54 = vector.broadcast %53 : vector<1x1x16xf32> to vector<16x16x16xf32>
    %55 = arith.mulf %50, %54 : vector<16x16x16xf32>
    %56 = arith.addf %49, %55 : vector<16x16x16xf32>
    %c0_42 = arith.constant 0 : index
    %c2 = arith.constant 2 : index
    %c0_43 = arith.constant 0 : index
    %57 = vector.load %arg10[%c0_42, %c2, %c0_43] : memref<18x18x16xf32, #tpu.memory_space<vmem>>, vector<16x16x16xf32>
    %58 = vector.extract_strided_slice %41 {offsets = [0, 2, 0], sizes = [1, 1, 16], strides = [1, 1, 1]} : vector<3x3x16xf32> to vector<1x1x16xf32>
    %59 = vector.shape_cast %58 : vector<1x1x16xf32> to vector<16xf32>
    %60 = vector.shape_cast %59 : vector<16xf32> to vector<1x1x16xf32>
    %61 = vector.broadcast %60 : vector<1x1x16xf32> to vector<16x16x16xf32>
    %62 = arith.mulf %57, %61 : vector<16x16x16xf32>
    %63 = arith.addf %56, %62 : vector<16x16x16xf32>
    %c1_44 = arith.constant 1 : index
    %c0_45 = arith.constant 0 : index
    %c0_46 = arith.constant 0 : index
    %64 = vector.load %arg10[%c1_44, %c0_45, %c0_46] : memref<18x18x16xf32, #tpu.memory_space<vmem>>, vector<16x16x16xf32>
    %65 = vector.extract_strided_slice %41 {offsets = [1, 0, 0], sizes = [1, 1, 16], strides = [1, 1, 1]} : vector<3x3x16xf32> to vector<1x1x16xf32>
    %66 = vector.shape_cast %65 : vector<1x1x16xf32> to vector<16xf32>
    %67 = vector.shape_cast %66 : vector<16xf32> to vector<1x1x16xf32>
    %68 = vector.broadcast %67 : vector<1x1x16xf32> to vector<16x16x16xf32>
    %69 = arith.mulf %64, %68 : vector<16x16x16xf32>
    %70 = arith.addf %63, %69 : vector<16x16x16xf32>
    %c1_47 = arith.constant 1 : index
    %c1_48 = arith.constant 1 : index
    %c0_49 = arith.constant 0 : index
    %71 = vector.load %arg10[%c1_47, %c1_48, %c0_49] : memref<18x18x16xf32, #tpu.memory_space<vmem>>, vector<16x16x16xf32>
    %72 = vector.extract_strided_slice %41 {offsets = [1, 1, 0], sizes = [1, 1, 16], strides = [1, 1, 1]} : vector<3x3x16xf32> to vector<1x1x16xf32>
    %73 = vector.shape_cast %72 : vector<1x1x16xf32> to vector<16xf32>
    %74 = vector.shape_cast %73 : vector<16xf32> to vector<1x1x16xf32>
    %75 = vector.broadcast %74 : vector<1x1x16xf32> to vector<16x16x16xf32>
    %76 = arith.mulf %71, %75 : vector<16x16x16xf32>
    %77 = arith.addf %70, %76 : vector<16x16x16xf32>
    %c1_50 = arith.constant 1 : index
    %c2_51 = arith.constant 2 : index
    %c0_52 = arith.constant 0 : index
    %78 = vector.load %arg10[%c1_50, %c2_51, %c0_52] : memref<18x18x16xf32, #tpu.memory_space<vmem>>, vector<16x16x16xf32>
    %79 = vector.extract_strided_slice %41 {offsets = [1, 2, 0], sizes = [1, 1, 16], strides = [1, 1, 1]} : vector<3x3x16xf32> to vector<1x1x16xf32>
    %80 = vector.shape_cast %79 : vector<1x1x16xf32> to vector<16xf32>
    %81 = vector.shape_cast %80 : vector<16xf32> to vector<1x1x16xf32>
    %82 = vector.broadcast %81 : vector<1x1x16xf32> to vector<16x16x16xf32>
    %83 = arith.mulf %78, %82 : vector<16x16x16xf32>
    %84 = arith.addf %77, %83 : vector<16x16x16xf32>
    %c2_53 = arith.constant 2 : index
    %c0_54 = arith.constant 0 : index
    %c0_55 = arith.constant 0 : index
    %85 = vector.load %arg10[%c2_53, %c0_54, %c0_55] : memref<18x18x16xf32, #tpu.memory_space<vmem>>, vector<16x16x16xf32>
    %86 = vector.extract_strided_slice %41 {offsets = [2, 0, 0], sizes = [1, 1, 16], strides = [1, 1, 1]} : vector<3x3x16xf32> to vector<1x1x16xf32>
    %87 = vector.shape_cast %86 : vector<1x1x16xf32> to vector<16xf32>
    %88 = vector.shape_cast %87 : vector<16xf32> to vector<1x1x16xf32>
    %89 = vector.broadcast %88 : vector<1x1x16xf32> to vector<16x16x16xf32>
    %90 = arith.mulf %85, %89 : vector<16x16x16xf32>
    %91 = arith.addf %84, %90 : vector<16x16x16xf32>
    %c2_56 = arith.constant 2 : index
    %c1_57 = arith.constant 1 : index
    %c0_58 = arith.constant 0 : index
    %92 = vector.load %arg10[%c2_56, %c1_57, %c0_58] : memref<18x18x16xf32, #tpu.memory_space<vmem>>, vector<16x16x16xf32>
    %93 = vector.extract_strided_slice %41 {offsets = [2, 1, 0], sizes = [1, 1, 16], strides = [1, 1, 1]} : vector<3x3x16xf32> to vector<1x1x16xf32>
    %94 = vector.shape_cast %93 : vector<1x1x16xf32> to vector<16xf32>
    %95 = vector.shape_cast %94 : vector<16xf32> to vector<1x1x16xf32>
    %96 = vector.broadcast %95 : vector<1x1x16xf32> to vector<16x16x16xf32>
    %97 = arith.mulf %92, %96 : vector<16x16x16xf32>
    %98 = arith.addf %91, %97 : vector<16x16x16xf32>
    %c2_59 = arith.constant 2 : index
    %c2_60 = arith.constant 2 : index
    %c0_61 = arith.constant 0 : index
    %99 = vector.load %arg10[%c2_59, %c2_60, %c0_61] : memref<18x18x16xf32, #tpu.memory_space<vmem>>, vector<16x16x16xf32>
    %100 = vector.extract_strided_slice %41 {offsets = [2, 2, 0], sizes = [1, 1, 16], strides = [1, 1, 1]} : vector<3x3x16xf32> to vector<1x1x16xf32>
    %101 = vector.shape_cast %100 : vector<1x1x16xf32> to vector<16xf32>
    %102 = vector.shape_cast %101 : vector<16xf32> to vector<1x1x16xf32>
    %103 = vector.broadcast %102 : vector<1x1x16xf32> to vector<16x16x16xf32>
    %104 = arith.mulf %99, %103 : vector<16x16x16xf32>
    %105 = arith.addf %98, %104 : vector<16x16x16xf32>
    %c0_62 = arith.constant 0 : index
    %c0_63 = arith.constant 0 : index
    %106 = vector.load %arg6[%c0_62, %c0_63] : memref<1x16xf32, #tpu.memory_space<vmem>>, vector<1x16xf32>
    %107 = vector.shape_cast %106 : vector<1x16xf32> to vector<1x1x16xf32>
    %108 = vector.broadcast %107 : vector<1x1x16xf32> to vector<16x16x16xf32>
    %109 = arith.mulf %105, %108 : vector<16x16x16xf32>
    %c0_64 = arith.constant 0 : index
    %c0_65 = arith.constant 0 : index
    %110 = vector.load %arg7[%c0_64, %c0_65] : memref<1x16xf32, #tpu.memory_space<vmem>>, vector<1x16xf32>
    %111 = vector.shape_cast %110 : vector<1x16xf32> to vector<1x1x16xf32>
    %112 = vector.broadcast %111 : vector<1x1x16xf32> to vector<16x16x16xf32>
    %113 = arith.addf %109, %112 : vector<16x16x16xf32>
    %114 = arith.negf %113 : vector<16x16x16xf32>
    %115 = math.exp %114 : vector<16x16x16xf32>
    %cst_66 = arith.constant 1.000000e+00 : f32
    %116 = vector.broadcast %cst_66 : f32 to vector<16x16x16xf32>
    %117 = arith.addf %116, %115 : vector<16x16x16xf32>
    %118 = arith.divf %116, %117 : vector<16x16x16xf32>
    %119 = arith.mulf %113, %118 : vector<16x16x16xf32>
    %120 = vector.shape_cast %119 : vector<16x16x16xf32> to vector<256x16xf32>
    %c0_67 = arith.constant 0 : index
    %c0_68 = arith.constant 0 : index
    %c0_69 = arith.constant 0 : index
    %121 = vector.load %arg8[%c0_67, %c0_68, %c0_69] : memref<1x256x16xf32, #tpu.memory_space<vmem>>, vector<1x256x16xf32>
    %122 = vector.shape_cast %121 : vector<1x256x16xf32> to vector<256x16xf32>
    %123 = vector.shape_cast %120 : vector<256x16xf32> to vector<1x256x16xf32>
    tpu.vector_store %arg8[%c0_67, %c0_68, %c0_69], %123 {strides = array<i32>} : memref<1x256x16xf32, #tpu.memory_space<vmem>>, vector<1x256x16xf32>,
    %cst_70 = arith.constant dense<0.000000e+00> : vector<16xf32>
    %124 = vector.multi_reduction <add>, %119, %cst_70 [0, 1] : vector<16x16x16xf32> to vector<16xf32>
    %125 = vector.shape_cast %124 : vector<16xf32> to vector<1x16xf32>
    %c0_71 = arith.constant 0 : index
    %c0_72 = arith.constant 0 : index
    %c0_73 = arith.constant 0 : index
    %126 = vector.load %arg9[%c0_71, %c0_72, %c0_73] : memref<1x1x16xf32, #tpu.memory_space<vmem>>, vector<1x1x16xf32>
    %127 = vector.shape_cast %126 : vector<1x1x16xf32> to vector<1x16xf32>
    %128 = vector.shape_cast %125 : vector<1x16xf32> to vector<1x1x16xf32>
    tpu.vector_store %arg9[%c0_71, %c0_72, %c0_73], %128 {strides = array<i32>} : memref<1x1x16xf32, #tpu.memory_space<vmem>>, vector<1x1x16xf32>,
    return
  }
  func.func @transform_0(%arg0: i32) -> (i32, i32, i32, i32) {
    %c0_i32 = arith.constant 0 : i32
    %c0_i32_0 = arith.constant 0 : i32
    %c0_i32_1 = arith.constant 0 : i32
    %c0_i32_2 = arith.constant 0 : i32
    return %arg0, %c0_i32, %c0_i32_0, %c0_i32_1 : i32, i32, i32, i32
  }
  func.func @transform_1(%arg0: i32) -> (i32, i32) {
    %c0_i32 = arith.constant 0 : i32
    %c0_i32_0 = arith.constant 0 : i32
    %c0_i32_1 = arith.constant 0 : i32
    return %c0_i32, %c0_i32_0 : i32, i32
  }
  func.func @transform_2(%arg0: i32) -> (i32, i32) {
    %c0_i32 = arith.constant 0 : i32
    %c0_i32_0 = arith.constant 0 : i32
    %c0_i32_1 = arith.constant 0 : i32
    return %c0_i32, %c0_i32_0 : i32, i32
  }
  func.func @transform_3(%arg0: i32) -> (i32, i32) {
    %c0_i32 = arith.constant 0 : i32
    %c0_i32_0 = arith.constant 0 : i32
    %c0_i32_1 = arith.constant 0 : i32
    return %c0_i32, %c0_i32_0 : i32, i32
  }
  func.func @transform_4(%arg0: i32) -> (i32, i32, i32) {
    %c0_i32 = arith.constant 0 : i32
    %c0_i32_0 = arith.constant 0 : i32
    %c0_i32_1 = arith.constant 0 : i32
    %c0_i32_2 = arith.constant 0 : i32
    return %c0_i32, %c0_i32_0, %c0_i32_1 : i32, i32, i32
  }
  func.func @transform_5(%arg0: i32) -> (i32, i32) {
    %c0_i32 = arith.constant 0 : i32
    %c0_i32_0 = arith.constant 0 : i32
    %c0_i32_1 = arith.constant 0 : i32
    return %c0_i32, %c0_i32_0 : i32, i32
  }
  func.func @transform_6(%arg0: i32) -> (i32, i32) {
    %c0_i32 = arith.constant 0 : i32
    %c0_i32_0 = arith.constant 0 : i32
    %c0_i32_1 = arith.constant 0 : i32
    return %c0_i32, %c0_i32_0 : i32, i32
  }
  func.func @transform_7(%arg0: i32) -> (i32, i32, i32) {
    %c0_i32 = arith.constant 0 : i32
    %c0_i32_0 = arith.constant 0 : i32
    %c0_i32_1 = arith.constant 0 : i32
    return %arg0, %c0_i32, %c0_i32_0 : i32, i32, i32
  }
  func.func @transform_8(%arg0: i32) -> (i32, i32, i32) {
    %c0_i32 = arith.constant 0 : i32
    %c0_i32_0 = arith.constant 0 : i32
    %c0_i32_1 = arith.constant 0 : i32
    return %arg0, %c0_i32, %c0_i32_0 : i32, i32, i32
  }
}

</mosaic_0001>

<llo_original>
// kernel: tpu_custom_call.1
$region0: #{tpu_custom_call.1}
  #allocation0 [shape = 'u32[]', space=smem, size = 0x4, offset = 0x4, fixed_abs, tag = 'smem constant byte address 0x4 - core index']
  #allocation1 [shape = 'u32[72,128]{1,0:T(1,128)}', space=vmem, size = 0x9000, scoped, tag = 'internal scratch']
  #allocation2 [shape = 'f32[18,18,16]{2,1,0:T(8,128)}', space=vmem, size = 0x36000, scoped, tag = 'scratch operand']
  %s0 = inlined_call_operand.vmem [shape: f32[2,16,16,4], index: 0, kind: input, shape index: {}]
  %s1 = inlined_call_operand.vmem [shape: f32[4,16], index: 1, kind: input, shape index: {}]
  %s2 = inlined_call_operand.vmem [shape: f32[1,16], index: 2, kind: input, shape index: {}]
  %s3 = inlined_call_operand.vmem [shape: f32[1,16], index: 3, kind: input, shape index: {}]
  %s4 = inlined_call_operand.vmem [shape: f32[3,3,16], index: 4, kind: input, shape index: {}]
  %s5 = inlined_call_operand.vmem [shape: f32[1,16], index: 5, kind: input, shape index: {}]
  %s6 = inlined_call_operand.vmem [shape: f32[1,16], index: 6, kind: input, shape index: {}]
  %s7 = inlined_call_operand.vmem [shape: f32[2,256,16], index: 7, kind: output, shape index: {0}]
  %s8 = inlined_call_operand.hbm [shape: f32[2,1,16], index: 8, kind: output, shape index: {1}]
  %9 = xla_tuple %s7, %s8
  %s10 = sld [smem:[#allocation0]]
  $region69: #{tpu_custom_call.1} parent=0
    _
  %s12 = ssub.s32 1, %s10
  %s13 = scalar_select 0, %s12, %s10
  $region1: #{tpu_custom_call.1} parent=0
    #allocation3 [shape = 'u8[1024]{0}', space=vmem, size = 0x400, scoped, tag = 'output window, operand 1']
    #allocation4 [shape = 's32[2]{0}', space=sflag, size = 0x8, scoped, tag = 'scoped memory for tpu_custom_call.1']
    %14 = vsyncpa [#allocation4], 0
    %s15 = scalar_lea.sflag [#allocation4], 1
    %16 = vsyncpa %s15, 0
    loop: start=0, step=1, limit=4
    $region2: #{tpu_custom_call.1} parent=1 // loop_pre_header
      _
    $region3: #{tpu_custom_call.1} parent=1 // loop_header
      %s18 = sphi 0, %s22
      %p19 = scmp.ge.s32.totalorder %s18, 4
      %s28 = sphi 0, %s30
      %s31 = sphi 0, %s28
      %s32 = sphi 0, %s31
      %s48 = sphi 0, %s32
      %s52 = sphi 0, %s52
      %s54 = sphi 0, %s52
      %s55 = sphi 0, %s54
      %s69 = sphi 0, %s55
      %s73 = sphi 0, %s73
      %s75 = sphi 0, %s73
      %s76 = sphi 0, %s75
      %s90 = sphi 0, %s76
      %s94 = sphi 0, %s94
      %s96 = sphi 0, %s94
      %s97 = sphi 0, %s96
      %s111 = sphi 0, %s97
      %s115 = sphi 0, %s115
      %s117 = sphi 0, %s115
      %s118 = sphi 0, %s117
      %s132 = sphi 0, %s118
      %s136 = sphi 0, %s136
      %s138 = sphi 0, %s136
      %s139 = sphi 0, %s138
      %s153 = sphi 0, %s139
      %s157 = sphi 0, %s157
      %s159 = sphi 0, %s157
      %s160 = sphi 0, %s159
      %s174 = sphi 0, %s160
      %s180 = sphi 0, %s182
      %s183 = sphi 0, %s180
      %s184 = sphi 0, %s183
      %s200 = sphi 0, %s184
      %s206 = sphi 0, %s208
      %s209 = sphi 0, %s206
      %s210 = sphi 0, %s209
      %s226 = sphi 0, %s210
    $region4: #{tpu_custom_call.1} parent=1 // loop_header_branch
      %21 = sbr.rel (%p19) target = $region8
    $region5: #{tpu_custom_call.1} parent=1 // loop_body
      %s23 = ssub.s32 %s18, 1
      %s24 = ssub.s32 %s18, 2
      %s25 = sadd.s32 %s18, 1
      %s26 = ssub.s32 %s18, %s25
      %p27 = scmp.eq.s32.totalorder %s26, 0
      %s29 = sadd.s32 %s28, 1
      %s30 = scalar_select %p27, %s28, %s29
      %p33 = pneg %p27
      %p34 = scmp.eq.s32.totalorder %s18, 1
      %p35 = por %p33, %p34
      %p36 = scmp.ne.s32.totalorder %s28, %s31
      %p37 = scmp.eq.s32.totalorder %s18, 0
      %p38 = por %p36, %p37
      %p39 = scmp.ne.s32.totalorder %s28, %s31
      %p40 = scmp.eq.s32.totalorder %s23, 1
      %p41 = por %p39, %p40
      %p42 = scmp.ne.s32.totalorder %s31, %s32
      %p43 = scmp.eq.s32.totalorder %s23, 0
      %p44 = por %p42, %p43
      %p45 = scmp.ne.s32.totalorder %s31, %s32
      %p46 = scmp.eq.s32.totalorder %s24, 1
      %p47 = por %p45, %p46
      %p49 = scmp.ne.s32.totalorder %s32, %s48
      %p50 = scmp.eq.s32.totalorder %s24, 0
      %p51 = por %p49, %p50
      %s53 = sadd.s32 %s52, 1
      %p56 = scmp.eq.s32.totalorder %s18, 1
      %p57 = scmp.ne.s32.totalorder %s52, %s54
      %p58 = scmp.eq.s32.totalorder %s18, 0
      %p59 = por %p57, %p58
      %p60 = scmp.ne.s32.totalorder %s52, %s54
      %p61 = scmp.eq.s32.totalorder %s23, 1
      %p62 = por %p60, %p61
      %p63 = scmp.ne.s32.totalorder %s54, %s55
      %p64 = scmp.eq.s32.totalorder %s23, 0
      %p65 = por %p63, %p64
      %p66 = scmp.ne.s32.totalorder %s54, %s55
      %p67 = scmp.eq.s32.totalorder %s24, 1
      %p68 = por %p66, %p67
      %p70 = scmp.ne.s32.totalorder %s55, %s69
      %p71 = scmp.eq.s32.totalorder %s24, 0
      %p72 = por %p70, %p71
      %s74 = sadd.s32 %s73, 1
      %p77 = scmp.eq.s32.totalorder %s18, 1
      %p78 = scmp.ne.s32.totalorder %s73, %s75
      %p79 = scmp.eq.s32.totalorder %s18, 0
      %p80 = por %p78, %p79
      %p81 = scmp.ne.s32.totalorder %s73, %s75
      %p82 = scmp.eq.s32.totalorder %s23, 1
      %p83 = por %p81, %p82
      %p84 = scmp.ne.s32.totalorder %s75, %s76
      %p85 = scmp.eq.s32.totalorder %s23, 0
      %p86 = por %p84, %p85
      %p87 = scmp.ne.s32.totalorder %s75, %s76
      %p88 = scmp.eq.s32.totalorder %s24, 1
      %p89 = por %p87, %p88
      %p91 = scmp.ne.s32.totalorder %s76, %s90
      %p92 = scmp.eq.s32.totalorder %s24, 0
      %p93 = por %p91, %p92
      %s95 = sadd.s32 %s94, 1
      %p98 = scmp.eq.s32.totalorder %s18, 1
      %p99 = scmp.ne.s32.totalorder %s94, %s96
      %p100 = scmp.eq.s32.totalorder %s18, 0
      %p101 = por %p99, %p100
      %p102 = scmp.ne.s32.totalorder %s94, %s96
      %p103 = scmp.eq.s32.totalorder %s23, 1
      %p104 = por %p102, %p103
      %p105 = scmp.ne.s32.totalorder %s96, %s97
      %p106 = scmp.eq.s32.totalorder %s23, 0
      %p107 = por %p105, %p106
      %p108 = scmp.ne.s32.totalorder %s96, %s97
      %p109 = scmp.eq.s32.totalorder %s24, 1
      %p110 = por %p108, %p109
      %p112 = scmp.ne.s32.totalorder %s97, %s111
      %p113 = scmp.eq.s32.totalorder %s24, 0
      %p114 = por %p112, %p113
      %s116 = sadd.s32 %s115, 1
      %p119 = scmp.eq.s32.totalorder %s18, 1
      %p120 = scmp.ne.s32.totalorder %s115, %s117
      %p121 = scmp.eq.s32.totalorder %s18, 0
      %p122 = por %p120, %p121
      %p123 = scmp.ne.s32.totalorder %s115, %s117
      %p124 = scmp.eq.s32.totalorder %s23, 1
      %p125 = por %p123, %p124
      %p126 = scmp.ne.s32.totalorder %s117, %s118
      %p127 = scmp.eq.s32.totalorder %s23, 0
      %p128 = por %p126, %p127
      %p129 = scmp.ne.s32.totalorder %s117, %s118
      %p130 = scmp.eq.s32.totalorder %s24, 1
      %p131 = por %p129, %p130
      %p133 = scmp.ne.s32.totalorder %s118, %s132
      %p134 = scmp.eq.s32.totalorder %s24, 0
      %p135 = por %p133, %p134
      %s137 = sadd.s32 %s136, 1
      %p140 = scmp.eq.s32.totalorder %s18, 1
      %p141 = scmp.ne.s32.totalorder %s136, %s138
      %p142 = scmp.eq.s32.totalorder %s18, 0
      %p143 = por %p141, %p142
      %p144 = scmp.ne.s32.totalorder %s136, %s138
      %p145 = scmp.eq.s32.totalorder %s23, 1
      %p146 = por %p144, %p145
      %p147 = scmp.ne.s32.totalorder %s138, %s139
      %p148 = scmp.eq.s32.totalorder %s23, 0
      %p149 = por %p147, %p148
      %p150 = scmp.ne.s32.totalorder %s138, %s139
      %p151 = scmp.eq.s32.totalorder %s24, 1
      %p152 = por %p150, %p151
      %p154 = scmp.ne.s32.totalorder %s139, %s153
      %p155 = scmp.eq.s32.totalorder %s24, 0
      %p156 = por %p154, %p155
      %s158 = sadd.s32 %s157, 1
      %p161 = scmp.eq.s32.totalorder %s18, 1
      %p162 = scmp.ne.s32.totalorder %s157, %s159
      %p163 = scmp.eq.s32.totalorder %s18, 0
      %p164 = por %p162, %p163
      %p165 = scmp.ne.s32.totalorder %s157, %s159
      %p166 = scmp.eq.s32.totalorder %s23, 1
      %p167 = por %p165, %p166
      %p168 = scmp.ne.s32.totalorder %s159, %s160
      %p169 = scmp.eq.s32.totalorder %s23, 0
      %p170 = por %p168, %p169
      %p171 = scmp.ne.s32.totalorder %s159, %s160
      %p172 = scmp.eq.s32.totalorder %s24, 1
      %p173 = por %p171, %p172
      %p175 = scmp.ne.s32.totalorder %s160, %s174
      %p176 = scmp.eq.s32.totalorder %s24, 0
      %p177 = por %p175, %p176
      %s178 = ssub.s32 %s18, %s25
      %p179 = scmp.eq.s32.totalorder %s178, 0
      %s181 = sadd.s32 %s180, 1
      %s182 = scalar_select %p179, %s180, %s181
      %p185 = pneg %p179
      %p186 = scmp.eq.s32.totalorder %s18, 1
      %p187 = por %p185, %p186
      %p188 = scmp.ne.s32.totalorder %s180, %s183
      %p189 = scmp.eq.s32.totalorder %s18, 0
      %p190 = por %p188, %p189
      %p191 = scmp.ne.s32.totalorder %s180, %s183
      %p192 = scmp.eq.s32.totalorder %s23, 1
      %p193 = por %p191, %p192
      %p194 = scmp.ne.s32.totalorder %s183, %s184
      %p195 = scmp.eq.s32.totalorder %s23, 0
      %p196 = por %p194, %p195
      %p197 = scmp.ne.s32.totalorder %s183, %s184
      %p198 = scmp.eq.s32.totalorder %s24, 1
      %p199 = por %p197, %p198
      %p201 = scmp.ne.s32.totalorder %s184, %s200
      %p202 = scmp.eq.s32.totalorder %s24, 0
      %p203 = por %p201, %p202
      %s204 = ssub.s32 %s18, %s25
      %p205 = scmp.eq.s32.totalorder %s204, 0
      %s207 = sadd.s32 %s206, 1
      %s208 = scalar_select %p205, %s206, %s207
      %p211 = pneg %p205
      %p212 = scmp.eq.s32.totalorder %s18, 1
      %p213 = por %p211, %p212
      %p214 = scmp.ne.s32.totalorder %s206, %s209
      %p215 = scmp.eq.s32.totalorder %s18, 0
      %p216 = por %p214, %p215
      %p217 = scmp.ne.s32.totalorder %s206, %s209
      %p218 = scmp.eq.s32.totalorder %s23, 1
      %p219 = por %p217, %p218
      %p220 = scmp.ne.s32.totalorder %s209, %s210
      %p221 = scmp.eq.s32.totalorder %s23, 0
      %p222 = por %p220, %p221
      %p223 = scmp.ne.s32.totalorder %s209, %s210
      %p224 = scmp.eq.s32.totalorder %s24, 1
      %p225 = por %p223, %p224
      %p227 = scmp.ne.s32.totalorder %s210, %s226
      %p228 = scmp.eq.s32.totalorder %s24, 0
      %p229 = por %p227, %p228
      %p230 = scmp.le.s32.totalorder 1, %s18
      %p231 = scmp.lt.s32.totalorder %s18, 3
      %p232 = pnand %p230, %p231
      %p233 = pneg %p232
      // Predicated region
      $region9: #{tpu_custom_call.1} parent=5 // pred_check
        _
      $region10: #{tpu_custom_call.1} parent=5 // pred_check_branch
        %235 = sbr.rel (%p232) target = $region12
      $region11: #{tpu_custom_call.1} parent=5 // pred_region
        %s236 = ssub.s32 %s18, 1
        // Predicated region
        $region13: #{tpu_custom_call.1} parent=11 // pred_check
          %p237 = pneg %p65
        $region14: #{tpu_custom_call.1} parent=11 // pred_check_branch
          %239 = sbr.rel (%p237) target = $region16
        $region15: #{tpu_custom_call.1} parent=11 // pred_region
          _
        $region16: #{tpu_custom_call.1} parent=11 // pred_fallthru
          _
        // Predicated region
        $region17: #{tpu_custom_call.1} parent=11 // pred_check
          %p240 = pneg %p86
        $region18: #{tpu_custom_call.1} parent=11 // pred_check_branch
          %242 = sbr.rel (%p240) target = $region20
        $region19: #{tpu_custom_call.1} parent=11 // pred_region
          _
        $region20: #{tpu_custom_call.1} parent=11 // pred_fallthru
          _
        // Predicated region
        $region21: #{tpu_custom_call.1} parent=11 // pred_check
          %p243 = pneg %p107
        $region22: #{tpu_custom_call.1} parent=11 // pred_check_branch
          %245 = sbr.rel (%p243) target = $region24
        $region23: #{tpu_custom_call.1} parent=11 // pred_region
          _
        $region24: #{tpu_custom_call.1} parent=11 // pred_fallthru
          _
        // Predicated region
        $region25: #{tpu_custom_call.1} parent=11 // pred_check
          %p246 = pneg %p128
        $region26: #{tpu_custom_call.1} parent=11 // pred_check_branch
          %248 = sbr.rel (%p246) target = $region28
        $region27: #{tpu_custom_call.1} parent=11 // pred_region
          _
        $region28: #{tpu_custom_call.1} parent=11 // pred_fallthru
          _
        // Predicated region
        $region29: #{tpu_custom_call.1} parent=11 // pred_check
          %p249 = pneg %p149
        $region30: #{tpu_custom_call.1} parent=11 // pred_check_branch
          %251 = sbr.rel (%p249) target = $region32
        $region31: #{tpu_custom_call.1} parent=11 // pred_region
          _
        $region32: #{tpu_custom_call.1} parent=11 // pred_fallthru
          _
        // Predicated region
        $region33: #{tpu_custom_call.1} parent=11 // pred_check
          %p252 = pneg %p170
        $region34: #{tpu_custom_call.1} parent=11 // pred_check_branch
          %254 = sbr.rel (%p252) target = $region36
        $region35: #{tpu_custom_call.1} parent=11 // pred_region
          _
        $region36: #{tpu_custom_call.1} parent=11 // pred_fallthru
          _
      $region12: #{tpu_custom_call.1} parent=5 // pred_fallthru
        _
      %p255 = scmp.lt.s32.totalorder %s18, 2
      // Predicated region
      $region37: #{tpu_custom_call.1} parent=5 // pred_check
        %p256 = pneg %p255
      $region38: #{tpu_custom_call.1} parent=5 // pred_check_branch
        %258 = sbr.rel (%p256) target = $region40
      $region39: #{tpu_custom_call.1} parent=5 // pred_region
        // Predicated region
        $region41: #{tpu_custom_call.1} parent=39 // pred_check
          %p259 = pneg %p38
        $region42: #{tpu_custom_call.1} parent=39 // pred_check_branch
          %261 = sbr.rel (%p259) target = $region44
        $region43: #{tpu_custom_call.1} parent=39 // pred_region
          %p262 = scmp.lt.s32.totalorder %s18, 1
          %s263 = scalar_select %p262, %s18, 1
          %s264 = smul.addr %s263, 32
          %s265 = smul.addr %s264, 8
          %s266 = scalar_lea.vmem %s0, %s265
        $region44: #{tpu_custom_call.1} parent=39 // pred_fallthru
          _
      $region40: #{tpu_custom_call.1} parent=5 // pred_fallthru
        _
      %p267 = scmp.le.s32.totalorder 1, %s18
      %p268 = scmp.lt.s32.totalorder %s18, 3
      %p269 = pnand %p267, %p268
      %p270 = pneg %p269
      // Predicated region
      $region45: #{tpu_custom_call.1} parent=5 // pred_check
        _
      $region46: #{tpu_custom_call.1} parent=5 // pred_check_branch
        %272 = sbr.rel (%p269) target = $region48
      $region47: #{tpu_custom_call.1} parent=5 // pred_region
        %s273 = ssub.s32 %s18, 1
        %p274 = scmp.lt.s32.totalorder %s23, 1
        %s275 = scalar_select %p274, %s23, 1
        %s276 = smul.addr %s275, 32
        %s277 = smul.addr %s276, 8
        %s278 = scalar_lea.vmem %s0, %s277
        %p279 = pneg %p44
        %p280 = pneg %p41
        %p281 = pneg %p65
        %p282 = pneg %p62
        %p283 = pneg %p86
        %p284 = pneg %p83
        %p285 = pneg %p107
        %p286 = pneg %p104
        %p287 = pneg %p128
        %p288 = pneg %p125
        %p289 = pneg %p149
        %p290 = pneg %p146
        %p291 = pneg %p170
        %p292 = pneg %p167
        %p293 = pneg %p196
        %p294 = pneg %p193
        %p295 = scmp.lt.s32.totalorder %s23, 1
        %s296 = scalar_select %p295, %s23, 1
        %s297 = smul.addr %s296, 32
        %s298 = smul.addr %s297, 8
        %s299 = scalar_lea.vmem %s7, %s298
        %p300 = pneg %p222
        %p301 = pneg %p219
        %s302 = sand.u32 %s209, 1
        %s303 = scalar_lea.sflag [#allocation4], %s302
        %s304 = sand.u32 %s209, 1
        %s305 = scalar_lea.vmem [#allocation3], %s304
        %p306 = scmp.lt.s32.totalorder %s23, 1
        %s307 = scalar_select %p306, %s23, 1
        %s308 = smul.addr %s307, 32
        %s309 = smul.addr %s308, 8
        %s310 = scalar_lea.vmem %s0, %s309
        %p311 = scmp.lt.s32.totalorder %s23, 1
        %s312 = scalar_select %p311, %s23, 1
        %s313 = smul.addr %s312, 32
        %s314 = smul.addr %s313, 8
        %s315 = scalar_lea.vmem %s7, %s314
        %vm316 = vcmask 130048
        %317 = vst.msk [vmem:[#allocation2] sm:$0xff] %vm316, 0.0
        %318 = vst.msk [vmem:[#allocation2 + $0x8] sm:$0xff] %vm316, 0.0
        %vm319 = vcmask 123904
        %320 = vst.msk [vmem:[#allocation2 + $0x10] sm:$0x3] %vm319, 0.0
        %s321 = scalar_lea.vmem [#allocation2], 408
        %322 = vst.msk [vmem:[%s321] sm:$0xff] %vm316, 0.0
        %323 = vst.msk [vmem:[%s321 + $0x8] sm:$0xff] %vm316, 0.0
        %324 = vst.msk [vmem:[%s321 + $0x10] sm:$0x3] %vm319, 0.0
        %s325 = scalar_lea.vmem [#allocation2], 24
        %vm326 = vcmask 122880
        %327 = vst.msk [vmem:[%s325] sm:$0x1] %vm326, 0.0
        %328 = vst.msk [vmem:[%s325 + $0x18] sm:$0x1] %vm326, 0.0
        %329 = vst.msk [vmem:[%s325 + $0x30] sm:$0x1] %vm326, 0.0
        %330 = vst.msk [vmem:[%s325 + $0x48] sm:$0x1] %vm326, 0.0
        %331 = vst.msk [vmem:[%s325 + $0x60] sm:$0x1] %vm326, 0.0
        %332 = vst.msk [vmem:[%s325 + $0x78] sm:$0x1] %vm326, 0.0
        %333 = vst.msk [vmem:[%s325 + $0x90] sm:$0x1] %vm326, 0.0
        %334 = vst.msk [vmem:[%s325 + $0xa8] sm:$0x1] %vm326, 0.0
        %335 = vst.msk [vmem:[%s325 + $0xc0] sm:$0x1] %vm326, 0.0
        %336 = vst.msk [vmem:[%s325 + $0xd8] sm:$0x1] %vm326, 0.0
        %337 = vst.msk [vmem:[%s325 + $0xf0] sm:$0x1] %vm326, 0.0
        %338 = vst.msk [vmem:[%s325 + $0x108] sm:$0x1] %vm326, 0.0
        %339 = vst.msk [vmem:[%s325 + $0x120] sm:$0x1] %vm326, 0.0
        %340 = vst.msk [vmem:[%s325 + $0x138] sm:$0x1] %vm326, 0.0
        %341 = vst.msk [vmem:[%s325 + $0x150] sm:$0x1] %vm326, 0.0
        %342 = vst.msk [vmem:[%s325 + $0x168] sm:$0x1] %vm326, 0.0
        %343 = vst.msk [vmem:[%s325 + $0x11] sm:$0x1] %vm326, 0.0
        %344 = vst.msk [vmem:[%s325 + $0x29] sm:$0x1] %vm326, 0.0
        %345 = vst.msk [vmem:[%s325 + $0x41] sm:$0x1] %vm326, 0.0
        %346 = vst.msk [vmem:[%s325 + $0x59] sm:$0x1] %vm326, 0.0
        %347 = vst.msk [vmem:[%s325 + $0x71] sm:$0x1] %vm326, 0.0
        %348 = vst.msk [vmem:[%s325 + $0x89] sm:$0x1] %vm326, 0.0
        %349 = vst.msk [vmem:[%s325 + $0xa1] sm:$0x1] %vm326, 0.0
        %350 = vst.msk [vmem:[%s325 + $0xb9] sm:$0x1] %vm326, 0.0
        %351 = vst.msk [vmem:[%s325 + $0xd1] sm:$0x1] %vm326, 0.0
        %352 = vst.msk [vmem:[%s325 + $0xe9] sm:$0x1] %vm326, 0.0
        %353 = vst.msk [vmem:[%s325 + $0x101] sm:$0x1] %vm326, 0.0
        %354 = vst.msk [vmem:[%s325 + $0x119] sm:$0x1] %vm326, 0.0
        %355 = vst.msk [vmem:[%s325 + $0x131] sm:$0x1] %vm326, 0.0
        %356 = vst.msk [vmem:[%s325 + $0x149] sm:$0x1] %vm326, 0.0
        %357 = vst.msk [vmem:[%s325 + $0x161] sm:$0x1] %vm326, 0.0
        %358 = vst.msk [vmem:[%s325 + $0x179] sm:$0x1] %vm326, 0.0
        %v359 = vld [vmem:[%s2] sm:$0x1]
        %v360 = vld [vmem:[%s3] sm:$0x1]
        %v361 = vld [vmem:[%s1] sm:$0xf]
        %v362 = vld [vmem:[%s310] sm:$0xff]
        %v363 = vld [vmem:[%s310 + $0x8] sm:$0xff]
        %v364 = vld [vmem:[%s310 + $0x10] sm:$0xff]
        %v365 = vld [vmem:[%s310 + $0x18] sm:$0xff]
        %v366 = vld [vmem:[%s310 + $0x20] sm:$0xff]
        %v367 = vld [vmem:[%s310 + $0x28] sm:$0xff]
        %v368 = vld [vmem:[%s310 + $0x30] sm:$0xff]
        %v369 = vld [vmem:[%s310 + $0x38] sm:$0xff]
        %v370 = vld [vmem:[%s310 + $0x40] sm:$0xff]
        %v371 = vld [vmem:[%s310 + $0x48] sm:$0xff]
        %v372 = vld [vmem:[%s310 + $0x50] sm:$0xff]
        %v373 = vld [vmem:[%s310 + $0x58] sm:$0xff]
        %v374 = vld [vmem:[%s310 + $0x60] sm:$0xff]
        %v375 = vld [vmem:[%s310 + $0x68] sm:$0xff]
        %v376 = vld [vmem:[%s310 + $0x70] sm:$0xff]
        %v377 = vld [vmem:[%s310 + $0x78] sm:$0xff]
        %vm378 = vcmask 31744
        %v380 = vsel %vm378, %v362, 0
        %v383 = vsel %vm378, %v363, 0
        %v386 = vsel %vm378, %v364, 0
        %v389 = vsel %vm378, %v365, 0
        %v392 = vsel %vm378, %v366, 0
        %v395 = vsel %vm378, %v367, 0
        %v398 = vsel %vm378, %v368, 0
        %v401 = vsel %vm378, %v369, 0
        %v404 = vsel %vm378, %v370, 0
        %v407 = vsel %vm378, %v371, 0
        %v410 = vsel %vm378, %v372, 0
        %v413 = vsel %vm378, %v373, 0
        %v416 = vsel %vm378, %v374, 0
        %v419 = vsel %vm378, %v375, 0
        %v422 = vsel %vm378, %v376, 0
        %v425 = vsel %vm378, %v377, 0
        %vm427 = vcmask 1043456
        %v429 = vsel %vm427, %v361, 0
        %431 = vmatpush.msra.mxu0 0.0
        %432 = vmatpush.msra.mxu0 0.0
        %433 = vmatpush.msra.mxu0 0.0
        %434 = vmatpush.msra.mxu0 0.0
        %435 = vmatpush.msra.mxu0 0.0
        %436 = vmatpush.msra.mxu0 0.0
        %437 = vmatpush.msra.mxu0 0.0
        %438 = vmatpush.msra.mxu0 0.0
        %439 = vmatpush.msra.mxu0 0.0
        %440 = vmatpush.msra.mxu0 0.0
        %441 = vmatpush.msra.mxu0 0.0
        %442 = vmatpush.msra.mxu0 0.0
        %443 = vmatpush.msra.mxu0 0.0
        %444 = vmatpush.msra.mxu0 0.0
        %445 = vmatpush.msra.mxu0 0.0
        %446 = vmatpush.msra.mxu0 %v429
        %447 = vmatmul.f32.gmra.mxu0 %v380
        %v448 = vpop.f32.mrf.mxu0
        %v449 = vadd.f32 0.0, %v448
        %450 = vmatmul.f32.gmra.mxu0 %v383
        %v451 = vpop.f32.mrf.mxu0
        %v452 = vadd.f32 0.0, %v451
        %453 = vmatmul.f32.gmra.mxu0 %v386
        %v454 = vpop.f32.mrf.mxu0
        %v455 = vadd.f32 0.0, %v454
        %456 = vmatmul.f32.gmra.mxu0 %v389
        %v457 = vpop.f32.mrf.mxu0
        %v458 = vadd.f32 0.0, %v457
        %459 = vmatmul.f32.gmra.mxu0 %v392
        %v460 = vpop.f32.mrf.mxu0
        %v461 = vadd.f32 0.0, %v460
        %462 = vmatmul.f32.gmra.mxu0 %v395
        %v463 = vpop.f32.mrf.mxu0
        %v464 = vadd.f32 0.0, %v463
        %465 = vmatmul.f32.gmra.mxu0 %v398
        %v466 = vpop.f32.mrf.mxu0
        %v467 = vadd.f32 0.0, %v466
        %468 = vmatmul.f32.gmra.mxu0 %v401
        %v469 = vpop.f32.mrf.mxu0
        %v470 = vadd.f32 0.0, %v469
        %471 = vmatmul.f32.gmra.mxu0 %v404
        %v472 = vpop.f32.mrf.mxu0
        %v473 = vadd.f32 0.0, %v472
        %474 = vmatmul.f32.gmra.mxu0 %v407
        %v475 = vpop.f32.mrf.mxu0
        %v476 = vadd.f32 0.0, %v475
        %477 = vmatmul.f32.gmra.mxu0 %v410
        %v478 = vpop.f32.mrf.mxu0
        %v479 = vadd.f32 0.0, %v478
        %480 = vmatmul.f32.gmra.mxu0 %v413
        %v481 = vpop.f32.mrf.mxu0
        %v482 = vadd.f32 0.0, %v481
        %483 = vmatmul.f32.gmra.mxu0 %v416
        %v484 = vpop.f32.mrf.mxu0
        %v485 = vadd.f32 0.0, %v484
        %486 = vmatmul.f32.gmra.mxu0 %v419
        %v487 = vpop.f32.mrf.mxu0
        %v488 = vadd.f32 0.0, %v487
        %489 = vmatmul.f32.gmra.mxu0 %v422
        %v490 = vpop.f32.mrf.mxu0
        %v491 = vadd.f32 0.0, %v490
        %492 = vmatmul.f32.gmra.mxu0 %v425
        %v493 = vpop.f32.mrf.mxu0
        %v494 = vadd.f32 0.0, %v493
        %495 = vdwg.mxu0
        %v497 = vperm.slane %v359, 0
        %v499 = vmul.f32 %v449, %v497
        %v500 = vmul.f32 %v452, %v497
        %v501 = vmul.f32 %v455, %v497
        %v502 = vmul.f32 %v458, %v497
        %v503 = vmul.f32 %v461, %v497
        %v504 = vmul.f32 %v464, %v497
        %v505 = vmul.f32 %v467, %v497
        %v506 = vmul.f32 %v470, %v497
        %v507 = vmul.f32 %v473, %v497
        %v508 = vmul.f32 %v476, %v497
        %v509 = vmul.f32 %v479, %v497
        %v510 = vmul.f32 %v482, %v497
        %v511 = vmul.f32 %v485, %v497
        %v512 = vmul.f32 %v488, %v497
        %v513 = vmul.f32 %v491, %v497
        %v514 = vmul.f32 %v494, %v497
        %v516 = vperm.slane %v360, 0
        %v518 = vadd.f32 %v499, %v516
        %v519 = vadd.f32 %v500, %v516
        %v520 = vadd.f32 %v501, %v516
        %v521 = vadd.f32 %v502, %v516
        %v522 = vadd.f32 %v503, %v516
        %v523 = vadd.f32 %v504, %v516
        %v524 = vadd.f32 %v505, %v516
        %v525 = vadd.f32 %v506, %v516
        %v526 = vadd.f32 %v507, %v516
        %v527 = vadd.f32 %v508, %v516
        %v528 = vadd.f32 %v509, %v516
        %v529 = vadd.f32 %v510, %v516
        %v530 = vadd.f32 %v511, %v516
        %v531 = vadd.f32 %v512, %v516
        %v532 = vadd.f32 %v513, %v516
        %v533 = vadd.f32 %v514, %v516
        %v534 = vxor.u32 %v518, 2147483648
        %v535 = vxor.u32 %v519, 2147483648
        %v536 = vxor.u32 %v520, 2147483648
        %v537 = vxor.u32 %v521, 2147483648
        %v538 = vxor.u32 %v522, 2147483648
        %v539 = vxor.u32 %v523, 2147483648
        %v540 = vxor.u32 %v524, 2147483648
        %v541 = vxor.u32 %v525, 2147483648
        %v542 = vxor.u32 %v526, 2147483648
        %v543 = vxor.u32 %v527, 2147483648
        %v544 = vxor.u32 %v528, 2147483648
        %v545 = vxor.u32 %v529, 2147483648
        %v546 = vxor.u32 %v530, 2147483648
        %v547 = vxor.u32 %v531, 2147483648
        %v548 = vxor.u32 %v532, 2147483648
        %v549 = vxor.u32 %v533, 2147483648
        %v550 = vmul.f32 %v534, 1.442695
        %v551 = vpow.pop %v550
        %v552 = vmul.f32 %v535, 1.442695
        %v553 = vpow.pop %v552
        %v554 = vmul.f32 %v536, 1.442695
        %v555 = vpow.pop %v554
        %v556 = vmul.f32 %v537, 1.442695
        %v557 = vpow.pop %v556
        %v558 = vmul.f32 %v538, 1.442695
        %v559 = vpow.pop %v558
        %v560 = vmul.f32 %v539, 1.442695
        %v561 = vpow.pop %v560
        %v562 = vmul.f32 %v540, 1.442695
        %v563 = vpow.pop %v562
        %v564 = vmul.f32 %v541, 1.442695
        %v565 = vpow.pop %v564
        %v566 = vmul.f32 %v542, 1.442695
        %v567 = vpow.pop %v566
        %v568 = vmul.f32 %v543, 1.442695
        %v569 = vpow.pop %v568
        %v570 = vmul.f32 %v544, 1.442695
        %v571 = vpow.pop %v570
        %v572 = vmul.f32 %v545, 1.442695
        %v573 = vpow.pop %v572
        %v574 = vmul.f32 %v546, 1.442695
        %v575 = vpow.pop %v574
        %v576 = vmul.f32 %v547, 1.442695
        %v577 = vpow.pop %v576
        %v578 = vmul.f32 %v548, 1.442695
        %v579 = vpow.pop %v578
        %v580 = vmul.f32 %v549, 1.442695
        %v581 = vpow.pop %v580
        %v582 = vadd.f32 %v551, 1.0
        %v583 = vadd.f32 %v553, 1.0
        %v584 = vadd.f32 %v555, 1.0
        %v585 = vadd.f32 %v557, 1.0
        %v586 = vadd.f32 %v559, 1.0
        %v587 = vadd.f32 %v561, 1.0
        %v588 = vadd.f32 %v563, 1.0
        %v589 = vadd.f32 %v565, 1.0
        %v590 = vadd.f32 %v567, 1.0
        %v591 = vadd.f32 %v569, 1.0
        %v592 = vadd.f32 %v571, 1.0
        %v593 = vadd.f32 %v573, 1.0
        %v594 = vadd.f32 %v575, 1.0
        %v595 = vadd.f32 %v577, 1.0
        %v596 = vadd.f32 %v579, 1.0
        %v597 = vadd.f32 %v581, 1.0
        %v598 = vrcp.pop %v582
        %v599 = vmul.f32 %v582, %v598
        %v600 = vsub.f32 1.0, %v599
        %v601 = vmul.f32 %v598, %v600
        %v602 = vadd.f32 %v598, %v601
        %vm603 = vweird.f32 %v582
        %vm604 = vweird.f32 %v598
        %vm605 = vmor %vm603, %vm604
        %v606 = vsel %vm605, %v598, %v602
        %v607 = vand.u32 2147483647, %v582
        %vm608 = vcmp.eq.f32.partialorder %v607, 8.507059e+37
        %v609 = vand.u32 %v582, 2147483648
        %v610 = vor.u32 1.1754944e-38, %v609
        %v611 = vsel %vm608, %v610, %v606
        %v612 = vmul.f32 1.0, %v611
        %v613 = vrcp.pop %v583
        %v614 = vmul.f32 %v583, %v613
        %v615 = vsub.f32 1.0, %v614
        %v616 = vmul.f32 %v613, %v615
        %v617 = vadd.f32 %v613, %v616
        %vm618 = vweird.f32 %v583
        %vm619 = vweird.f32 %v613
        %vm620 = vmor %vm618, %vm619
        %v621 = vsel %vm620, %v613, %v617
        %v622 = vand.u32 2147483647, %v583
        %vm623 = vcmp.eq.f32.partialorder %v622, 8.507059e+37
        %v624 = vand.u32 %v583, 2147483648
        %v625 = vor.u32 1.1754944e-38, %v624
        %v626 = vsel %vm623, %v625, %v621
        %v627 = vmul.f32 1.0, %v626
        %v628 = vrcp.pop %v584
        %v629 = vmul.f32 %v584, %v628
        %v630 = vsub.f32 1.0, %v629
        %v631 = vmul.f32 %v628, %v630
        %v632 = vadd.f32 %v628, %v631
        %vm633 = vweird.f32 %v584
        %vm634 = vweird.f32 %v628
        %vm635 = vmor %vm633, %vm634
        %v636 = vsel %vm635, %v628, %v632
        %v637 = vand.u32 2147483647, %v584
        %vm638 = vcmp.eq.f32.partialorder %v637, 8.507059e+37
        %v639 = vand.u32 %v584, 2147483648
        %v640 = vor.u32 1.1754944e-38, %v639
        %v641 = vsel %vm638, %v640, %v636
        %v642 = vmul.f32 1.0, %v641
        %v643 = vrcp.pop %v585
        %v644 = vmul.f32 %v585, %v643
        %v645 = vsub.f32 1.0, %v644
        %v646 = vmul.f32 %v643, %v645
        %v647 = vadd.f32 %v643, %v646
        %vm648 = vweird.f32 %v585
        %vm649 = vweird.f32 %v643
        %vm650 = vmor %vm648, %vm649
        %v651 = vsel %vm650, %v643, %v647
        %v652 = vand.u32 2147483647, %v585
        %vm653 = vcmp.eq.f32.partialorder %v652, 8.507059e+37
        %v654 = vand.u32 %v585, 2147483648
        %v655 = vor.u32 1.1754944e-38, %v654
        %v656 = vsel %vm653, %v655, %v651
        %v657 = vmul.f32 1.0, %v656
        %v658 = vrcp.pop %v586
        %v659 = vmul.f32 %v586, %v658
        %v660 = vsub.f32 1.0, %v659
        %v661 = vmul.f32 %v658, %v660
        %v662 = vadd.f32 %v658, %v661
        %vm663 = vweird.f32 %v586
        %vm664 = vweird.f32 %v658
        %vm665 = vmor %vm663, %vm664
        %v666 = vsel %vm665, %v658, %v662
        %v667 = vand.u32 2147483647, %v586
        %vm668 = vcmp.eq.f32.partialorder %v667, 8.507059e+37
        %v669 = vand.u32 %v586, 2147483648
        %v670 = vor.u32 1.1754944e-38, %v669
        %v671 = vsel %vm668, %v670, %v666
        %v672 = vmul.f32 1.0, %v671
        %v673 = vrcp.pop %v587
        %v674 = vmul.f32 %v587, %v673
        %v675 = vsub.f32 1.0, %v674
        %v676 = vmul.f32 %v673, %v675
        %v677 = vadd.f32 %v673, %v676
        %vm678 = vweird.f32 %v587
        %vm679 = vweird.f32 %v673
        %vm680 = vmor %vm678, %vm679
        %v681 = vsel %vm680, %v673, %v677
        %v682 = vand.u32 2147483647, %v587
        %vm683 = vcmp.eq.f32.partialorder %v682, 8.507059e+37
        %v684 = vand.u32 %v587, 2147483648
        %v685 = vor.u32 1.1754944e-38, %v684
        %v686 = vsel %vm683, %v685, %v681
        %v687 = vmul.f32 1.0, %v686
        %v688 = vrcp.pop %v588
        %v689 = vmul.f32 %v588, %v688
        %v690 = vsub.f32 1.0, %v689
        %v691 = vmul.f32 %v688, %v690
        %v692 = vadd.f32 %v688, %v691
        %vm693 = vweird.f32 %v588
        %vm694 = vweird.f32 %v688
        %vm695 = vmor %vm693, %vm694
        %v696 = vsel %vm695, %v688, %v692
        %v697 = vand.u32 2147483647, %v588
        %vm698 = vcmp.eq.f32.partialorder %v697, 8.507059e+37
        %v699 = vand.u32 %v588, 2147483648
        %v700 = vor.u32 1.1754944e-38, %v699
        %v701 = vsel %vm698, %v700, %v696
        %v702 = vmul.f32 1.0, %v701
        %v703 = vrcp.pop %v589
        %v704 = vmul.f32 %v589, %v703
        %v705 = vsub.f32 1.0, %v704
        %v706 = vmul.f32 %v703, %v705
        %v707 = vadd.f32 %v703, %v706
        %vm708 = vweird.f32 %v589
        %vm709 = vweird.f32 %v703
        %vm710 = vmor %vm708, %vm709
        %v711 = vsel %vm710, %v703, %v707
        %v712 = vand.u32 2147483647, %v589
        %vm713 = vcmp.eq.f32.partialorder %v712, 8.507059e+37
        %v714 = vand.u32 %v589, 2147483648
        %v715 = vor.u32 1.1754944e-38, %v714
        %v716 = vsel %vm713, %v715, %v711
        %v717 = vmul.f32 1.0, %v716
        %v718 = vrcp.pop %v590
        %v719 = vmul.f32 %v590, %v718
        %v720 = vsub.f32 1.0, %v719
        %v721 = vmul.f32 %v718, %v720
        %v722 = vadd.f32 %v718, %v721
        %vm723 = vweird.f32 %v590
        %vm724 = vweird.f32 %v718
        %vm725 = vmor %vm723, %vm724
        %v726 = vsel %vm725, %v718, %v722
        %v727 = vand.u32 2147483647, %v590
        %vm728 = vcmp.eq.f32.partialorder %v727, 8.507059e+37
        %v729 = vand.u32 %v590, 2147483648
        %v730 = vor.u32 1.1754944e-38, %v729
        %v731 = vsel %vm728, %v730, %v726
        %v732 = vmul.f32 1.0, %v731
        %v733 = vrcp.pop %v591
        %v734 = vmul.f32 %v591, %v733
        %v735 = vsub.f32 1.0, %v734
        %v736 = vmul.f32 %v733, %v735
        %v737 = vadd.f32 %v733, %v736
        %vm738 = vweird.f32 %v591
        %vm739 = vweird.f32 %v733
        %vm740 = vmor %vm738, %vm739
        %v741 = vsel %vm740, %v733, %v737
        %v742 = vand.u32 2147483647, %v591
        %vm743 = vcmp.eq.f32.partialorder %v742, 8.507059e+37
        %v744 = vand.u32 %v591, 2147483648
        %v745 = vor.u32 1.1754944e-38, %v744
        %v746 = vsel %vm743, %v745, %v741
        %v747 = vmul.f32 1.0, %v746
        %v748 = vrcp.pop %v592
        %v749 = vmul.f32 %v592, %v748
        %v750 = vsub.f32 1.0, %v749
        %v751 = vmul.f32 %v748, %v750
        %v752 = vadd.f32 %v748, %v751
        %vm753 = vweird.f32 %v592
        %vm754 = vweird.f32 %v748
        %vm755 = vmor %vm753, %vm754
        %v756 = vsel %vm755, %v748, %v752
        %v757 = vand.u32 2147483647, %v592
        %vm758 = vcmp.eq.f32.partialorder %v757, 8.507059e+37
        %v759 = vand.u32 %v592, 2147483648
        %v760 = vor.u32 1.1754944e-38, %v759
        %v761 = vsel %vm758, %v760, %v756
        %v762 = vmul.f32 1.0, %v761
        %v763 = vrcp.pop %v593
        %v764 = vmul.f32 %v593, %v763
        %v765 = vsub.f32 1.0, %v764
        %v766 = vmul.f32 %v763, %v765
        %v767 = vadd.f32 %v763, %v766
        %vm768 = vweird.f32 %v593
        %vm769 = vweird.f32 %v763
        %vm770 = vmor %vm768, %vm769
        %v771 = vsel %vm770, %v763, %v767
        %v772 = vand.u32 2147483647, %v593
        %vm773 = vcmp.eq.f32.partialorder %v772, 8.507059e+37
        %v774 = vand.u32 %v593, 2147483648
        %v775 = vor.u32 1.1754944e-38, %v774
        %v776 = vsel %vm773, %v775, %v771
        %v777 = vmul.f32 1.0, %v776
        %v778 = vrcp.pop %v594
        %v779 = vmul.f32 %v594, %v778
        %v780 = vsub.f32 1.0, %v779
        %v781 = vmul.f32 %v778, %v780
        %v782 = vadd.f32 %v778, %v781
        %vm783 = vweird.f32 %v594
        %vm784 = vweird.f32 %v778
        %vm785 = vmor %vm783, %vm784
        %v786 = vsel %vm785, %v778, %v782
        %v787 = vand.u32 2147483647, %v594
        %vm788 = vcmp.eq.f32.partialorder %v787, 8.507059e+37
        %v789 = vand.u32 %v594, 2147483648
        %v790 = vor.u32 1.1754944e-38, %v789
        %v791 = vsel %vm788, %v790, %v786
        %v792 = vmul.f32 1.0, %v791
        %v793 = vrcp.pop %v595
        %v794 = vmul.f32 %v595, %v793
        %v795 = vsub.f32 1.0, %v794
        %v796 = vmul.f32 %v793, %v795
        %v797 = vadd.f32 %v793, %v796
        %vm798 = vweird.f32 %v595
        %vm799 = vweird.f32 %v793
        %vm800 = vmor %vm798, %vm799
        %v801 = vsel %vm800, %v793, %v797
        %v802 = vand.u32 2147483647, %v595
        %vm803 = vcmp.eq.f32.partialorder %v802, 8.507059e+37
        %v804 = vand.u32 %v595, 2147483648
        %v805 = vor.u32 1.1754944e-38, %v804
        %v806 = vsel %vm803, %v805, %v801
        %v807 = vmul.f32 1.0, %v806
        %v808 = vrcp.pop %v596
        %v809 = vmul.f32 %v596, %v808
        %v810 = vsub.f32 1.0, %v809
        %v811 = vmul.f32 %v808, %v810
        %v812 = vadd.f32 %v808, %v811
        %vm813 = vweird.f32 %v596
        %vm814 = vweird.f32 %v808
        %vm815 = vmor %vm813, %vm814
        %v816 = vsel %vm815, %v808, %v812
        %v817 = vand.u32 2147483647, %v596
        %vm818 = vcmp.eq.f32.partialorder %v817, 8.507059e+37
        %v819 = vand.u32 %v596, 2147483648
        %v820 = vor.u32 1.1754944e-38, %v819
        %v821 = vsel %vm818, %v820, %v816
        %v822 = vmul.f32 1.0, %v821
        %v823 = vrcp.pop %v597
        %v824 = vmul.f32 %v597, %v823
        %v825 = vsub.f32 1.0, %v824
        %v826 = vmul.f32 %v823, %v825
        %v827 = vadd.f32 %v823, %v826
        %vm828 = vweird.f32 %v597
        %vm829 = vweird.f32 %v823
        %vm830 = vmor %vm828, %vm829
        %v831 = vsel %vm830, %v823, %v827
        %v832 = vand.u32 2147483647, %v597
        %vm833 = vcmp.eq.f32.partialorder %v832, 8.507059e+37
        %v834 = vand.u32 %v597, 2147483648
        %v835 = vor.u32 1.1754944e-38, %v834
        %v836 = vsel %vm833, %v835, %v831
        %v837 = vmul.f32 1.0, %v836
        %v838 = vmul.f32 %v518, %v612
        %v839 = vmul.f32 %v519, %v627
        %v840 = vmul.f32 %v520, %v642
        %v841 = vmul.f32 %v521, %v657
        %v842 = vmul.f32 %v522, %v672
        %v843 = vmul.f32 %v523, %v687
        %v844 = vmul.f32 %v524, %v702
        %v845 = vmul.f32 %v525, %v717
        %v846 = vmul.f32 %v526, %v732
        %v847 = vmul.f32 %v527, %v747
        %v848 = vmul.f32 %v528, %v762
        %v849 = vmul.f32 %v529, %v777
        %v850 = vmul.f32 %v530, %v792
        %v851 = vmul.f32 %v531, %v807
        %v852 = vmul.f32 %v532, %v822
        %v853 = vmul.f32 %v533, %v837
        %854 = vst.msk [vmem:[%s325 + $0x1] sm:$0xff] %vm316, %v838
        %855 = vst.msk [vmem:[%s325 + $0x9] sm:$0xff] %vm316, %v839
        %856 = vst.msk [vmem:[%s325 + $0x19] sm:$0xff] %vm316, %v840
        %857 = vst.msk [vmem:[%s325 + $0x21] sm:$0xff] %vm316, %v841
        %858 = vst.msk [vmem:[%s325 + $0x31] sm:$0xff] %vm316, %v842
        %859 = vst.msk [vmem:[%s325 + $0x39] sm:$0xff] %vm316, %v843
        %860 = vst.msk [vmem:[%s325 + $0x49] sm:$0xff] %vm316, %v844
        %861 = vst.msk [vmem:[%s325 + $0x51] sm:$0xff] %vm316, %v845
        %862 = vst.msk [vmem:[%s325 + $0x61] sm:$0xff] %vm316, %v846
        %863 = vst.msk [vmem:[%s325 + $0x69] sm:$0xff] %vm316, %v847
        %864 = vst.msk [vmem:[%s325 + $0x79] sm:$0xff] %vm316, %v848
        %865 = vst.msk [vmem:[%s325 + $0x81] sm:$0xff] %vm316, %v849
        %866 = vst.msk [vmem:[%s325 + $0x91] sm:$0xff] %vm316, %v850
        %867 = vst.msk [vmem:[%s325 + $0x99] sm:$0xff] %vm316, %v851
        %868 = vst.msk [vmem:[%s325 + $0xa9] sm:$0xff] %vm316, %v852
        %869 = vst.msk [vmem:[%s325 + $0xb1] sm:$0xff] %vm316, %v853
        %s870 = scalar_lea.vmem %s310, 128
        %v871 = vld [vmem:[%s870] sm:$0xff]
        %v872 = vld [vmem:[%s870 + $0x8] sm:$0xff]
        %v873 = vld [vmem:[%s870 + $0x10] sm:$0xff]
        %v874 = vld [vmem:[%s870 + $0x18] sm:$0xff]
        %v875 = vld [vmem:[%s870 + $0x20] sm:$0xff]
        %v876 = vld [vmem:[%s870 + $0x28] sm:$0xff]
        %v877 = vld [vmem:[%s870 + $0x30] sm:$0xff]
        %v878 = vld [vmem:[%s870 + $0x38] sm:$0xff]
        %v879 = vld [vmem:[%s870 + $0x40] sm:$0xff]
        %v880 = vld [vmem:[%s870 + $0x48] sm:$0xff]
        %v881 = vld [vmem:[%s870 + $0x50] sm:$0xff]
        %v882 = vld [vmem:[%s870 + $0x58] sm:$0xff]
        %v883 = vld [vmem:[%s870 + $0x60] sm:$0xff]
        %v884 = vld [vmem:[%s870 + $0x68] sm:$0xff]
        %v885 = vld [vmem:[%s870 + $0x70] sm:$0xff]
        %v886 = vld [vmem:[%s870 + $0x78] sm:$0xff]
        %v888 = vsel %vm378, %v871, 0
        %v891 = vsel %vm378, %v872, 0
        %v894 = vsel %vm378, %v873, 0
        %v897 = vsel %vm378, %v874, 0
        %v900 = vsel %vm378, %v875, 0
        %v903 = vsel %vm378, %v876, 0
        %v906 = vsel %vm378, %v877, 0
        %v909 = vsel %vm378, %v878, 0
        %v912 = vsel %vm378, %v879, 0
        %v915 = vsel %vm378, %v880, 0
        %v918 = vsel %vm378, %v881, 0
        %v921 = vsel %vm378, %v882, 0
        %v924 = vsel %vm378, %v883, 0
        %v927 = vsel %vm378, %v884, 0
        %v930 = vsel %vm378, %v885, 0
        %v933 = vsel %vm378, %v886, 0
        %935 = vmatpush.msra.mxu0 0.0
        %936 = vmatpush.msra.mxu0 0.0
        %937 = vmatpush.msra.mxu0 0.0
        %938 = vmatpush.msra.mxu0 0.0
        %939 = vmatpush.msra.mxu0 0.0
        %940 = vmatpush.msra.mxu0 0.0
        %941 = vmatpush.msra.mxu0 0.0
        %942 = vmatpush.msra.mxu0 0.0
        %943 = vmatpush.msra.mxu0 0.0
        %944 = vmatpush.msra.mxu0 0.0
        %945 = vmatpush.msra.mxu0 0.0
        %946 = vmatpush.msra.mxu0 0.0
        %947 = vmatpush.msra.mxu0 0.0
        %948 = vmatpush.msra.mxu0 0.0
        %949 = vmatpush.msra.mxu0 0.0
        %950 = vmatpush.msra.mxu0 %v429
        %951 = vmatmul.f32.gmra.mxu0 %v888
        %v952 = vpop.f32.mrf.mxu0
        %v953 = vadd.f32 0.0, %v952
        %954 = vmatmul.f32.gmra.mxu0 %v891
        %v955 = vpop.f32.mrf.mxu0
        %v956 = vadd.f32 0.0, %v955
        %957 = vmatmul.f32.gmra.mxu0 %v894
        %v958 = vpop.f32.mrf.mxu0
        %v959 = vadd.f32 0.0, %v958
        %960 = vmatmul.f32.gmra.mxu0 %v897
        %v961 = vpop.f32.mrf.mxu0
        %v962 = vadd.f32 0.0, %v961
        %963 = vmatmul.f32.gmra.mxu0 %v900
        %v964 = vpop.f32.mrf.mxu0
        %v965 = vadd.f32 0.0, %v964
        %966 = vmatmul.f32.gmra.mxu0 %v903
        %v967 = vpop.f32.mrf.mxu0
        %v968 = vadd.f32 0.0, %v967
        %969 = vmatmul.f32.gmra.mxu0 %v906
        %v970 = vpop.f32.mrf.mxu0
        %v971 = vadd.f32 0.0, %v970
        %972 = vmatmul.f32.gmra.mxu0 %v909
        %v973 = vpop.f32.mrf.mxu0
        %v974 = vadd.f32 0.0, %v973
        %975 = vmatmul.f32.gmra.mxu0 %v912
        %v976 = vpop.f32.mrf.mxu0
        %v977 = vadd.f32 0.0, %v976
        %978 = vmatmul.f32.gmra.mxu0 %v915
        %v979 = vpop.f32.mrf.mxu0
        %v980 = vadd.f32 0.0, %v979
        %981 = vmatmul.f32.gmra.mxu0 %v918
        %v982 = vpop.f32.mrf.mxu0
        %v983 = vadd.f32 0.0, %v982
        %984 = vmatmul.f32.gmra.mxu0 %v921
        %v985 = vpop.f32.mrf.mxu0
        %v986 = vadd.f32 0.0, %v985
        %987 = vmatmul.f32.gmra.mxu0 %v924
        %v988 = vpop.f32.mrf.mxu0
        %v989 = vadd.f32 0.0, %v988
        %990 = vmatmul.f32.gmra.mxu0 %v927
        %v991 = vpop.f32.mrf.mxu0
        %v992 = vadd.f32 0.0, %v991
        %993 = vmatmul.f32.gmra.mxu0 %v930
        %v994 = vpop.f32.mrf.mxu0
        %v995 = vadd.f32 0.0, %v994
        %996 = vmatmul.f32.gmra.mxu0 %v933
        %v997 = vpop.f32.mrf.mxu0
        %v998 = vadd.f32 0.0, %v997
        %999 = vdwg.mxu0
        %v1000 = vmul.f32 %v953, %v497
        %v1001 = vmul.f32 %v956, %v497
        %v1002 = vmul.f32 %v959, %v497
        %v1003 = vmul.f32 %v962, %v497
        %v1004 = vmul.f32 %v965, %v497
        %v1005 = vmul.f32 %v968, %v497
        %v1006 = vmul.f32 %v971, %v497
        %v1007 = vmul.f32 %v974, %v497
        %v1008 = vmul.f32 %v977, %v497
        %v1009 = vmul.f32 %v980, %v497
        %v1010 = vmul.f32 %v983, %v497
        %v1011 = vmul.f32 %v986, %v497
        %v1012 = vmul.f32 %v989, %v497
        %v1013 = vmul.f32 %v992, %v497
        %v1014 = vmul.f32 %v995, %v497
        %v1015 = vmul.f32 %v998, %v497
        %v1016 = vadd.f32 %v1000, %v516
        %v1017 = vadd.f32 %v1001, %v516
        %v1018 = vadd.f32 %v1002, %v516
        %v1019 = vadd.f32 %v1003, %v516
        %v1020 = vadd.f32 %v1004, %v516
        %v1021 = vadd.f32 %v1005, %v516
        %v1022 = vadd.f32 %v1006, %v516
        %v1023 = vadd.f32 %v1007, %v516
        %v1024 = vadd.f32 %v1008, %v516
        %v1025 = vadd.f32 %v1009, %v516
        %v1026 = vadd.f32 %v1010, %v516
        %v1027 = vadd.f32 %v1011, %v516
        %v1028 = vadd.f32 %v1012, %v516
        %v1029 = vadd.f32 %v1013, %v516
        %v1030 = vadd.f32 %v1014, %v516
        %v1031 = vadd.f32 %v1015, %v516
        %v1032 = vxor.u32 %v1016, 2147483648
        %v1033 = vxor.u32 %v1017, 2147483648
        %v1034 = vxor.u32 %v1018, 2147483648
        %v1035 = vxor.u32 %v1019, 2147483648
        %v1036 = vxor.u32 %v1020, 2147483648
        %v1037 = vxor.u32 %v1021, 2147483648
        %v1038 = vxor.u32 %v1022, 2147483648
        %v1039 = vxor.u32 %v1023, 2147483648
        %v1040 = vxor.u32 %v1024, 2147483648
        %v1041 = vxor.u32 %v1025, 2147483648
        %v1042 = vxor.u32 %v1026, 2147483648
        %v1043 = vxor.u32 %v1027, 2147483648
        %v1044 = vxor.u32 %v1028, 2147483648
        %v1045 = vxor.u32 %v1029, 2147483648
        %v1046 = vxor.u32 %v1030, 2147483648
        %v1047 = vxor.u32 %v1031, 2147483648
        %v1048 = vmul.f32 %v1032, 1.442695
        %v1049 = vpow.pop %v1048
        %v1050 = vmul.f32 %v1033, 1.442695
        %v1051 = vpow.pop %v1050
        %v1052 = vmul.f32 %v1034, 1.442695
        %v1053 = vpow.pop %v1052
        %v1054 = vmul.f32 %v1035, 1.442695
        %v1055 = vpow.pop %v1054
        %v1056 = vmul.f32 %v1036, 1.442695
        %v1057 = vpow.pop %v1056
        %v1058 = vmul.f32 %v1037, 1.442695
        %v1059 = vpow.pop %v1058
        %v1060 = vmul.f32 %v1038, 1.442695
        %v1061 = vpow.pop %v1060
        %v1062 = vmul.f32 %v1039, 1.442695
        %v1063 = vpow.pop %v1062
        %v1064 = vmul.f32 %v1040, 1.442695
        %v1065 = vpow.pop %v1064
        %v1066 = vmul.f32 %v1041, 1.442695
        %v1067 = vpow.pop %v1066
        %v1068 = vmul.f32 %v1042, 1.442695
        %v1069 = vpow.pop %v1068
        %v1070 = vmul.f32 %v1043, 1.442695
        %v1071 = vpow.pop %v1070
        %v1072 = vmul.f32 %v1044, 1.442695
        %v1073 = vpow.pop %v1072
        %v1074 = vmul.f32 %v1045, 1.442695
        %v1075 = vpow.pop %v1074
        %v1076 = vmul.f32 %v1046, 1.442695
        %v1077 = vpow.pop %v1076
        %v1078 = vmul.f32 %v1047, 1.442695
        %v1079 = vpow.pop %v1078
        %v1080 = vadd.f32 %v1049, 1.0
        %v1081 = vadd.f32 %v1051, 1.0
        %v1082 = vadd.f32 %v1053, 1.0
        %v1083 = vadd.f32 %v1055, 1.0
        %v1084 = vadd.f32 %v1057, 1.0
        %v1085 = vadd.f32 %v1059, 1.0
        %v1086 = vadd.f32 %v1061, 1.0
        %v1087 = vadd.f32 %v1063, 1.0
        %v1088 = vadd.f32 %v1065, 1.0
        %v1089 = vadd.f32 %v1067, 1.0
        %v1090 = vadd.f32 %v1069, 1.0
        %v1091 = vadd.f32 %v1071, 1.0
        %v1092 = vadd.f32 %v1073, 1.0
        %v1093 = vadd.f32 %v1075, 1.0
        %v1094 = vadd.f32 %v1077, 1.0
        %v1095 = vadd.f32 %v1079, 1.0
        %v1096 = vrcp.pop %v1080
        %v1097 = vmul.f32 %v1080, %v1096
        %v1098 = vsub.f32 1.0, %v1097
        %v1099 = vmul.f32 %v1096, %v1098
        %v1100 = vadd.f32 %v1096, %v1099
        %vm1101 = vweird.f32 %v1080
        %vm1102 = vweird.f32 %v1096
        %vm1103 = vmor %vm1101, %vm1102
        %v1104 = vsel %vm1103, %v1096, %v1100
        %v1105 = vand.u32 2147483647, %v1080
        %vm1106 = vcmp.eq.f32.partialorder %v1105, 8.507059e+37
        %v1107 = vand.u32 %v1080, 2147483648
        %v1108 = vor.u32 1.1754944e-38, %v1107
        %v1109 = vsel %vm1106, %v1108, %v1104
        %v1110 = vmul.f32 1.0, %v1109
        %v1111 = vrcp.pop %v1081
        %v1112 = vmul.f32 %v1081, %v1111
        %v1113 = vsub.f32 1.0, %v1112
        %v1114 = vmul.f32 %v1111, %v1113
        %v1115 = vadd.f32 %v1111, %v1114
        %vm1116 = vweird.f32 %v1081
        %vm1117 = vweird.f32 %v1111
        %vm1118 = vmor %vm1116, %vm1117
        %v1119 = vsel %vm1118, %v1111, %v1115
        %v1120 = vand.u32 2147483647, %v1081
        %vm1121 = vcmp.eq.f32.partialorder %v1120, 8.507059e+37
        %v1122 = vand.u32 %v1081, 2147483648
        %v1123 = vor.u32 1.1754944e-38, %v1122
        %v1124 = vsel %vm1121, %v1123, %v1119
        %v1125 = vmul.f32 1.0, %v1124
        %v1126 = vrcp.pop %v1082
        %v1127 = vmul.f32 %v1082, %v1126
        %v1128 = vsub.f32 1.0, %v1127
        %v1129 = vmul.f32 %v1126, %v1128
        %v1130 = vadd.f32 %v1126, %v1129
        %vm1131 = vweird.f32 %v1082
        %vm1132 = vweird.f32 %v1126
        %vm1133 = vmor %vm1131, %vm1132
        %v1134 = vsel %vm1133, %v1126, %v1130
        %v1135 = vand.u32 2147483647, %v1082
        %vm1136 = vcmp.eq.f32.partialorder %v1135, 8.507059e+37
        %v1137 = vand.u32 %v1082, 2147483648
        %v1138 = vor.u32 1.1754944e-38, %v1137
        %v1139 = vsel %vm1136, %v1138, %v1134
        %v1140 = vmul.f32 1.0, %v1139
        %v1141 = vrcp.pop %v1083
        %v1142 = vmul.f32 %v1083, %v1141
        %v1143 = vsub.f32 1.0, %v1142
        %v1144 = vmul.f32 %v1141, %v1143
        %v1145 = vadd.f32 %v1141, %v1144
        %vm1146 = vweird.f32 %v1083
        %vm1147 = vweird.f32 %v1141
        %vm1148 = vmor %vm1146, %vm1147
        %v1149 = vsel %vm1148, %v1141, %v1145
        %v1150 = vand.u32 2147483647, %v1083
        %vm1151 = vcmp.eq.f32.partialorder %v1150, 8.507059e+37
        %v1152 = vand.u32 %v1083, 2147483648
        %v1153 = vor.u32 1.1754944e-38, %v1152
        %v1154 = vsel %vm1151, %v1153, %v1149
        %v1155 = vmul.f32 1.0, %v1154
        %v1156 = vrcp.pop %v1084
        %v1157 = vmul.f32 %v1084, %v1156
        %v1158 = vsub.f32 1.0, %v1157
        %v1159 = vmul.f32 %v1156, %v1158
        %v1160 = vadd.f32 %v1156, %v1159
        %vm1161 = vweird.f32 %v1084
        %vm1162 = vweird.f32 %v1156
        %vm1163 = vmor %vm1161, %vm1162
        %v1164 = vsel %vm1163, %v1156, %v1160
        %v1165 = vand.u32 2147483647, %v1084
        %vm1166 = vcmp.eq.f32.partialorder %v1165, 8.507059e+37
        %v1167 = vand.u32 %v1084, 2147483648
        %v1168 = vor.u32 1.1754944e-38, %v1167
        %v1169 = vsel %vm1166, %v1168, %v1164
        %v1170 = vmul.f32 1.0, %v1169
        %v1171 = vrcp.pop %v1085
        %v1172 = vmul.f32 %v1085, %v1171
        %v1173 = vsub.f32 1.0, %v1172
        %v1174 = vmul.f32 %v1171, %v1173
        %v1175 = vadd.f32 %v1171, %v1174
        %vm1176 = vweird.f32 %v1085
        %vm1177 = vweird.f32 %v1171
        %vm1178 = vmor %vm1176, %vm1177
        %v1179 = vsel %vm1178, %v1171, %v1175
        %v1180 = vand.u32 2147483647, %v1085
        %vm1181 = vcmp.eq.f32.partialorder %v1180, 8.507059e+37
        %v1182 = vand.u32 %v1085, 2147483648
        %v1183 = vor.u32 1.1754944e-38, %v1182
        %v1184 = vsel %vm1181, %v1183, %v1179
        %v1185 = vmul.f32 1.0, %v1184
        %v1186 = vrcp.pop %v1086
        %v1187 = vmul.f32 %v1086, %v1186
        %v1188 = vsub.f32 1.0, %v1187
        %v1189 = vmul.f32 %v1186, %v1188
        %v1190 = vadd.f32 %v1186, %v1189
        %vm1191 = vweird.f32 %v1086
        %vm1192 = vweird.f32 %v1186
        %vm1193 = vmor %vm1191, %vm1192
        %v1194 = vsel %vm1193, %v1186, %v1190
        %v1195 = vand.u32 2147483647, %v1086
        %vm1196 = vcmp.eq.f32.partialorder %v1195, 8.507059e+37
        %v1197 = vand.u32 %v1086, 2147483648
        %v1198 = vor.u32 1.1754944e-38, %v1197
        %v1199 = vsel %vm1196, %v1198, %v1194
        %v1200 = vmul.f32 1.0, %v1199
        %v1201 = vrcp.pop %v1087
        %v1202 = vmul.f32 %v1087, %v1201
        %v1203 = vsub.f32 1.0, %v1202
        %v1204 = vmul.f32 %v1201, %v1203
        %v1205 = vadd.f32 %v1201, %v1204
        %vm1206 = vweird.f32 %v1087
        %vm1207 = vweird.f32 %v1201
        %vm1208 = vmor %vm1206, %vm1207
        %v1209 = vsel %vm1208, %v1201, %v1205
        %v1210 = vand.u32 2147483647, %v1087
        %vm1211 = vcmp.eq.f32.partialorder %v1210, 8.507059e+37
        %v1212 = vand.u32 %v1087, 2147483648
        %v1213 = vor.u32 1.1754944e-38, %v1212
        %v1214 = vsel %vm1211, %v1213, %v1209
        %v1215 = vmul.f32 1.0, %v1214
        %v1216 = vrcp.pop %v1088
        %v1217 = vmul.f32 %v1088, %v1216
        %v1218 = vsub.f32 1.0, %v1217
        %v1219 = vmul.f32 %v1216, %v1218
        %v1220 = vadd.f32 %v1216, %v1219
        %vm1221 = vweird.f32 %v1088
        %vm1222 = vweird.f32 %v1216
        %vm1223 = vmor %vm1221, %vm1222
        %v1224 = vsel %vm1223, %v1216, %v1220
        %v1225 = vand.u32 2147483647, %v1088
        %vm1226 = vcmp.eq.f32.partialorder %v1225, 8.507059e+37
        %v1227 = vand.u32 %v1088, 2147483648
        %v1228 = vor.u32 1.1754944e-38, %v1227
        %v1229 = vsel %vm1226, %v1228, %v1224
        %v1230 = vmul.f32 1.0, %v1229
        %v1231 = vrcp.pop %v1089
        %v1232 = vmul.f32 %v1089, %v1231
        %v1233 = vsub.f32 1.0, %v1232
        %v1234 = vmul.f32 %v1231, %v1233
        %v1235 = vadd.f32 %v1231, %v1234
        %vm1236 = vweird.f32 %v1089
        %vm1237 = vweird.f32 %v1231
        %vm1238 = vmor %vm1236, %vm1237
        %v1239 = vsel %vm1238, %v1231, %v1235
        %v1240 = vand.u32 2147483647, %v1089
        %vm1241 = vcmp.eq.f32.partialorder %v1240, 8.507059e+37
        %v1242 = vand.u32 %v1089, 2147483648
        %v1243 = vor.u32 1.1754944e-38, %v1242
        %v1244 = vsel %vm1241, %v1243, %v1239
        %v1245 = vmul.f32 1.0, %v1244
        %v1246 = vrcp.pop %v1090
        %v1247 = vmul.f32 %v1090, %v1246
        %v1248 = vsub.f32 1.0, %v1247
        %v1249 = vmul.f32 %v1246, %v1248
        %v1250 = vadd.f32 %v1246, %v1249
        %vm1251 = vweird.f32 %v1090
        %vm1252 = vweird.f32 %v1246
        %vm1253 = vmor %vm1251, %vm1252
        %v1254 = vsel %vm1253, %v1246, %v1250
        %v1255 = vand.u32 2147483647, %v1090
        %vm1256 = vcmp.eq.f32.partialorder %v1255, 8.507059e+37
        %v1257 = vand.u32 %v1090, 2147483648
        %v1258 = vor.u32 1.1754944e-38, %v1257
        %v1259 = vsel %vm1256, %v1258, %v1254
        %v1260 = vmul.f32 1.0, %v1259
        %v1261 = vrcp.pop %v1091
        %v1262 = vmul.f32 %v1091, %v1261
        %v1263 = vsub.f32 1.0, %v1262
        %v1264 = vmul.f32 %v1261, %v1263
        %v1265 = vadd.f32 %v1261, %v1264
        %vm1266 = vweird.f32 %v1091
        %vm1267 = vweird.f32 %v1261
        %vm1268 = vmor %vm1266, %vm1267
        %v1269 = vsel %vm1268, %v1261, %v1265
        %v1270 = vand.u32 2147483647, %v1091
        %vm1271 = vcmp.eq.f32.partialorder %v1270, 8.507059e+37
        %v1272 = vand.u32 %v1091, 2147483648
        %v1273 = vor.u32 1.1754944e-38, %v1272
        %v1274 = vsel %vm1271, %v1273, %v1269
        %v1275 = vmul.f32 1.0, %v1274
        %v1276 = vrcp.pop %v1092
        %v1277 = vmul.f32 %v1092, %v1276
        %v1278 = vsub.f32 1.0, %v1277
        %v1279 = vmul.f32 %v1276, %v1278
        %v1280 = vadd.f32 %v1276, %v1279
        %vm1281 = vweird.f32 %v1092
        %vm1282 = vweird.f32 %v1276
        %vm1283 = vmor %vm1281, %vm1282
        %v1284 = vsel %vm1283, %v1276, %v1280
        %v1285 = vand.u32 2147483647, %v1092
        %vm1286 = vcmp.eq.f32.partialorder %v1285, 8.507059e+37
        %v1287 = vand.u32 %v1092, 2147483648
        %v1288 = vor.u32 1.1754944e-38, %v1287
        %v1289 = vsel %vm1286, %v1288, %v1284
        %v1290 = vmul.f32 1.0, %v1289
        %v1291 = vrcp.pop %v1093
        %v1292 = vmul.f32 %v1093, %v1291
        %v1293 = vsub.f32 1.0, %v1292
        %v1294 = vmul.f32 %v1291, %v1293
        %v1295 = vadd.f32 %v1291, %v1294
        %vm1296 = vweird.f32 %v1093
        %vm1297 = vweird.f32 %v1291
        %vm1298 = vmor %vm1296, %vm1297
        %v1299 = vsel %vm1298, %v1291, %v1295
        %v1300 = vand.u32 2147483647, %v1093
        %vm1301 = vcmp.eq.f32.partialorder %v1300, 8.507059e+37
        %v1302 = vand.u32 %v1093, 2147483648
        %v1303 = vor.u32 1.1754944e-38, %v1302
        %v1304 = vsel %vm1301, %v1303, %v1299
        %v1305 = vmul.f32 1.0, %v1304
        %v1306 = vrcp.pop %v1094
        %v1307 = vmul.f32 %v1094, %v1306
        %v1308 = vsub.f32 1.0, %v1307
        %v1309 = vmul.f32 %v1306, %v1308
        %v1310 = vadd.f32 %v1306, %v1309
        %vm1311 = vweird.f32 %v1094
        %vm1312 = vweird.f32 %v1306
        %vm1313 = vmor %vm1311, %vm1312
        %v1314 = vsel %vm1313, %v1306, %v1310
        %v1315 = vand.u32 2147483647, %v1094
        %vm1316 = vcmp.eq.f32.partialorder %v1315, 8.507059e+37
        %v1317 = vand.u32 %v1094, 2147483648
        %v1318 = vor.u32 1.1754944e-38, %v1317
        %v1319 = vsel %vm1316, %v1318, %v1314
        %v1320 = vmul.f32 1.0, %v1319
        %v1321 = vrcp.pop %v1095
        %v1322 = vmul.f32 %v1095, %v1321
        %v1323 = vsub.f32 1.0, %v1322
        %v1324 = vmul.f32 %v1321, %v1323
        %v1325 = vadd.f32 %v1321, %v1324
        %vm1326 = vweird.f32 %v1095
        %vm1327 = vweird.f32 %v1321
        %vm1328 = vmor %vm1326, %vm1327
        %v1329 = vsel %vm1328, %v1321, %v1325
        %v1330 = vand.u32 2147483647, %v1095
        %vm1331 = vcmp.eq.f32.partialorder %v1330, 8.507059e+37
        %v1332 = vand.u32 %v1095, 2147483648
        %v1333 = vor.u32 1.1754944e-38, %v1332
        %v1334 = vsel %vm1331, %v1333, %v1329
        %v1335 = vmul.f32 1.0, %v1334
        %v1336 = vmul.f32 %v1016, %v1110
        %v1337 = vmul.f32 %v1017, %v1125
        %v1338 = vmul.f32 %v1018, %v1140
        %v1339 = vmul.f32 %v1019, %v1155
        %v1340 = vmul.f32 %v1020, %v1170
        %v1341 = vmul.f32 %v1021, %v1185
        %v1342 = vmul.f32 %v1022, %v1200
        %v1343 = vmul.f32 %v1023, %v1215
        %v1344 = vmul.f32 %v1024, %v1230
        %v1345 = vmul.f32 %v1025, %v1245
        %v1346 = vmul.f32 %v1026, %v1260
        %v1347 = vmul.f32 %v1027, %v1275
        %v1348 = vmul.f32 %v1028, %v1290
        %v1349 = vmul.f32 %v1029, %v1305
        %v1350 = vmul.f32 %v1030, %v1320
        %v1351 = vmul.f32 %v1031, %v1335
        %s1352 = scalar_lea.vmem [#allocation2], 216
        %1353 = vst.msk [vmem:[%s1352 + $0x1] sm:$0xff] %vm316, %v1336
        %1354 = vst.msk [vmem:[%s1352 + $0x9] sm:$0xff] %vm316, %v1337
        %1355 = vst.msk [vmem:[%s1352 + $0x19] sm:$0xff] %vm316, %v1338
        %1356 = vst.msk [vmem:[%s1352 + $0x21] sm:$0xff] %vm316, %v1339
        %1357 = vst.msk [vmem:[%s1352 + $0x31] sm:$0xff] %vm316, %v1340
        %1358 = vst.msk [vmem:[%s1352 + $0x39] sm:$0xff] %vm316, %v1341
        %1359 = vst.msk [vmem:[%s1352 + $0x49] sm:$0xff] %vm316, %v1342
        %1360 = vst.msk [vmem:[%s1352 + $0x51] sm:$0xff] %vm316, %v1343
        %1361 = vst.msk [vmem:[%s1352 + $0x61] sm:$0xff] %vm316, %v1344
        %1362 = vst.msk [vmem:[%s1352 + $0x69] sm:$0xff] %vm316, %v1345
        %1363 = vst.msk [vmem:[%s1352 + $0x79] sm:$0xff] %vm316, %v1346
        %1364 = vst.msk [vmem:[%s1352 + $0x81] sm:$0xff] %vm316, %v1347
        %1365 = vst.msk [vmem:[%s1352 + $0x91] sm:$0xff] %vm316, %v1348
        %1366 = vst.msk [vmem:[%s1352 + $0x99] sm:$0xff] %vm316, %v1349
        %1367 = vst.msk [vmem:[%s1352 + $0xa9] sm:$0xff] %vm316, %v1350
        %1368 = vst.msk [vmem:[%s1352 + $0xb1] sm:$0xff] %vm316, %v1351
        %v1369 = vld [vmem:[%s4] sm:$0x7]
        %v1370 = vld [vmem:[%s4 + $0x4] sm:$0x7]
        %v1371 = vld [vmem:[%s4 + $0x8] sm:$0x7]
        %v1372 = vld [vmem:[#allocation2] sm:$0xff]
        %v1373 = vld [vmem:[#allocation2 + $0x8] sm:$0xff]
        %v1374 = vld [vmem:[#allocation2 + $0x18] sm:$0xff]
        %v1375 = vld [vmem:[#allocation2 + $0x20] sm:$0xff]
        %v1376 = vld [vmem:[#allocation2 + $0x30] sm:$0xff]
        %v1377 = vld [vmem:[#allocation2 + $0x38] sm:$0xff]
        %v1378 = vld [vmem:[#allocation2 + $0x48] sm:$0xff]
        %v1379 = vld [vmem:[#allocation2 + $0x50] sm:$0xff]
        %v1380 = vld [vmem:[#allocation2 + $0x60] sm:$0xff]
        %v1381 = vld [vmem:[#allocation2 + $0x68] sm:$0xff]
        %v1382 = vld [vmem:[#allocation2 + $0x78] sm:$0xff]
        %v1383 = vld [vmem:[#allocation2 + $0x80] sm:$0xff]
        %v1384 = vld [vmem:[#allocation2 + $0x90] sm:$0xff]
        %v1385 = vld [vmem:[#allocation2 + $0x98] sm:$0xff]
        %v1386 = vld [vmem:[#allocation2 + $0xa8] sm:$0xff]
        %v1387 = vld [vmem:[#allocation2 + $0xb0] sm:$0xff]
        %v1388 = vld [vmem:[#allocation2 + $0xc0] sm:$0xff]
        %v1389 = vld [vmem:[#allocation2 + $0xc8] sm:$0xff]
        %v1390 = vld [vmem:[#allocation2 + $0xd8] sm:$0xff]
        %v1391 = vld [vmem:[#allocation2 + $0xe0] sm:$0xff]
        %v1392 = vld [vmem:[#allocation2 + $0xf0] sm:$0xff]
        %v1393 = vld [vmem:[#allocation2 + $0xf8] sm:$0xff]
        %v1394 = vld [vmem:[#allocation2 + $0x108] sm:$0xff]
        %v1395 = vld [vmem:[#allocation2 + $0x110] sm:$0xff]
        %v1396 = vld [vmem:[#allocation2 + $0x120] sm:$0xff]
        %v1397 = vld [vmem:[#allocation2 + $0x128] sm:$0xff]
        %v1398 = vld [vmem:[#allocation2 + $0x138] sm:$0xff]
        %v1399 = vld [vmem:[#allocation2 + $0x140] sm:$0xff]
        %v1400 = vld [vmem:[#allocation2 + $0x150] sm:$0xff]
        %v1401 = vld [vmem:[#allocation2 + $0x158] sm:$0xff]
        %v1402 = vld [vmem:[#allocation2 + $0x168] sm:$0xff]
        %v1403 = vld [vmem:[#allocation2 + $0x170] sm:$0xff]
        %v1404 = vperm.slane %v1369, 0
        %v1405 = vmul.f32 %v1372, %v1404
        %v1406 = vmul.f32 %v1373, %v1404
        %v1407 = vmul.f32 %v1374, %v1404
        %v1408 = vmul.f32 %v1375, %v1404
        %v1409 = vmul.f32 %v1376, %v1404
        %v1410 = vmul.f32 %v1377, %v1404
        %v1411 = vmul.f32 %v1378, %v1404
        %v1412 = vmul.f32 %v1379, %v1404
        %v1413 = vmul.f32 %v1380, %v1404
        %v1414 = vmul.f32 %v1381, %v1404
        %v1415 = vmul.f32 %v1382, %v1404
        %v1416 = vmul.f32 %v1383, %v1404
        %v1417 = vmul.f32 %v1384, %v1404
        %v1418 = vmul.f32 %v1385, %v1404
        %v1419 = vmul.f32 %v1386, %v1404
        %v1420 = vmul.f32 %v1387, %v1404
        %v1421 = vmul.f32 %v1388, %v1404
        %v1422 = vmul.f32 %v1389, %v1404
        %v1423 = vmul.f32 %v1390, %v1404
        %v1424 = vmul.f32 %v1391, %v1404
        %v1425 = vmul.f32 %v1392, %v1404
        %v1426 = vmul.f32 %v1393, %v1404
        %v1427 = vmul.f32 %v1394, %v1404
        %v1428 = vmul.f32 %v1395, %v1404
        %v1429 = vmul.f32 %v1396, %v1404
        %v1430 = vmul.f32 %v1397, %v1404
        %v1431 = vmul.f32 %v1398, %v1404
        %v1432 = vmul.f32 %v1399, %v1404
        %v1433 = vmul.f32 %v1400, %v1404
        %v1434 = vmul.f32 %v1401, %v1404
        %v1435 = vmul.f32 %v1402, %v1404
        %v1436 = vmul.f32 %v1403, %v1404
        %v1437 = vadd.f32 %v1405, 0.0
        %v1438 = vadd.f32 %v1406, 0.0
        %v1439 = vadd.f32 %v1407, 0.0
        %v1440 = vadd.f32 %v1408, 0.0
        %v1441 = vadd.f32 %v1409, 0.0
        %v1442 = vadd.f32 %v1410, 0.0
        %v1443 = vadd.f32 %v1411, 0.0
        %v1444 = vadd.f32 %v1412, 0.0
        %v1445 = vadd.f32 %v1413, 0.0
        %v1446 = vadd.f32 %v1414, 0.0
        %v1447 = vadd.f32 %v1415, 0.0
        %v1448 = vadd.f32 %v1416, 0.0
        %v1449 = vadd.f32 %v1417, 0.0
        %v1450 = vadd.f32 %v1418, 0.0
        %v1451 = vadd.f32 %v1419, 0.0
        %v1452 = vadd.f32 %v1420, 0.0
        %v1453 = vadd.f32 %v1421, 0.0
        %v1454 = vadd.f32 %v1422, 0.0
        %v1455 = vadd.f32 %v1423, 0.0
        %v1456 = vadd.f32 %v1424, 0.0
        %v1457 = vadd.f32 %v1425, 0.0
        %v1458 = vadd.f32 %v1426, 0.0
        %v1459 = vadd.f32 %v1427, 0.0
        %v1460 = vadd.f32 %v1428, 0.0
        %v1461 = vadd.f32 %v1429, 0.0
        %v1462 = vadd.f32 %v1430, 0.0
        %v1463 = vadd.f32 %v1431, 0.0
        %v1464 = vadd.f32 %v1432, 0.0
        %v1465 = vadd.f32 %v1433, 0.0
        %v1466 = vadd.f32 %v1434, 0.0
        %v1467 = vadd.f32 %v1435, 0.0
        %v1468 = vadd.f32 %v1436, 0.0
        %v1469 = vld [vmem:[#allocation2 + $0x1] sm:$0xff]
        %v1470 = vld [vmem:[#allocation2 + $0x9] sm:$0xff]
        %v1471 = vld [vmem:[#allocation2 + $0x19] sm:$0xff]
        %v1472 = vld [vmem:[#allocation2 + $0x21] sm:$0xff]
        %v1473 = vld [vmem:[#allocation2 + $0x31] sm:$0xff]
        %v1474 = vld [vmem:[#allocation2 + $0x39] sm:$0xff]
        %v1475 = vld [vmem:[#allocation2 + $0x49] sm:$0xff]
        %v1476 = vld [vmem:[#allocation2 + $0x51] sm:$0xff]
        %v1477 = vld [vmem:[#allocation2 + $0x61] sm:$0xff]
        %v1478 = vld [vmem:[#allocation2 + $0x69] sm:$0xff]
        %v1479 = vld [vmem:[#allocation2 + $0x79] sm:$0xff]
        %v1480 = vld [vmem:[#allocation2 + $0x81] sm:$0xff]
        %v1481 = vld [vmem:[#allocation2 + $0x91] sm:$0xff]
        %v1482 = vld [vmem:[#allocation2 + $0x99] sm:$0xff]
        %v1483 = vld [vmem:[#allocation2 + $0xa9] sm:$0xff]
        %v1484 = vld [vmem:[#allocation2 + $0xb1] sm:$0xff]
        %v1485 = vld [vmem:[#allocation2 + $0xc1] sm:$0xff]
        %v1486 = vld [vmem:[#allocation2 + $0xc9] sm:$0xff]
        %v1487 = vld [vmem:[#allocation2 + $0xd9] sm:$0xff]
        %v1488 = vld [vmem:[#allocation2 + $0xe1] sm:$0xff]
        %v1489 = vld [vmem:[#allocation2 + $0xf1] sm:$0xff]
        %v1490 = vld [vmem:[#allocation2 + $0xf9] sm:$0xff]
        %v1491 = vld [vmem:[#allocation2 + $0x109] sm:$0xff]
        %v1492 = vld [vmem:[#allocation2 + $0x111] sm:$0xff]
        %v1493 = vld [vmem:[#allocation2 + $0x121] sm:$0xff]
        %v1494 = vld [vmem:[#allocation2 + $0x129] sm:$0xff]
        %v1495 = vld [vmem:[#allocation2 + $0x139] sm:$0xff]
        %v1496 = vld [vmem:[#allocation2 + $0x141] sm:$0xff]
        %v1497 = vld [vmem:[#allocation2 + $0x151] sm:$0xff]
        %v1498 = vld [vmem:[#allocation2 + $0x159] sm:$0xff]
        %v1499 = vld [vmem:[#allocation2 + $0x169] sm:$0xff]
        %v1500 = vld [vmem:[#allocation2 + $0x171] sm:$0xff]
        %v1501 = vperm.slane %v1369, 1
        %v1502 = vmul.f32 %v1469, %v1501
        %v1503 = vmul.f32 %v1470, %v1501
        %v1504 = vmul.f32 %v1471, %v1501
        %v1505 = vmul.f32 %v1472, %v1501
        %v1506 = vmul.f32 %v1473, %v1501
        %v1507 = vmul.f32 %v1474, %v1501
        %v1508 = vmul.f32 %v1475, %v1501
        %v1509 = vmul.f32 %v1476, %v1501
        %v1510 = vmul.f32 %v1477, %v1501
        %v1511 = vmul.f32 %v1478, %v1501
        %v1512 = vmul.f32 %v1479, %v1501
        %v1513 = vmul.f32 %v1480, %v1501
        %v1514 = vmul.f32 %v1481, %v1501
        %v1515 = vmul.f32 %v1482, %v1501
        %v1516 = vmul.f32 %v1483, %v1501
        %v1517 = vmul.f32 %v1484, %v1501
        %v1518 = vmul.f32 %v1485, %v1501
        %v1519 = vmul.f32 %v1486, %v1501
        %v1520 = vmul.f32 %v1487, %v1501
        %v1521 = vmul.f32 %v1488, %v1501
        %v1522 = vmul.f32 %v1489, %v1501
        %v1523 = vmul.f32 %v1490, %v1501
        %v1524 = vmul.f32 %v1491, %v1501
        %v1525 = vmul.f32 %v1492, %v1501
        %v1526 = vmul.f32 %v1493, %v1501
        %v1527 = vmul.f32 %v1494, %v1501
        %v1528 = vmul.f32 %v1495, %v1501
        %v1529 = vmul.f32 %v1496, %v1501
        %v1530 = vmul.f32 %v1497, %v1501
        %v1531 = vmul.f32 %v1498, %v1501
        %v1532 = vmul.f32 %v1499, %v1501
        %v1533 = vmul.f32 %v1500, %v1501
        %v1534 = vadd.f32 %v1437, %v1502
        %v1535 = vadd.f32 %v1438, %v1503
        %v1536 = vadd.f32 %v1439, %v1504
        %v1537 = vadd.f32 %v1440, %v1505
        %v1538 = vadd.f32 %v1441, %v1506
        %v1539 = vadd.f32 %v1442, %v1507
        %v1540 = vadd.f32 %v1443, %v1508
        %v1541 = vadd.f32 %v1444, %v1509
        %v1542 = vadd.f32 %v1445, %v1510
        %v1543 = vadd.f32 %v1446, %v1511
        %v1544 = vadd.f32 %v1447, %v1512
        %v1545 = vadd.f32 %v1448, %v1513
        %v1546 = vadd.f32 %v1449, %v1514
        %v1547 = vadd.f32 %v1450, %v1515
        %v1548 = vadd.f32 %v1451, %v1516
        %v1549 = vadd.f32 %v1452, %v1517
        %v1550 = vadd.f32 %v1453, %v1518
        %v1551 = vadd.f32 %v1454, %v1519
        %v1552 = vadd.f32 %v1455, %v1520
        %v1553 = vadd.f32 %v1456, %v1521
        %v1554 = vadd.f32 %v1457, %v1522
        %v1555 = vadd.f32 %v1458, %v1523
        %v1556 = vadd.f32 %v1459, %v1524
        %v1557 = vadd.f32 %v1460, %v1525
        %v1558 = vadd.f32 %v1461, %v1526
        %v1559 = vadd.f32 %v1462, %v1527
        %v1560 = vadd.f32 %v1463, %v1528
        %v1561 = vadd.f32 %v1464, %v1529
        %v1562 = vadd.f32 %v1465, %v1530
        %v1563 = vadd.f32 %v1466, %v1531
        %v1564 = vadd.f32 %v1467, %v1532
        %v1565 = vadd.f32 %v1468, %v1533
        %v1566 = vld [vmem:[#allocation2 + $0x2] sm:$0xff]
        %v1567 = vld [vmem:[#allocation2 + $0xa] sm:$0xff]
        %v1568 = vld [vmem:[#allocation2 + $0x1a] sm:$0xff]
        %v1569 = vld [vmem:[#allocation2 + $0x22] sm:$0xff]
        %v1570 = vld [vmem:[#allocation2 + $0x32] sm:$0xff]
        %v1571 = vld [vmem:[#allocation2 + $0x3a] sm:$0xff]
        %v1572 = vld [vmem:[#allocation2 + $0x4a] sm:$0xff]
        %v1573 = vld [vmem:[#allocation2 + $0x52] sm:$0xff]
        %v1574 = vld [vmem:[#allocation2 + $0x62] sm:$0xff]
        %v1575 = vld [vmem:[#allocation2 + $0x6a] sm:$0xff]
        %v1576 = vld [vmem:[#allocation2 + $0x7a] sm:$0xff]
        %v1577 = vld [vmem:[#allocation2 + $0x82] sm:$0xff]
        %v1578 = vld [vmem:[#allocation2 + $0x92] sm:$0xff]
        %v1579 = vld [vmem:[#allocation2 + $0x9a] sm:$0xff]
        %v1580 = vld [vmem:[#allocation2 + $0xaa] sm:$0xff]
        %v1581 = vld [vmem:[#allocation2 + $0xb2] sm:$0xff]
        %v1582 = vld [vmem:[#allocation2 + $0xc2] sm:$0xff]
        %v1583 = vld [vmem:[#allocation2 + $0xca] sm:$0xff]
        %v1584 = vld [vmem:[#allocation2 + $0xda] sm:$0xff]
        %v1585 = vld [vmem:[#allocation2 + $0xe2] sm:$0xff]
        %v1586 = vld [vmem:[#allocation2 + $0xf2] sm:$0xff]
        %v1587 = vld [vmem:[#allocation2 + $0xfa] sm:$0xff]
        %v1588 = vld [vmem:[#allocation2 + $0x10a] sm:$0xff]
        %v1589 = vld [vmem:[#allocation2 + $0x112] sm:$0xff]
        %v1590 = vld [vmem:[#allocation2 + $0x122] sm:$0xff]
        %v1591 = vld [vmem:[#allocation2 + $0x12a] sm:$0xff]
        %v1592 = vld [vmem:[#allocation2 + $0x13a] sm:$0xff]
        %v1593 = vld [vmem:[#allocation2 + $0x142] sm:$0xff]
        %v1594 = vld [vmem:[#allocation2 + $0x152] sm:$0xff]
        %v1595 = vld [vmem:[#allocation2 + $0x15a] sm:$0xff]
        %v1596 = vld [vmem:[#allocation2 + $0x16a] sm:$0xff]
        %v1597 = vld [vmem:[#allocation2 + $0x172] sm:$0xff]
        %v1598 = vperm.slane %v1369, 2
        %v1599 = vmul.f32 %v1566, %v1598
        %v1600 = vmul.f32 %v1567, %v1598
        %v1601 = vmul.f32 %v1568, %v1598
        %v1602 = vmul.f32 %v1569, %v1598
        %v1603 = vmul.f32 %v1570, %v1598
        %v1604 = vmul.f32 %v1571, %v1598
        %v1605 = vmul.f32 %v1572, %v1598
        %v1606 = vmul.f32 %v1573, %v1598
        %v1607 = vmul.f32 %v1574, %v1598
        %v1608 = vmul.f32 %v1575, %v1598
        %v1609 = vmul.f32 %v1576, %v1598
        %v1610 = vmul.f32 %v1577, %v1598
        %v1611 = vmul.f32 %v1578, %v1598
        %v1612 = vmul.f32 %v1579, %v1598
        %v1613 = vmul.f32 %v1580, %v1598
        %v1614 = vmul.f32 %v1581, %v1598
        %v1615 = vmul.f32 %v1582, %v1598
        %v1616 = vmul.f32 %v1583, %v1598
        %v1617 = vmul.f32 %v1584, %v1598
        %v1618 = vmul.f32 %v1585, %v1598
        %v1619 = vmul.f32 %v1586, %v1598
        %v1620 = vmul.f32 %v1587, %v1598
        %v1621 = vmul.f32 %v1588, %v1598
        %v1622 = vmul.f32 %v1589, %v1598
        %v1623 = vmul.f32 %v1590, %v1598
        %v1624 = vmul.f32 %v1591, %v1598
        %v1625 = vmul.f32 %v1592, %v1598
        %v1626 = vmul.f32 %v1593, %v1598
        %v1627 = vmul.f32 %v1594, %v1598
        %v1628 = vmul.f32 %v1595, %v1598
        %v1629 = vmul.f32 %v1596, %v1598
        %v1630 = vmul.f32 %v1597, %v1598
        %v1631 = vadd.f32 %v1534, %v1599
        %v1632 = vadd.f32 %v1535, %v1600
        %v1633 = vadd.f32 %v1536, %v1601
        %v1634 = vadd.f32 %v1537, %v1602
        %v1635 = vadd.f32 %v1538, %v1603
        %v1636 = vadd.f32 %v1539, %v1604
        %v1637 = vadd.f32 %v1540, %v1605
        %v1638 = vadd.f32 %v1541, %v1606
        %v1639 = vadd.f32 %v1542, %v1607
        %v1640 = vadd.f32 %v1543, %v1608
        %v1641 = vadd.f32 %v1544, %v1609
        %v1642 = vadd.f32 %v1545, %v1610
        %v1643 = vadd.f32 %v1546, %v1611
        %v1644 = vadd.f32 %v1547, %v1612
        %v1645 = vadd.f32 %v1548, %v1613
        %v1646 = vadd.f32 %v1549, %v1614
        %v1647 = vadd.f32 %v1550, %v1615
        %v1648 = vadd.f32 %v1551, %v1616
        %v1649 = vadd.f32 %v1552, %v1617
        %v1650 = vadd.f32 %v1553, %v1618
        %v1651 = vadd.f32 %v1554, %v1619
        %v1652 = vadd.f32 %v1555, %v1620
        %v1653 = vadd.f32 %v1556, %v1621
        %v1654 = vadd.f32 %v1557, %v1622
        %v1655 = vadd.f32 %v1558, %v1623
        %v1656 = vadd.f32 %v1559, %v1624
        %v1657 = vadd.f32 %v1560, %v1625
        %v1658 = vadd.f32 %v1561, %v1626
        %v1659 = vadd.f32 %v1562, %v1627
        %v1660 = vadd.f32 %v1563, %v1628
        %v1661 = vadd.f32 %v1564, %v1629
        %v1662 = vadd.f32 %v1565, %v1630
        %v1663 = vld [vmem:[%s325] sm:$0xff]
        %v1664 = vld [vmem:[%s325 + $0x8] sm:$0xff]
        %v1665 = vld [vmem:[%s325 + $0x18] sm:$0xff]
        %v1666 = vld [vmem:[%s325 + $0x20] sm:$0xff]
        %v1667 = vld [vmem:[%s325 + $0x30] sm:$0xff]
        %v1668 = vld [vmem:[%s325 + $0x38] sm:$0xff]
        %v1669 = vld [vmem:[%s325 + $0x48] sm:$0xff]
        %v1670 = vld [vmem:[%s325 + $0x50] sm:$0xff]
        %v1671 = vld [vmem:[%s325 + $0x60] sm:$0xff]
        %v1672 = vld [vmem:[%s325 + $0x68] sm:$0xff]
        %v1673 = vld [vmem:[%s325 + $0x78] sm:$0xff]
        %v1674 = vld [vmem:[%s325 + $0x80] sm:$0xff]
        %v1675 = vld [vmem:[%s325 + $0x90] sm:$0xff]
        %v1676 = vld [vmem:[%s325 + $0x98] sm:$0xff]
        %v1677 = vld [vmem:[%s325 + $0xa8] sm:$0xff]
        %v1678 = vld [vmem:[%s325 + $0xb0] sm:$0xff]
        %v1679 = vld [vmem:[%s325 + $0xc0] sm:$0xff]
        %v1680 = vld [vmem:[%s325 + $0xc8] sm:$0xff]
        %v1681 = vld [vmem:[%s325 + $0xd8] sm:$0xff]
        %v1682 = vld [vmem:[%s325 + $0xe0] sm:$0xff]
        %v1683 = vld [vmem:[%s325 + $0xf0] sm:$0xff]
        %v1684 = vld [vmem:[%s325 + $0xf8] sm:$0xff]
        %v1685 = vld [vmem:[%s325 + $0x108] sm:$0xff]
        %v1686 = vld [vmem:[%s325 + $0x110] sm:$0xff]
        %v1687 = vld [vmem:[%s325 + $0x120] sm:$0xff]
        %v1688 = vld [vmem:[%s325 + $0x128] sm:$0xff]
        %v1689 = vld [vmem:[%s325 + $0x138] sm:$0xff]
        %v1690 = vld [vmem:[%s325 + $0x140] sm:$0xff]
        %v1691 = vld [vmem:[%s325 + $0x150] sm:$0xff]
        %v1692 = vld [vmem:[%s325 + $0x158] sm:$0xff]
        %v1693 = vld [vmem:[%s325 + $0x168] sm:$0xff]
        %v1694 = vld [vmem:[%s325 + $0x170] sm:$0xff]
        %v1695 = vperm.slane %v1370, 0
        %v1696 = vmul.f32 %v1663, %v1695
        %v1697 = vmul.f32 %v1664, %v1695
        %v1698 = vmul.f32 %v1665, %v1695
        %v1699 = vmul.f32 %v1666, %v1695
        %v1700 = vmul.f32 %v1667, %v1695
        %v1701 = vmul.f32 %v1668, %v1695
        %v1702 = vmul.f32 %v1669, %v1695
        %v1703 = vmul.f32 %v1670, %v1695
        %v1704 = vmul.f32 %v1671, %v1695
        %v1705 = vmul.f32 %v1672, %v1695
        %v1706 = vmul.f32 %v1673, %v1695
        %v1707 = vmul.f32 %v1674, %v1695
        %v1708 = vmul.f32 %v1675, %v1695
        %v1709 = vmul.f32 %v1676, %v1695
        %v1710 = vmul.f32 %v1677, %v1695
        %v1711 = vmul.f32 %v1678, %v1695
        %v1712 = vmul.f32 %v1679, %v1695
        %v1713 = vmul.f32 %v1680, %v1695
        %v1714 = vmul.f32 %v1681, %v1695
        %v1715 = vmul.f32 %v1682, %v1695
        %v1716 = vmul.f32 %v1683, %v1695
        %v1717 = vmul.f32 %v1684, %v1695
        %v1718 = vmul.f32 %v1685, %v1695
        %v1719 = vmul.f32 %v1686, %v1695
        %v1720 = vmul.f32 %v1687, %v1695
        %v1721 = vmul.f32 %v1688, %v1695
        %v1722 = vmul.f32 %v1689, %v1695
        %v1723 = vmul.f32 %v1690, %v1695
        %v1724 = vmul.f32 %v1691, %v1695
        %v1725 = vmul.f32 %v1692, %v1695
        %v1726 = vmul.f32 %v1693, %v1695
        %v1727 = vmul.f32 %v1694, %v1695
        %v1728 = vadd.f32 %v1631, %v1696
        %v1729 = vadd.f32 %v1632, %v1697
        %v1730 = vadd.f32 %v1633, %v1698
        %v1731 = vadd.f32 %v1634, %v1699
        %v1732 = vadd.f32 %v1635, %v1700
        %v1733 = vadd.f32 %v1636, %v1701
        %v1734 = vadd.f32 %v1637, %v1702
        %v1735 = vadd.f32 %v1638, %v1703
        %v1736 = vadd.f32 %v1639, %v1704
        %v1737 = vadd.f32 %v1640, %v1705
        %v1738 = vadd.f32 %v1641, %v1706
        %v1739 = vadd.f32 %v1642, %v1707
        %v1740 = vadd.f32 %v1643, %v1708
        %v1741 = vadd.f32 %v1644, %v1709
        %v1742 = vadd.f32 %v1645, %v1710
        %v1743 = vadd.f32 %v1646, %v1711
        %v1744 = vadd.f32 %v1647, %v1712
        %v1745 = vadd.f32 %v1648, %v1713
        %v1746 = vadd.f32 %v1649, %v1714
        %v1747 = vadd.f32 %v1650, %v1715
        %v1748 = vadd.f32 %v1651, %v1716
        %v1749 = vadd.f32 %v1652, %v1717
        %v1750 = vadd.f32 %v1653, %v1718
        %v1751 = vadd.f32 %v1654, %v1719
        %v1752 = vadd.f32 %v1655, %v1720
        %v1753 = vadd.f32 %v1656, %v1721
        %v1754 = vadd.f32 %v1657, %v1722
        %v1755 = vadd.f32 %v1658, %v1723
        %v1756 = vadd.f32 %v1659, %v1724
        %v1757 = vadd.f32 %v1660, %v1725
        %v1758 = vadd.f32 %v1661, %v1726
        %v1759 = vadd.f32 %v1662, %v1727
        %v1760 = vld [vmem:[%s325 + $0x1] sm:$0xff]
        %v1761 = vld [vmem:[%s325 + $0x9] sm:$0xff]
        %v1762 = vld [vmem:[%s325 + $0x19] sm:$0xff]
        %v1763 = vld [vmem:[%s325 + $0x21] sm:$0xff]
        %v1764 = vld [vmem:[%s325 + $0x31] sm:$0xff]
        %v1765 = vld [vmem:[%s325 + $0x39] sm:$0xff]
        %v1766 = vld [vmem:[%s325 + $0x49] sm:$0xff]
        %v1767 = vld [vmem:[%s325 + $0x51] sm:$0xff]
        %v1768 = vld [vmem:[%s325 + $0x61] sm:$0xff]
        %v1769 = vld [vmem:[%s325 + $0x69] sm:$0xff]
        %v1770 = vld [vmem:[%s325 + $0x79] sm:$0xff]
        %v1771 = vld [vmem:[%s325 + $0x81] sm:$0xff]
        %v1772 = vld [vmem:[%s325 + $0x91] sm:$0xff]
        %v1773 = vld [vmem:[%s325 + $0x99] sm:$0xff]
        %v1774 = vld [vmem:[%s325 + $0xa9] sm:$0xff]
        %v1775 = vld [vmem:[%s325 + $0xb1] sm:$0xff]
        %v1776 = vld [vmem:[%s325 + $0xc1] sm:$0xff]
        %v1777 = vld [vmem:[%s325 + $0xc9] sm:$0xff]
        %v1778 = vld [vmem:[%s325 + $0xd9] sm:$0xff]
        %v1779 = vld [vmem:[%s325 + $0xe1] sm:$0xff]
        %v1780 = vld [vmem:[%s325 + $0xf1] sm:$0xff]
        %v1781 = vld [vmem:[%s325 + $0xf9] sm:$0xff]
        %v1782 = vld [vmem:[%s325 + $0x109] sm:$0xff]
        %v1783 = vld [vmem:[%s325 + $0x111] sm:$0xff]
        %v1784 = vld [vmem:[%s325 + $0x121] sm:$0xff]
        %v1785 = vld [vmem:[%s325 + $0x129] sm:$0xff]
        %v1786 = vld [vmem:[%s325 + $0x139] sm:$0xff]
        %v1787 = vld [vmem:[%s325 + $0x141] sm:$0xff]
        %v1788 = vld [vmem:[%s325 + $0x151] sm:$0xff]
        %v1789 = vld [vmem:[%s325 + $0x159] sm:$0xff]
        %v1790 = vld [vmem:[%s325 + $0x169] sm:$0xff]
        %v1791 = vld [vmem:[%s325 + $0x171] sm:$0xff]
        %v1792 = vperm.slane %v1370, 1
        %v1793 = vmul.f32 %v1760, %v1792
        %v1794 = vmul.f32 %v1761, %v1792
        %v1795 = vmul.f32 %v1762, %v1792
        %v1796 = vmul.f32 %v1763, %v1792
        %v1797 = vmul.f32 %v1764, %v1792
        %v1798 = vmul.f32 %v1765, %v1792
        %v1799 = vmul.f32 %v1766, %v1792
        %v1800 = vmul.f32 %v1767, %v1792
        %v1801 = vmul.f32 %v1768, %v1792
        %v1802 = vmul.f32 %v1769, %v1792
        %v1803 = vmul.f32 %v1770, %v1792
        %v1804 = vmul.f32 %v1771, %v1792
        %v1805 = vmul.f32 %v1772, %v1792
        %v1806 = vmul.f32 %v1773, %v1792
        %v1807 = vmul.f32 %v1774, %v1792
        %v1808 = vmul.f32 %v1775, %v1792
        %v1809 = vmul.f32 %v1776, %v1792
        %v1810 = vmul.f32 %v1777, %v1792
        %v1811 = vmul.f32 %v1778, %v1792
        %v1812 = vmul.f32 %v1779, %v1792
        %v1813 = vmul.f32 %v1780, %v1792
        %v1814 = vmul.f32 %v1781, %v1792
        %v1815 = vmul.f32 %v1782, %v1792
        %v1816 = vmul.f32 %v1783, %v1792
        %v1817 = vmul.f32 %v1784, %v1792
        %v1818 = vmul.f32 %v1785, %v1792
        %v1819 = vmul.f32 %v1786, %v1792
        %v1820 = vmul.f32 %v1787, %v1792
        %v1821 = vmul.f32 %v1788, %v1792
        %v1822 = vmul.f32 %v1789, %v1792
        %v1823 = vmul.f32 %v1790, %v1792
        %v1824 = vmul.f32 %v1791, %v1792
        %v1825 = vadd.f32 %v1728, %v1793
        %v1826 = vadd.f32 %v1729, %v1794
        %v1827 = vadd.f32 %v1730, %v1795
        %v1828 = vadd.f32 %v1731, %v1796
        %v1829 = vadd.f32 %v1732, %v1797
        %v1830 = vadd.f32 %v1733, %v1798
        %v1831 = vadd.f32 %v1734, %v1799
        %v1832 = vadd.f32 %v1735, %v1800
        %v1833 = vadd.f32 %v1736, %v1801
        %v1834 = vadd.f32 %v1737, %v1802
        %v1835 = vadd.f32 %v1738, %v1803
        %v1836 = vadd.f32 %v1739, %v1804
        %v1837 = vadd.f32 %v1740, %v1805
        %v1838 = vadd.f32 %v1741, %v1806
        %v1839 = vadd.f32 %v1742, %v1807
        %v1840 = vadd.f32 %v1743, %v1808
        %v1841 = vadd.f32 %v1744, %v1809
        %v1842 = vadd.f32 %v1745, %v1810
        %v1843 = vadd.f32 %v1746, %v1811
        %v1844 = vadd.f32 %v1747, %v1812
        %v1845 = vadd.f32 %v1748, %v1813
        %v1846 = vadd.f32 %v1749, %v1814
        %v1847 = vadd.f32 %v1750, %v1815
        %v1848 = vadd.f32 %v1751, %v1816
        %v1849 = vadd.f32 %v1752, %v1817
        %v1850 = vadd.f32 %v1753, %v1818
        %v1851 = vadd.f32 %v1754, %v1819
        %v1852 = vadd.f32 %v1755, %v1820
        %v1853 = vadd.f32 %v1756, %v1821
        %v1854 = vadd.f32 %v1757, %v1822
        %v1855 = vadd.f32 %v1758, %v1823
        %v1856 = vadd.f32 %v1759, %v1824
        %v1857 = vld [vmem:[%s325 + $0x2] sm:$0xff]
        %v1858 = vld [vmem:[%s325 + $0xa] sm:$0xff]
        %v1859 = vld [vmem:[%s325 + $0x1a] sm:$0xff]
        %v1860 = vld [vmem:[%s325 + $0x22] sm:$0xff]
        %v1861 = vld [vmem:[%s325 + $0x32] sm:$0xff]
        %v1862 = vld [vmem:[%s325 + $0x3a] sm:$0xff]
        %v1863 = vld [vmem:[%s325 + $0x4a] sm:$0xff]
        %v1864 = vld [vmem:[%s325 + $0x52] sm:$0xff]
        %v1865 = vld [vmem:[%s325 + $0x62] sm:$0xff]
        %v1866 = vld [vmem:[%s325 + $0x6a] sm:$0xff]
        %v1867 = vld [vmem:[%s325 + $0x7a] sm:$0xff]
        %v1868 = vld [vmem:[%s325 + $0x82] sm:$0xff]
        %v1869 = vld [vmem:[%s325 + $0x92] sm:$0xff]
        %v1870 = vld [vmem:[%s325 + $0x9a] sm:$0xff]
        %v1871 = vld [vmem:[%s325 + $0xaa] sm:$0xff]
        %v1872 = vld [vmem:[%s325 + $0xb2] sm:$0xff]
        %v1873 = vld [vmem:[%s325 + $0xc2] sm:$0xff]
        %v1874 = vld [vmem:[%s325 + $0xca] sm:$0xff]
        %v1875 = vld [vmem:[%s325 + $0xda] sm:$0xff]
        %v1876 = vld [vmem:[%s325 + $0xe2] sm:$0xff]
        %v1877 = vld [vmem:[%s325 + $0xf2] sm:$0xff]
        %v1878 = vld [vmem:[%s325 + $0xfa] sm:$0xff]
        %v1879 = vld [vmem:[%s325 + $0x10a] sm:$0xff]
        %v1880 = vld [vmem:[%s325 + $0x112] sm:$0xff]
        %v1881 = vld [vmem:[%s325 + $0x122] sm:$0xff]
        %v1882 = vld [vmem:[%s325 + $0x12a] sm:$0xff]
        %v1883 = vld [vmem:[%s325 + $0x13a] sm:$0xff]
        %v1884 = vld [vmem:[%s325 + $0x142] sm:$0xff]
        %v1885 = vld [vmem:[%s325 + $0x152] sm:$0xff]
        %v1886 = vld [vmem:[%s325 + $0x15a] sm:$0xff]
        %v1887 = vld [vmem:[%s325 + $0x16a] sm:$0xff]
        %v1888 = vld [vmem:[%s325 + $0x172] sm:$0xff]
        %v1889 = vperm.slane %v1370, 2
        %v1890 = vmul.f32 %v1857, %v1889
        %v1891 = vmul.f32 %v1858, %v1889
        %v1892 = vmul.f32 %v1859, %v1889
        %v1893 = vmul.f32 %v1860, %v1889
        %v1894 = vmul.f32 %v1861, %v1889
        %v1895 = vmul.f32 %v1862, %v1889
        %v1896 = vmul.f32 %v1863, %v1889
        %v1897 = vmul.f32 %v1864, %v1889
        %v1898 = vmul.f32 %v1865, %v1889
        %v1899 = vmul.f32 %v1866, %v1889
        %v1900 = vmul.f32 %v1867, %v1889
        %v1901 = vmul.f32 %v1868, %v1889
        %v1902 = vmul.f32 %v1869, %v1889
        %v1903 = vmul.f32 %v1870, %v1889
        %v1904 = vmul.f32 %v1871, %v1889
        %v1905 = vmul.f32 %v1872, %v1889
        %v1906 = vmul.f32 %v1873, %v1889
        %v1907 = vmul.f32 %v1874, %v1889
        %v1908 = vmul.f32 %v1875, %v1889
        %v1909 = vmul.f32 %v1876, %v1889
        %v1910 = vmul.f32 %v1877, %v1889
        %v1911 = vmul.f32 %v1878, %v1889
        %v1912 = vmul.f32 %v1879, %v1889
        %v1913 = vmul.f32 %v1880, %v1889
        %v1914 = vmul.f32 %v1881, %v1889
        %v1915 = vmul.f32 %v1882, %v1889
        %v1916 = vmul.f32 %v1883, %v1889
        %v1917 = vmul.f32 %v1884, %v1889
        %v1918 = vmul.f32 %v1885, %v1889
        %v1919 = vmul.f32 %v1886, %v1889
        %v1920 = vmul.f32 %v1887, %v1889
        %v1921 = vmul.f32 %v1888, %v1889
        %v1922 = vadd.f32 %v1825, %v1890
        %v1923 = vadd.f32 %v1826, %v1891
        %v1924 = vadd.f32 %v1827, %v1892
        %v1925 = vadd.f32 %v1828, %v1893
        %v1926 = vadd.f32 %v1829, %v1894
        %v1927 = vadd.f32 %v1830, %v1895
        %v1928 = vadd.f32 %v1831, %v1896
        %v1929 = vadd.f32 %v1832, %v1897
        %v1930 = vadd.f32 %v1833, %v1898
        %v1931 = vadd.f32 %v1834, %v1899
        %v1932 = vadd.f32 %v1835, %v1900
        %v1933 = vadd.f32 %v1836, %v1901
        %v1934 = vadd.f32 %v1837, %v1902
        %v1935 = vadd.f32 %v1838, %v1903
        %v1936 = vadd.f32 %v1839, %v1904
        %v1937 = vadd.f32 %v1840, %v1905
        %v1938 = vadd.f32 %v1841, %v1906
        %v1939 = vadd.f32 %v1842, %v1907
        %v1940 = vadd.f32 %v1843, %v1908
        %v1941 = vadd.f32 %v1844, %v1909
        %v1942 = vadd.f32 %v1845, %v1910
        %v1943 = vadd.f32 %v1846, %v1911
        %v1944 = vadd.f32 %v1847, %v1912
        %v1945 = vadd.f32 %v1848, %v1913
        %v1946 = vadd.f32 %v1849, %v1914
        %v1947 = vadd.f32 %v1850, %v1915
        %v1948 = vadd.f32 %v1851, %v1916
        %v1949 = vadd.f32 %v1852, %v1917
        %v1950 = vadd.f32 %v1853, %v1918
        %v1951 = vadd.f32 %v1854, %v1919
        %v1952 = vadd.f32 %v1855, %v1920
        %v1953 = vadd.f32 %v1856, %v1921
        %s1954 = scalar_lea.vmem [#allocation2], 48
        %v1955 = vld [vmem:[%s1954] sm:$0xff]
        %v1956 = vld [vmem:[%s1954 + $0x8] sm:$0xff]
        %v1957 = vld [vmem:[%s1954 + $0x18] sm:$0xff]
        %v1958 = vld [vmem:[%s1954 + $0x20] sm:$0xff]
        %v1959 = vld [vmem:[%s1954 + $0x30] sm:$0xff]
        %v1960 = vld [vmem:[%s1954 + $0x38] sm:$0xff]
        %v1961 = vld [vmem:[%s1954 + $0x48] sm:$0xff]
        %v1962 = vld [vmem:[%s1954 + $0x50] sm:$0xff]
        %v1963 = vld [vmem:[%s1954 + $0x60] sm:$0xff]
        %v1964 = vld [vmem:[%s1954 + $0x68] sm:$0xff]
        %v1965 = vld [vmem:[%s1954 + $0x78] sm:$0xff]
        %v1966 = vld [vmem:[%s1954 + $0x80] sm:$0xff]
        %v1967 = vld [vmem:[%s1954 + $0x90] sm:$0xff]
        %v1968 = vld [vmem:[%s1954 + $0x98] sm:$0xff]
        %v1969 = vld [vmem:[%s1954 + $0xa8] sm:$0xff]
        %v1970 = vld [vmem:[%s1954 + $0xb0] sm:$0xff]
        %v1971 = vld [vmem:[%s1954 + $0xc0] sm:$0xff]
        %v1972 = vld [vmem:[%s1954 + $0xc8] sm:$0xff]
        %v1973 = vld [vmem:[%s1954 + $0xd8] sm:$0xff]
        %v1974 = vld [vmem:[%s1954 + $0xe0] sm:$0xff]
        %v1975 = vld [vmem:[%s1954 + $0xf0] sm:$0xff]
        %v1976 = vld [vmem:[%s1954 + $0xf8] sm:$0xff]
        %v1977 = vld [vmem:[%s1954 + $0x108] sm:$0xff]
        %v1978 = vld [vmem:[%s1954 + $0x110] sm:$0xff]
        %v1979 = vld [vmem:[%s1954 + $0x120] sm:$0xff]
        %v1980 = vld [vmem:[%s1954 + $0x128] sm:$0xff]
        %v1981 = vld [vmem:[%s1954 + $0x138] sm:$0xff]
        %v1982 = vld [vmem:[%s1954 + $0x140] sm:$0xff]
        %v1983 = vld [vmem:[%s1954 + $0x150] sm:$0xff]
        %v1984 = vld [vmem:[%s1954 + $0x158] sm:$0xff]
        %v1985 = vld [vmem:[%s1954 + $0x168] sm:$0xff]
        %v1986 = vld [vmem:[%s1954 + $0x170] sm:$0xff]
        %v1987 = vperm.slane %v1371, 0
        %v1988 = vmul.f32 %v1955, %v1987
        %v1989 = vmul.f32 %v1956, %v1987
        %v1990 = vmul.f32 %v1957, %v1987
        %v1991 = vmul.f32 %v1958, %v1987
        %v1992 = vmul.f32 %v1959, %v1987
        %v1993 = vmul.f32 %v1960, %v1987
        %v1994 = vmul.f32 %v1961, %v1987
        %v1995 = vmul.f32 %v1962, %v1987
        %v1996 = vmul.f32 %v1963, %v1987
        %v1997 = vmul.f32 %v1964, %v1987
        %v1998 = vmul.f32 %v1965, %v1987
        %v1999 = vmul.f32 %v1966, %v1987
        %v2000 = vmul.f32 %v1967, %v1987
        %v2001 = vmul.f32 %v1968, %v1987
        %v2002 = vmul.f32 %v1969, %v1987
        %v2003 = vmul.f32 %v1970, %v1987
        %v2004 = vmul.f32 %v1971, %v1987
        %v2005 = vmul.f32 %v1972, %v1987
        %v2006 = vmul.f32 %v1973, %v1987
        %v2007 = vmul.f32 %v1974, %v1987
        %v2008 = vmul.f32 %v1975, %v1987
        %v2009 = vmul.f32 %v1976, %v1987
        %v2010 = vmul.f32 %v1977, %v1987
        %v2011 = vmul.f32 %v1978, %v1987
        %v2012 = vmul.f32 %v1979, %v1987
        %v2013 = vmul.f32 %v1980, %v1987
        %v2014 = vmul.f32 %v1981, %v1987
        %v2015 = vmul.f32 %v1982, %v1987
        %v2016 = vmul.f32 %v1983, %v1987
        %v2017 = vmul.f32 %v1984, %v1987
        %v2018 = vmul.f32 %v1985, %v1987
        %v2019 = vmul.f32 %v1986, %v1987
        %v2020 = vadd.f32 %v1922, %v1988
        %v2021 = vadd.f32 %v1923, %v1989
        %v2022 = vadd.f32 %v1924, %v1990
        %v2023 = vadd.f32 %v1925, %v1991
        %v2024 = vadd.f32 %v1926, %v1992
        %v2025 = vadd.f32 %v1927, %v1993
        %v2026 = vadd.f32 %v1928, %v1994
        %v2027 = vadd.f32 %v1929, %v1995
        %v2028 = vadd.f32 %v1930, %v1996
        %v2029 = vadd.f32 %v1931, %v1997
        %v2030 = vadd.f32 %v1932, %v1998
        %v2031 = vadd.f32 %v1933, %v1999
        %v2032 = vadd.f32 %v1934, %v2000
        %v2033 = vadd.f32 %v1935, %v2001
        %v2034 = vadd.f32 %v1936, %v2002
        %v2035 = vadd.f32 %v1937, %v2003
        %v2036 = vadd.f32 %v1938, %v2004
        %v2037 = vadd.f32 %v1939, %v2005
        %v2038 = vadd.f32 %v1940, %v2006
        %v2039 = vadd.f32 %v1941, %v2007
        %v2040 = vadd.f32 %v1942, %v2008
        %v2041 = vadd.f32 %v1943, %v2009
        %v2042 = vadd.f32 %v1944, %v2010
        %v2043 = vadd.f32 %v1945, %v2011
        %v2044 = vadd.f32 %v1946, %v2012
        %v2045 = vadd.f32 %v1947, %v2013
        %v2046 = vadd.f32 %v1948, %v2014
        %v2047 = vadd.f32 %v1949, %v2015
        %v2048 = vadd.f32 %v1950, %v2016
        %v2049 = vadd.f32 %v1951, %v2017
        %v2050 = vadd.f32 %v1952, %v2018
        %v2051 = vadd.f32 %v1953, %v2019
        %v2052 = vld [vmem:[%s1954 + $0x1] sm:$0xff]
        %v2053 = vld [vmem:[%s1954 + $0x9] sm:$0xff]
        %v2054 = vld [vmem:[%s1954 + $0x19] sm:$0xff]
        %v2055 = vld [vmem:[%s1954 + $0x21] sm:$0xff]
        %v2056 = vld [vmem:[%s1954 + $0x31] sm:$0xff]
        %v2057 = vld [vmem:[%s1954 + $0x39] sm:$0xff]
        %v2058 = vld [vmem:[%s1954 + $0x49] sm:$0xff]
        %v2059 = vld [vmem:[%s1954 + $0x51] sm:$0xff]
        %v2060 = vld [vmem:[%s1954 + $0x61] sm:$0xff]
        %v2061 = vld [vmem:[%s1954 + $0x69] sm:$0xff]
        %v2062 = vld [vmem:[%s1954 + $0x79] sm:$0xff]
        %v2063 = vld [vmem:[%s1954 + $0x81] sm:$0xff]
        %v2064 = vld [vmem:[%s1954 + $0x91] sm:$0xff]
        %v2065 = vld [vmem:[%s1954 + $0x99] sm:$0xff]
        %v2066 = vld [vmem:[%s1954 + $0xa9] sm:$0xff]
        %v2067 = vld [vmem:[%s1954 + $0xb1] sm:$0xff]
        %v2068 = vld [vmem:[%s1954 + $0xc1] sm:$0xff]
        %v2069 = vld [vmem:[%s1954 + $0xc9] sm:$0xff]
        %v2070 = vld [vmem:[%s1954 + $0xd9] sm:$0xff]
        %v2071 = vld [vmem:[%s1954 + $0xe1] sm:$0xff]
        %v2072 = vld [vmem:[%s1954 + $0xf1] sm:$0xff]
        %v2073 = vld [vmem:[%s1954 + $0xf9] sm:$0xff]
        %v2074 = vld [vmem:[%s1954 + $0x109] sm:$0xff]
        %v2075 = vld [vmem:[%s1954 + $0x111] sm:$0xff]
        %v2076 = vld [vmem:[%s1954 + $0x121] sm:$0xff]
        %v2077 = vld [vmem:[%s1954 + $0x129] sm:$0xff]
        %v2078 = vld [vmem:[%s1954 + $0x139] sm:$0xff]
        %v2079 = vld [vmem:[%s1954 + $0x141] sm:$0xff]
        %v2080 = vld [vmem:[%s1954 + $0x151] sm:$0xff]
        %v2081 = vld [vmem:[%s1954 + $0x159] sm:$0xff]
        %v2082 = vld [vmem:[%s1954 + $0x169] sm:$0xff]
        %v2083 = vld [vmem:[%s1954 + $0x171] sm:$0xff]
        %v2084 = vperm.slane %v1371, 1
        %v2085 = vmul.f32 %v2052, %v2084
        %v2086 = vmul.f32 %v2053, %v2084
        %v2087 = vmul.f32 %v2054, %v2084
        %v2088 = vmul.f32 %v2055, %v2084
        %v2089 = vmul.f32 %v2056, %v2084
        %v2090 = vmul.f32 %v2057, %v2084
        %v2091 = vmul.f32 %v2058, %v2084
        %v2092 = vmul.f32 %v2059, %v2084
        %v2093 = vmul.f32 %v2060, %v2084
        %v2094 = vmul.f32 %v2061, %v2084
        %v2095 = vmul.f32 %v2062, %v2084
        %v2096 = vmul.f32 %v2063, %v2084
        %v2097 = vmul.f32 %v2064, %v2084
        %v2098 = vmul.f32 %v2065, %v2084
        %v2099 = vmul.f32 %v2066, %v2084
        %v2100 = vmul.f32 %v2067, %v2084
        %v2101 = vmul.f32 %v2068, %v2084
        %v2102 = vmul.f32 %v2069, %v2084
        %v2103 = vmul.f32 %v2070, %v2084
        %v2104 = vmul.f32 %v2071, %v2084
        %v2105 = vmul.f32 %v2072, %v2084
        %v2106 = vmul.f32 %v2073, %v2084
        %v2107 = vmul.f32 %v2074, %v2084
        %v2108 = vmul.f32 %v2075, %v2084
        %v2109 = vmul.f32 %v2076, %v2084
        %v2110 = vmul.f32 %v2077, %v2084
        %v2111 = vmul.f32 %v2078, %v2084
        %v2112 = vmul.f32 %v2079, %v2084
        %v2113 = vmul.f32 %v2080, %v2084
        %v2114 = vmul.f32 %v2081, %v2084
        %v2115 = vmul.f32 %v2082, %v2084
        %v2116 = vmul.f32 %v2083, %v2084
        %v2117 = vadd.f32 %v2020, %v2085
        %v2118 = vadd.f32 %v2021, %v2086
        %v2119 = vadd.f32 %v2022, %v2087
        %v2120 = vadd.f32 %v2023, %v2088
        %v2121 = vadd.f32 %v2024, %v2089
        %v2122 = vadd.f32 %v2025, %v2090
        %v2123 = vadd.f32 %v2026, %v2091
        %v2124 = vadd.f32 %v2027, %v2092
        %v2125 = vadd.f32 %v2028, %v2093
        %v2126 = vadd.f32 %v2029, %v2094
        %v2127 = vadd.f32 %v2030, %v2095
        %v2128 = vadd.f32 %v2031, %v2096
        %v2129 = vadd.f32 %v2032, %v2097
        %v2130 = vadd.f32 %v2033, %v2098
        %v2131 = vadd.f32 %v2034, %v2099
        %v2132 = vadd.f32 %v2035, %v2100
        %v2133 = vadd.f32 %v2036, %v2101
        %v2134 = vadd.f32 %v2037, %v2102
        %v2135 = vadd.f32 %v2038, %v2103
        %v2136 = vadd.f32 %v2039, %v2104
        %v2137 = vadd.f32 %v2040, %v2105
        %v2138 = vadd.f32 %v2041, %v2106
        %v2139 = vadd.f32 %v2042, %v2107
        %v2140 = vadd.f32 %v2043, %v2108
        %v2141 = vadd.f32 %v2044, %v2109
        %v2142 = vadd.f32 %v2045, %v2110
        %v2143 = vadd.f32 %v2046, %v2111
        %v2144 = vadd.f32 %v2047, %v2112
        %v2145 = vadd.f32 %v2048, %v2113
        %v2146 = vadd.f32 %v2049, %v2114
        %v2147 = vadd.f32 %v2050, %v2115
        %v2148 = vadd.f32 %v2051, %v2116
        %v2149 = vld [vmem:[%s1954 + $0x2] sm:$0xff]
        %v2150 = vld [vmem:[%s1954 + $0xa] sm:$0xff]
        %v2151 = vld [vmem:[%s1954 + $0x1a] sm:$0xff]
        %v2152 = vld [vmem:[%s1954 + $0x22] sm:$0xff]
        %v2153 = vld [vmem:[%s1954 + $0x32] sm:$0xff]
        %v2154 = vld [vmem:[%s1954 + $0x3a] sm:$0xff]
        %v2155 = vld [vmem:[%s1954 + $0x4a] sm:$0xff]
        %v2156 = vld [vmem:[%s1954 + $0x52] sm:$0xff]
        %v2157 = vld [vmem:[%s1954 + $0x62] sm:$0xff]
        %v2158 = vld [vmem:[%s1954 + $0x6a] sm:$0xff]
        %v2159 = vld [vmem:[%s1954 + $0x7a] sm:$0xff]
        %v2160 = vld [vmem:[%s1954 + $0x82] sm:$0xff]
        %v2161 = vld [vmem:[%s1954 + $0x92] sm:$0xff]
        %v2162 = vld [vmem:[%s1954 + $0x9a] sm:$0xff]
        %v2163 = vld [vmem:[%s1954 + $0xaa] sm:$0xff]
        %v2164 = vld [vmem:[%s1954 + $0xb2] sm:$0xff]
        %v2165 = vld [vmem:[%s1954 + $0xc2] sm:$0xff]
        %v2166 = vld [vmem:[%s1954 + $0xca] sm:$0xff]
        %v2167 = vld [vmem:[%s1954 + $0xda] sm:$0xff]
        %v2168 = vld [vmem:[%s1954 + $0xe2] sm:$0xff]
        %v2169 = vld [vmem:[%s1954 + $0xf2] sm:$0xff]
        %v2170 = vld [vmem:[%s1954 + $0xfa] sm:$0xff]
        %v2171 = vld [vmem:[%s1954 + $0x10a] sm:$0xff]
        %v2172 = vld [vmem:[%s1954 + $0x112] sm:$0xff]
        %v2173 = vld [vmem:[%s1954 + $0x122] sm:$0xff]
        %v2174 = vld [vmem:[%s1954 + $0x12a] sm:$0xff]
        %v2175 = vld [vmem:[%s1954 + $0x13a] sm:$0xff]
        %v2176 = vld [vmem:[%s1954 + $0x142] sm:$0xff]
        %v2177 = vld [vmem:[%s1954 + $0x152] sm:$0xff]
        %v2178 = vld [vmem:[%s1954 + $0x15a] sm:$0xff]
        %v2179 = vld [vmem:[%s1954 + $0x16a] sm:$0xff]
        %v2180 = vld [vmem:[%s1954 + $0x172] sm:$0xff]
        %v2181 = vperm.slane %v1371, 2
        %v2182 = vmul.f32 %v2149, %v2181
        %v2183 = vmul.f32 %v2150, %v2181
        %v2184 = vmul.f32 %v2151, %v2181
        %v2185 = vmul.f32 %v2152, %v2181
        %v2186 = vmul.f32 %v2153, %v2181
        %v2187 = vmul.f32 %v2154, %v2181
        %v2188 = vmul.f32 %v2155, %v2181
        %v2189 = vmul.f32 %v2156, %v2181
        %v2190 = vmul.f32 %v2157, %v2181
        %v2191 = vmul.f32 %v2158, %v2181
        %v2192 = vmul.f32 %v2159, %v2181
        %v2193 = vmul.f32 %v2160, %v2181
        %v2194 = vmul.f32 %v2161, %v2181
        %v2195 = vmul.f32 %v2162, %v2181
        %v2196 = vmul.f32 %v2163, %v2181
        %v2197 = vmul.f32 %v2164, %v2181
        %v2198 = vmul.f32 %v2165, %v2181
        %v2199 = vmul.f32 %v2166, %v2181
        %v2200 = vmul.f32 %v2167, %v2181
        %v2201 = vmul.f32 %v2168, %v2181
        %v2202 = vmul.f32 %v2169, %v2181
        %v2203 = vmul.f32 %v2170, %v2181
        %v2204 = vmul.f32 %v2171, %v2181
        %v2205 = vmul.f32 %v2172, %v2181
        %v2206 = vmul.f32 %v2173, %v2181
        %v2207 = vmul.f32 %v2174, %v2181
        %v2208 = vmul.f32 %v2175, %v2181
        %v2209 = vmul.f32 %v2176, %v2181
        %v2210 = vmul.f32 %v2177, %v2181
        %v2211 = vmul.f32 %v2178, %v2181
        %v2212 = vmul.f32 %v2179, %v2181
        %v2213 = vmul.f32 %v2180, %v2181
        %v2214 = vadd.f32 %v2117, %v2182
        %v2215 = vadd.f32 %v2118, %v2183
        %v2216 = vadd.f32 %v2119, %v2184
        %v2217 = vadd.f32 %v2120, %v2185
        %v2218 = vadd.f32 %v2121, %v2186
        %v2219 = vadd.f32 %v2122, %v2187
        %v2220 = vadd.f32 %v2123, %v2188
        %v2221 = vadd.f32 %v2124, %v2189
        %v2222 = vadd.f32 %v2125, %v2190
        %v2223 = vadd.f32 %v2126, %v2191
        %v2224 = vadd.f32 %v2127, %v2192
        %v2225 = vadd.f32 %v2128, %v2193
        %v2226 = vadd.f32 %v2129, %v2194
        %v2227 = vadd.f32 %v2130, %v2195
        %v2228 = vadd.f32 %v2131, %v2196
        %v2229 = vadd.f32 %v2132, %v2197
        %v2230 = vadd.f32 %v2133, %v2198
        %v2231 = vadd.f32 %v2134, %v2199
        %v2232 = vadd.f32 %v2135, %v2200
        %v2233 = vadd.f32 %v2136, %v2201
        %v2234 = vadd.f32 %v2137, %v2202
        %v2235 = vadd.f32 %v2138, %v2203
        %v2236 = vadd.f32 %v2139, %v2204
        %v2237 = vadd.f32 %v2140, %v2205
        %v2238 = vadd.f32 %v2141, %v2206
        %v2239 = vadd.f32 %v2142, %v2207
        %v2240 = vadd.f32 %v2143, %v2208
        %v2241 = vadd.f32 %v2144, %v2209
        %v2242 = vadd.f32 %v2145, %v2210
        %v2243 = vadd.f32 %v2146, %v2211
        %v2244 = vadd.f32 %v2147, %v2212
        %v2245 = vadd.f32 %v2148, %v2213
        %v2246 = vld [vmem:[%s5] sm:$0x1]
        %v2248 = vperm.slane %v2246, 0
        %v2250 = vmul.f32 %v2214, %v2248
        %v2251 = vmul.f32 %v2215, %v2248
        %v2252 = vmul.f32 %v2216, %v2248
        %v2253 = vmul.f32 %v2217, %v2248
        %v2254 = vmul.f32 %v2218, %v2248
        %v2255 = vmul.f32 %v2219, %v2248
        %v2256 = vmul.f32 %v2220, %v2248
        %v2257 = vmul.f32 %v2221, %v2248
        %v2258 = vmul.f32 %v2222, %v2248
        %v2259 = vmul.f32 %v2223, %v2248
        %v2260 = vmul.f32 %v2224, %v2248
        %v2261 = vmul.f32 %v2225, %v2248
        %v2262 = vmul.f32 %v2226, %v2248
        %v2263 = vmul.f32 %v2227, %v2248
        %v2264 = vmul.f32 %v2228, %v2248
        %v2265 = vmul.f32 %v2229, %v2248
        %v2266 = vmul.f32 %v2230, %v2248
        %v2267 = vmul.f32 %v2231, %v2248
        %v2268 = vmul.f32 %v2232, %v2248
        %v2269 = vmul.f32 %v2233, %v2248
        %v2270 = vmul.f32 %v2234, %v2248
        %v2271 = vmul.f32 %v2235, %v2248
        %v2272 = vmul.f32 %v2236, %v2248
        %v2273 = vmul.f32 %v2237, %v2248
        %v2274 = vmul.f32 %v2238, %v2248
        %v2275 = vmul.f32 %v2239, %v2248
        %v2276 = vmul.f32 %v2240, %v2248
        %v2277 = vmul.f32 %v2241, %v2248
        %v2278 = vmul.f32 %v2242, %v2248
        %v2279 = vmul.f32 %v2243, %v2248
        %v2280 = vmul.f32 %v2244, %v2248
        %v2281 = vmul.f32 %v2245, %v2248
        %v2282 = vld [vmem:[%s6] sm:$0x1]
        %v2284 = vperm.slane %v2282, 0
        %v2286 = vadd.f32 %v2250, %v2284
        %v2287 = vadd.f32 %v2251, %v2284
        %v2288 = vadd.f32 %v2252, %v2284
        %v2289 = vadd.f32 %v2253, %v2284
        %v2290 = vadd.f32 %v2254, %v2284
        %v2291 = vadd.f32 %v2255, %v2284
        %v2292 = vadd.f32 %v2256, %v2284
        %v2293 = vadd.f32 %v2257, %v2284
        %v2294 = vadd.f32 %v2258, %v2284
        %v2295 = vadd.f32 %v2259, %v2284
        %v2296 = vadd.f32 %v2260, %v2284
        %v2297 = vadd.f32 %v2261, %v2284
        %v2298 = vadd.f32 %v2262, %v2284
        %v2299 = vadd.f32 %v2263, %v2284
        %v2300 = vadd.f32 %v2264, %v2284
        %v2301 = vadd.f32 %v2265, %v2284
        %v2302 = vadd.f32 %v2266, %v2284
        %v2303 = vadd.f32 %v2267, %v2284
        %v2304 = vadd.f32 %v2268, %v2284
        %v2305 = vadd.f32 %v2269, %v2284
        %v2306 = vadd.f32 %v2270, %v2284
        %v2307 = vadd.f32 %v2271, %v2284
        %v2308 = vadd.f32 %v2272, %v2284
        %v2309 = vadd.f32 %v2273, %v2284
        %v2310 = vadd.f32 %v2274, %v2284
        %v2311 = vadd.f32 %v2275, %v2284
        %v2312 = vadd.f32 %v2276, %v2284
        %v2313 = vadd.f32 %v2277, %v2284
        %v2314 = vadd.f32 %v2278, %v2284
        %v2315 = vadd.f32 %v2279, %v2284
        %v2316 = vadd.f32 %v2280, %v2284
        %v2317 = vadd.f32 %v2281, %v2284
        %v2318 = vxor.u32 %v2286, 2147483648
        %v2319 = vxor.u32 %v2287, 2147483648
        %v2320 = vxor.u32 %v2288, 2147483648
        %v2321 = vxor.u32 %v2289, 2147483648
        %v2322 = vxor.u32 %v2290, 2147483648
        %v2323 = vxor.u32 %v2291, 2147483648
        %v2324 = vxor.u32 %v2292, 2147483648
        %v2325 = vxor.u32 %v2293, 2147483648
        %v2326 = vxor.u32 %v2294, 2147483648
        %v2327 = vxor.u32 %v2295, 2147483648
        %v2328 = vxor.u32 %v2296, 2147483648
        %v2329 = vxor.u32 %v2297, 2147483648
        %v2330 = vxor.u32 %v2298, 2147483648
        %v2331 = vxor.u32 %v2299, 2147483648
        %v2332 = vxor.u32 %v2300, 2147483648
        %v2333 = vxor.u32 %v2301, 2147483648
        %v2334 = vxor.u32 %v2302, 2147483648
        %v2335 = vxor.u32 %v2303, 2147483648
        %v2336 = vxor.u32 %v2304, 2147483648
        %v2337 = vxor.u32 %v2305, 2147483648
        %v2338 = vxor.u32 %v2306, 2147483648
        %v2339 = vxor.u32 %v2307, 2147483648
        %v2340 = vxor.u32 %v2308, 2147483648
        %v2341 = vxor.u32 %v2309, 2147483648
        %v2342 = vxor.u32 %v2310, 2147483648
        %v2343 = vxor.u32 %v2311, 2147483648
        %v2344 = vxor.u32 %v2312, 2147483648
        %v2345 = vxor.u32 %v2313, 2147483648
        %v2346 = vxor.u32 %v2314, 2147483648
        %v2347 = vxor.u32 %v2315, 2147483648
        %v2348 = vxor.u32 %v2316, 2147483648
        %v2349 = vxor.u32 %v2317, 2147483648
        %v2350 = vmul.f32 %v2318, 1.442695
        %v2351 = vpow.pop %v2350
        %v2352 = vmul.f32 %v2319, 1.442695
        %v2353 = vpow.pop %v2352
        %v2354 = vmul.f32 %v2320, 1.442695
        %v2355 = vpow.pop %v2354
        %v2356 = vmul.f32 %v2321, 1.442695
        %v2357 = vpow.pop %v2356
        %v2358 = vmul.f32 %v2322, 1.442695
        %v2359 = vpow.pop %v2358
        %v2360 = vmul.f32 %v2323, 1.442695
        %v2361 = vpow.pop %v2360
        %v2362 = vmul.f32 %v2324, 1.442695
        %v2363 = vpow.pop %v2362
        %v2364 = vmul.f32 %v2325, 1.442695
        %v2365 = vpow.pop %v2364
        %v2366 = vmul.f32 %v2326, 1.442695
        %v2367 = vpow.pop %v2366
        %v2368 = vmul.f32 %v2327, 1.442695
        %v2369 = vpow.pop %v2368
        %v2370 = vmul.f32 %v2328, 1.442695
        %v2371 = vpow.pop %v2370
        %v2372 = vmul.f32 %v2329, 1.442695
        %v2373 = vpow.pop %v2372
        %v2374 = vmul.f32 %v2330, 1.442695
        %v2375 = vpow.pop %v2374
        %v2376 = vmul.f32 %v2331, 1.442695
        %v2377 = vpow.pop %v2376
        %v2378 = vmul.f32 %v2332, 1.442695
        %v2379 = vpow.pop %v2378
        %v2380 = vmul.f32 %v2333, 1.442695
        %v2381 = vpow.pop %v2380
        %v2382 = vmul.f32 %v2334, 1.442695
        %v2383 = vpow.pop %v2382
        %v2384 = vmul.f32 %v2335, 1.442695
        %v2385 = vpow.pop %v2384
        %v2386 = vmul.f32 %v2336, 1.442695
        %v2387 = vpow.pop %v2386
        %v2388 = vmul.f32 %v2337, 1.442695
        %v2389 = vpow.pop %v2388
        %v2390 = vmul.f32 %v2338, 1.442695
        %v2391 = vpow.pop %v2390
        %v2392 = vmul.f32 %v2339, 1.442695
        %v2393 = vpow.pop %v2392
        %v2394 = vmul.f32 %v2340, 1.442695
        %v2395 = vpow.pop %v2394
        %v2396 = vmul.f32 %v2341, 1.442695
        %v2397 = vpow.pop %v2396
        %v2398 = vmul.f32 %v2342, 1.442695
        %v2399 = vpow.pop %v2398
        %v2400 = vmul.f32 %v2343, 1.442695
        %v2401 = vpow.pop %v2400
        %v2402 = vmul.f32 %v2344, 1.442695
        %v2403 = vpow.pop %v2402
        %v2404 = vmul.f32 %v2345, 1.442695
        %v2405 = vpow.pop %v2404
        %v2406 = vmul.f32 %v2346, 1.442695
        %v2407 = vpow.pop %v2406
        %v2408 = vmul.f32 %v2347, 1.442695
        %v2409 = vpow.pop %v2408
        %v2410 = vmul.f32 %v2348, 1.442695
        %v2411 = vpow.pop %v2410
        %v2412 = vmul.f32 %v2349, 1.442695
        %v2413 = vpow.pop %v2412
        %v2414 = vadd.f32 %v2351, 1.0
        %v2415 = vadd.f32 %v2353, 1.0
        %v2416 = vadd.f32 %v2355, 1.0
        %v2417 = vadd.f32 %v2357, 1.0
        %v2418 = vadd.f32 %v2359, 1.0
        %v2419 = vadd.f32 %v2361, 1.0
        %v2420 = vadd.f32 %v2363, 1.0
        %v2421 = vadd.f32 %v2365, 1.0
        %v2422 = vadd.f32 %v2367, 1.0
        %v2423 = vadd.f32 %v2369, 1.0
        %v2424 = vadd.f32 %v2371, 1.0
        %v2425 = vadd.f32 %v2373, 1.0
        %v2426 = vadd.f32 %v2375, 1.0
        %v2427 = vadd.f32 %v2377, 1.0
        %v2428 = vadd.f32 %v2379, 1.0
        %v2429 = vadd.f32 %v2381, 1.0
        %v2430 = vadd.f32 %v2383, 1.0
        %v2431 = vadd.f32 %v2385, 1.0
        %v2432 = vadd.f32 %v2387, 1.0
        %v2433 = vadd.f32 %v2389, 1.0
        %v2434 = vadd.f32 %v2391, 1.0
        %v2435 = vadd.f32 %v2393, 1.0
        %v2436 = vadd.f32 %v2395, 1.0
        %v2437 = vadd.f32 %v2397, 1.0
        %v2438 = vadd.f32 %v2399, 1.0
        %v2439 = vadd.f32 %v2401, 1.0
        %v2440 = vadd.f32 %v2403, 1.0
        %v2441 = vadd.f32 %v2405, 1.0
        %v2442 = vadd.f32 %v2407, 1.0
        %v2443 = vadd.f32 %v2409, 1.0
        %v2444 = vadd.f32 %v2411, 1.0
        %v2445 = vadd.f32 %v2413, 1.0
        %v2446 = vrcp.pop %v2414
        %v2447 = vmul.f32 %v2414, %v2446
        %v2448 = vsub.f32 1.0, %v2447
        %v2449 = vmul.f32 %v2446, %v2448
        %v2450 = vadd.f32 %v2446, %v2449
        %vm2451 = vweird.f32 %v2414
        %vm2452 = vweird.f32 %v2446
        %vm2453 = vmor %vm2451, %vm2452
        %v2454 = vsel %vm2453, %v2446, %v2450
        %v2455 = vand.u32 2147483647, %v2414
        %vm2456 = vcmp.eq.f32.partialorder %v2455, 8.507059e+37
        %v2457 = vand.u32 %v2414, 2147483648
        %v2458 = vor.u32 1.1754944e-38, %v2457
        %v2459 = vsel %vm2456, %v2458, %v2454
        %v2460 = vmul.f32 1.0, %v2459
        %v2461 = vrcp.pop %v2415
        %v2462 = vmul.f32 %v2415, %v2461
        %v2463 = vsub.f32 1.0, %v2462
        %v2464 = vmul.f32 %v2461, %v2463
        %v2465 = vadd.f32 %v2461, %v2464
        %vm2466 = vweird.f32 %v2415
        %vm2467 = vweird.f32 %v2461
        %vm2468 = vmor %vm2466, %vm2467
        %v2469 = vsel %vm2468, %v2461, %v2465
        %v2470 = vand.u32 2147483647, %v2415
        %vm2471 = vcmp.eq.f32.partialorder %v2470, 8.507059e+37
        %v2472 = vand.u32 %v2415, 2147483648
        %v2473 = vor.u32 1.1754944e-38, %v2472
        %v2474 = vsel %vm2471, %v2473, %v2469
        %v2475 = vmul.f32 1.0, %v2474
        %v2476 = vrcp.pop %v2416
        %v2477 = vmul.f32 %v2416, %v2476
        %v2478 = vsub.f32 1.0, %v2477
        %v2479 = vmul.f32 %v2476, %v2478
        %v2480 = vadd.f32 %v2476, %v2479
        %vm2481 = vweird.f32 %v2416
        %vm2482 = vweird.f32 %v2476
        %vm2483 = vmor %vm2481, %vm2482
        %v2484 = vsel %vm2483, %v2476, %v2480
        %v2485 = vand.u32 2147483647, %v2416
        %vm2486 = vcmp.eq.f32.partialorder %v2485, 8.507059e+37
        %v2487 = vand.u32 %v2416, 2147483648
        %v2488 = vor.u32 1.1754944e-38, %v2487
        %v2489 = vsel %vm2486, %v2488, %v2484
        %v2490 = vmul.f32 1.0, %v2489
        %v2491 = vrcp.pop %v2417
        %v2492 = vmul.f32 %v2417, %v2491
        %v2493 = vsub.f32 1.0, %v2492
        %v2494 = vmul.f32 %v2491, %v2493
        %v2495 = vadd.f32 %v2491, %v2494
        %vm2496 = vweird.f32 %v2417
        %vm2497 = vweird.f32 %v2491
        %vm2498 = vmor %vm2496, %vm2497
        %v2499 = vsel %vm2498, %v2491, %v2495
        %v2500 = vand.u32 2147483647, %v2417
        %vm2501 = vcmp.eq.f32.partialorder %v2500, 8.507059e+37
        %v2502 = vand.u32 %v2417, 2147483648
        %v2503 = vor.u32 1.1754944e-38, %v2502
        %v2504 = vsel %vm2501, %v2503, %v2499
        %v2505 = vmul.f32 1.0, %v2504
        %v2506 = vrcp.pop %v2418
        %v2507 = vmul.f32 %v2418, %v2506
        %v2508 = vsub.f32 1.0, %v2507
        %v2509 = vmul.f32 %v2506, %v2508
        %v2510 = vadd.f32 %v2506, %v2509
        %vm2511 = vweird.f32 %v2418
        %vm2512 = vweird.f32 %v2506
        %vm2513 = vmor %vm2511, %vm2512
        %v2514 = vsel %vm2513, %v2506, %v2510
        %v2515 = vand.u32 2147483647, %v2418
        %vm2516 = vcmp.eq.f32.partialorder %v2515, 8.507059e+37
        %v2517 = vand.u32 %v2418, 2147483648
        %v2518 = vor.u32 1.1754944e-38, %v2517
        %v2519 = vsel %vm2516, %v2518, %v2514
        %v2520 = vmul.f32 1.0, %v2519
        %v2521 = vrcp.pop %v2419
        %v2522 = vmul.f32 %v2419, %v2521
        %v2523 = vsub.f32 1.0, %v2522
        %v2524 = vmul.f32 %v2521, %v2523
        %v2525 = vadd.f32 %v2521, %v2524
        %vm2526 = vweird.f32 %v2419
        %vm2527 = vweird.f32 %v2521
        %vm2528 = vmor %vm2526, %vm2527
        %v2529 = vsel %vm2528, %v2521, %v2525
        %v2530 = vand.u32 2147483647, %v2419
        %vm2531 = vcmp.eq.f32.partialorder %v2530, 8.507059e+37
        %v2532 = vand.u32 %v2419, 2147483648
        %v2533 = vor.u32 1.1754944e-38, %v2532
        %v2534 = vsel %vm2531, %v2533, %v2529
        %v2535 = vmul.f32 1.0, %v2534
        %v2536 = vrcp.pop %v2420
        %v2537 = vmul.f32 %v2420, %v2536
        %v2538 = vsub.f32 1.0, %v2537
        %v2539 = vmul.f32 %v2536, %v2538
        %v2540 = vadd.f32 %v2536, %v2539
        %vm2541 = vweird.f32 %v2420
        %vm2542 = vweird.f32 %v2536
        %vm2543 = vmor %vm2541, %vm2542
        %v2544 = vsel %vm2543, %v2536, %v2540
        %v2545 = vand.u32 2147483647, %v2420
        %vm2546 = vcmp.eq.f32.partialorder %v2545, 8.507059e+37
        %v2547 = vand.u32 %v2420, 2147483648
        %v2548 = vor.u32 1.1754944e-38, %v2547
        %v2549 = vsel %vm2546, %v2548, %v2544
        %v2550 = vmul.f32 1.0, %v2549
        %v2551 = vrcp.pop %v2421
        %v2552 = vmul.f32 %v2421, %v2551
        %v2553 = vsub.f32 1.0, %v2552
        %v2554 = vmul.f32 %v2551, %v2553
        %v2555 = vadd.f32 %v2551, %v2554
        %vm2556 = vweird.f32 %v2421
        %vm2557 = vweird.f32 %v2551
        %vm2558 = vmor %vm2556, %vm2557
        %v2559 = vsel %vm2558, %v2551, %v2555
        %v2560 = vand.u32 2147483647, %v2421
        %vm2561 = vcmp.eq.f32.partialorder %v2560, 8.507059e+37
        %v2562 = vand.u32 %v2421, 2147483648
        %v2563 = vor.u32 1.1754944e-38, %v2562
        %v2564 = vsel %vm2561, %v2563, %v2559
        %v2565 = vmul.f32 1.0, %v2564
        %v2566 = vrcp.pop %v2422
        %v2567 = vmul.f32 %v2422, %v2566
        %v2568 = vsub.f32 1.0, %v2567
        %v2569 = vmul.f32 %v2566, %v2568
        %v2570 = vadd.f32 %v2566, %v2569
        %vm2571 = vweird.f32 %v2422
        %vm2572 = vweird.f32 %v2566
        %vm2573 = vmor %vm2571, %vm2572
        %v2574 = vsel %vm2573, %v2566, %v2570
        %v2575 = vand.u32 2147483647, %v2422
        %vm2576 = vcmp.eq.f32.partialorder %v2575, 8.507059e+37
        %v2577 = vand.u32 %v2422, 2147483648
        %v2578 = vor.u32 1.1754944e-38, %v2577
        %v2579 = vsel %vm2576, %v2578, %v2574
        %v2580 = vmul.f32 1.0, %v2579
        %v2581 = vrcp.pop %v2423
        %v2582 = vmul.f32 %v2423, %v2581
        %v2583 = vsub.f32 1.0, %v2582
        %v2584 = vmul.f32 %v2581, %v2583
        %v2585 = vadd.f32 %v2581, %v2584
        %vm2586 = vweird.f32 %v2423
        %vm2587 = vweird.f32 %v2581
        %vm2588 = vmor %vm2586, %vm2587
        %v2589 = vsel %vm2588, %v2581, %v2585
        %v2590 = vand.u32 2147483647, %v2423
        %vm2591 = vcmp.eq.f32.partialorder %v2590, 8.507059e+37
        %v2592 = vand.u32 %v2423, 2147483648
        %v2593 = vor.u32 1.1754944e-38, %v2592
        %v2594 = vsel %vm2591, %v2593, %v2589
        %v2595 = vmul.f32 1.0, %v2594
        %v2596 = vrcp.pop %v2424
        %v2597 = vmul.f32 %v2424, %v2596
        %v2598 = vsub.f32 1.0, %v2597
        %v2599 = vmul.f32 %v2596, %v2598
        %v2600 = vadd.f32 %v2596, %v2599
        %vm2601 = vweird.f32 %v2424
        %vm2602 = vweird.f32 %v2596
        %vm2603 = vmor %vm2601, %vm2602
        %v2604 = vsel %vm2603, %v2596, %v2600
        %v2605 = vand.u32 2147483647, %v2424
        %vm2606 = vcmp.eq.f32.partialorder %v2605, 8.507059e+37
        %v2607 = vand.u32 %v2424, 2147483648
        %v2608 = vor.u32 1.1754944e-38, %v2607
        %v2609 = vsel %vm2606, %v2608, %v2604
        %v2610 = vmul.f32 1.0, %v2609
        %v2611 = vrcp.pop %v2425
        %v2612 = vmul.f32 %v2425, %v2611
        %v2613 = vsub.f32 1.0, %v2612
        %v2614 = vmul.f32 %v2611, %v2613
        %v2615 = vadd.f32 %v2611, %v2614
        %vm2616 = vweird.f32 %v2425
        %vm2617 = vweird.f32 %v2611
        %vm2618 = vmor %vm2616, %vm2617
        %v2619 = vsel %vm2618, %v2611, %v2615
        %v2620 = vand.u32 2147483647, %v2425
        %vm2621 = vcmp.eq.f32.partialorder %v2620, 8.507059e+37
        %v2622 = vand.u32 %v2425, 2147483648
        %v2623 = vor.u32 1.1754944e-38, %v2622
        %v2624 = vsel %vm2621, %v2623, %v2619
        %v2625 = vmul.f32 1.0, %v2624
        %v2626 = vrcp.pop %v2426
        %v2627 = vmul.f32 %v2426, %v2626
        %v2628 = vsub.f32 1.0, %v2627
        %v2629 = vmul.f32 %v2626, %v2628
        %v2630 = vadd.f32 %v2626, %v2629
        %vm2631 = vweird.f32 %v2426
        %vm2632 = vweird.f32 %v2626
        %vm2633 = vmor %vm2631, %vm2632
        %v2634 = vsel %vm2633, %v2626, %v2630
        %v2635 = vand.u32 2147483647, %v2426
        %vm2636 = vcmp.eq.f32.partialorder %v2635, 8.507059e+37
        %v2637 = vand.u32 %v2426, 2147483648
        %v2638 = vor.u32 1.1754944e-38, %v2637
        %v2639 = vsel %vm2636, %v2638, %v2634
        %v2640 = vmul.f32 1.0, %v2639
        %v2641 = vrcp.pop %v2427
        %v2642 = vmul.f32 %v2427, %v2641
        %v2643 = vsub.f32 1.0, %v2642
        %v2644 = vmul.f32 %v2641, %v2643
        %v2645 = vadd.f32 %v2641, %v2644
        %vm2646 = vweird.f32 %v2427
        %vm2647 = vweird.f32 %v2641
        %vm2648 = vmor %vm2646, %vm2647
        %v2649 = vsel %vm2648, %v2641, %v2645
        %v2650 = vand.u32 2147483647, %v2427
        %vm2651 = vcmp.eq.f32.partialorder %v2650, 8.507059e+37
        %v2652 = vand.u32 %v2427, 2147483648
        %v2653 = vor.u32 1.1754944e-38, %v2652
        %v2654 = vsel %vm2651, %v2653, %v2649
        %v2655 = vmul.f32 1.0, %v2654
        %v2656 = vrcp.pop %v2428
        %v2657 = vmul.f32 %v2428, %v2656
        %v2658 = vsub.f32 1.0, %v2657
        %v2659 = vmul.f32 %v2656, %v2658
        %v2660 = vadd.f32 %v2656, %v2659
        %vm2661 = vweird.f32 %v2428
        %vm2662 = vweird.f32 %v2656
        %vm2663 = vmor %vm2661, %vm2662
        %v2664 = vsel %vm2663, %v2656, %v2660
        %v2665 = vand.u32 2147483647, %v2428
        %vm2666 = vcmp.eq.f32.partialorder %v2665, 8.507059e+37
        %v2667 = vand.u32 %v2428, 2147483648
        %v2668 = vor.u32 1.1754944e-38, %v2667
        %v2669 = vsel %vm2666, %v2668, %v2664
        %v2670 = vmul.f32 1.0, %v2669
        %v2671 = vrcp.pop %v2429
        %v2672 = vmul.f32 %v2429, %v2671
        %v2673 = vsub.f32 1.0, %v2672
        %v2674 = vmul.f32 %v2671, %v2673
        %v2675 = vadd.f32 %v2671, %v2674
        %vm2676 = vweird.f32 %v2429
        %vm2677 = vweird.f32 %v2671
        %vm2678 = vmor %vm2676, %vm2677
        %v2679 = vsel %vm2678, %v2671, %v2675
        %v2680 = vand.u32 2147483647, %v2429
        %vm2681 = vcmp.eq.f32.partialorder %v2680, 8.507059e+37
        %v2682 = vand.u32 %v2429, 2147483648
        %v2683 = vor.u32 1.1754944e-38, %v2682
        %v2684 = vsel %vm2681, %v2683, %v2679
        %v2685 = vmul.f32 1.0, %v2684
        %v2686 = vrcp.pop %v2430
        %v2687 = vmul.f32 %v2430, %v2686
        %v2688 = vsub.f32 1.0, %v2687
        %v2689 = vmul.f32 %v2686, %v2688
        %v2690 = vadd.f32 %v2686, %v2689
        %vm2691 = vweird.f32 %v2430
        %vm2692 = vweird.f32 %v2686
        %vm2693 = vmor %vm2691, %vm2692
        %v2694 = vsel %vm2693, %v2686, %v2690
        %v2695 = vand.u32 2147483647, %v2430
        %vm2696 = vcmp.eq.f32.partialorder %v2695, 8.507059e+37
        %v2697 = vand.u32 %v2430, 2147483648
        %v2698 = vor.u32 1.1754944e-38, %v2697
        %v2699 = vsel %vm2696, %v2698, %v2694
        %v2700 = vmul.f32 1.0, %v2699
        %v2701 = vrcp.pop %v2431
        %v2702 = vmul.f32 %v2431, %v2701
        %v2703 = vsub.f32 1.0, %v2702
        %v2704 = vmul.f32 %v2701, %v2703
        %v2705 = vadd.f32 %v2701, %v2704
        %vm2706 = vweird.f32 %v2431
        %vm2707 = vweird.f32 %v2701
        %vm2708 = vmor %vm2706, %vm2707
        %v2709 = vsel %vm2708, %v2701, %v2705
        %v2710 = vand.u32 2147483647, %v2431
        %vm2711 = vcmp.eq.f32.partialorder %v2710, 8.507059e+37
        %v2712 = vand.u32 %v2431, 2147483648
        %v2713 = vor.u32 1.1754944e-38, %v2712
        %v2714 = vsel %vm2711, %v2713, %v2709
        %v2715 = vmul.f32 1.0, %v2714
        %v2716 = vrcp.pop %v2432
        %v2717 = vmul.f32 %v2432, %v2716
        %v2718 = vsub.f32 1.0, %v2717
        %v2719 = vmul.f32 %v2716, %v2718
        %v2720 = vadd.f32 %v2716, %v2719
        %vm2721 = vweird.f32 %v2432
        %vm2722 = vweird.f32 %v2716
        %vm2723 = vmor %vm2721, %vm2722
        %v2724 = vsel %vm2723, %v2716, %v2720
        %v2725 = vand.u32 2147483647, %v2432
        %vm2726 = vcmp.eq.f32.partialorder %v2725, 8.507059e+37
        %v2727 = vand.u32 %v2432, 2147483648
        %v2728 = vor.u32 1.1754944e-38, %v2727
        %v2729 = vsel %vm2726, %v2728, %v2724
        %v2730 = vmul.f32 1.0, %v2729
        %v2731 = vrcp.pop %v2433
        %v2732 = vmul.f32 %v2433, %v2731
        %v2733 = vsub.f32 1.0, %v2732
        %v2734 = vmul.f32 %v2731, %v2733
        %v2735 = vadd.f32 %v2731, %v2734
        %vm2736 = vweird.f32 %v2433
        %vm2737 = vweird.f32 %v2731
        %vm2738 = vmor %vm2736, %vm2737
        %v2739 = vsel %vm2738, %v2731, %v2735
        %v2740 = vand.u32 2147483647, %v2433
        %vm2741 = vcmp.eq.f32.partialorder %v2740, 8.507059e+37
        %v2742 = vand.u32 %v2433, 2147483648
        %v2743 = vor.u32 1.1754944e-38, %v2742
        %v2744 = vsel %vm2741, %v2743, %v2739
        %v2745 = vmul.f32 1.0, %v2744
        %v2746 = vrcp.pop %v2434
        %v2747 = vmul.f32 %v2434, %v2746
        %v2748 = vsub.f32 1.0, %v2747
        %v2749 = vmul.f32 %v2746, %v2748
        %v2750 = vadd.f32 %v2746, %v2749
        %vm2751 = vweird.f32 %v2434
        %vm2752 = vweird.f32 %v2746
        %vm2753 = vmor %vm2751, %vm2752
        %v2754 = vsel %vm2753, %v2746, %v2750
        %v2755 = vand.u32 2147483647, %v2434
        %vm2756 = vcmp.eq.f32.partialorder %v2755, 8.507059e+37
        %v2757 = vand.u32 %v2434, 2147483648
        %v2758 = vor.u32 1.1754944e-38, %v2757
        %v2759 = vsel %vm2756, %v2758, %v2754
        %v2760 = vmul.f32 1.0, %v2759
        %v2761 = vrcp.pop %v2435
        %v2762 = vmul.f32 %v2435, %v2761
        %v2763 = vsub.f32 1.0, %v2762
        %v2764 = vmul.f32 %v2761, %v2763
        %v2765 = vadd.f32 %v2761, %v2764
        %vm2766 = vweird.f32 %v2435
        %vm2767 = vweird.f32 %v2761
        %vm2768 = vmor %vm2766, %vm2767
        %v2769 = vsel %vm2768, %v2761, %v2765
        %v2770 = vand.u32 2147483647, %v2435
        %vm2771 = vcmp.eq.f32.partialorder %v2770, 8.507059e+37
        %v2772 = vand.u32 %v2435, 2147483648
        %v2773 = vor.u32 1.1754944e-38, %v2772
        %v2774 = vsel %vm2771, %v2773, %v2769
        %v2775 = vmul.f32 1.0, %v2774
        %v2776 = vrcp.pop %v2436
        %v2777 = vmul.f32 %v2436, %v2776
        %v2778 = vsub.f32 1.0, %v2777
        %v2779 = vmul.f32 %v2776, %v2778
        %v2780 = vadd.f32 %v2776, %v2779
        %vm2781 = vweird.f32 %v2436
        %vm2782 = vweird.f32 %v2776
        %vm2783 = vmor %vm2781, %vm2782
        %v2784 = vsel %vm2783, %v2776, %v2780
        %v2785 = vand.u32 2147483647, %v2436
        %vm2786 = vcmp.eq.f32.partialorder %v2785, 8.507059e+37
        %v2787 = vand.u32 %v2436, 2147483648
        %v2788 = vor.u32 1.1754944e-38, %v2787
        %v2789 = vsel %vm2786, %v2788, %v2784
        %v2790 = vmul.f32 1.0, %v2789
        %v2791 = vrcp.pop %v2437
        %v2792 = vmul.f32 %v2437, %v2791
        %v2793 = vsub.f32 1.0, %v2792
        %v2794 = vmul.f32 %v2791, %v2793
        %v2795 = vadd.f32 %v2791, %v2794
        %vm2796 = vweird.f32 %v2437
        %vm2797 = vweird.f32 %v2791
        %vm2798 = vmor %vm2796, %vm2797
        %v2799 = vsel %vm2798, %v2791, %v2795
        %v2800 = vand.u32 2147483647, %v2437
        %vm2801 = vcmp.eq.f32.partialorder %v2800, 8.507059e+37
        %v2802 = vand.u32 %v2437, 2147483648
        %v2803 = vor.u32 1.1754944e-38, %v2802
        %v2804 = vsel %vm2801, %v2803, %v2799
        %v2805 = vmul.f32 1.0, %v2804
        %v2806 = vrcp.pop %v2438
        %v2807 = vmul.f32 %v2438, %v2806
        %v2808 = vsub.f32 1.0, %v2807
        %v2809 = vmul.f32 %v2806, %v2808
        %v2810 = vadd.f32 %v2806, %v2809
        %vm2811 = vweird.f32 %v2438
        %vm2812 = vweird.f32 %v2806
        %vm2813 = vmor %vm2811, %vm2812
        %v2814 = vsel %vm2813, %v2806, %v2810
        %v2815 = vand.u32 2147483647, %v2438
        %vm2816 = vcmp.eq.f32.partialorder %v2815, 8.507059e+37
        %v2817 = vand.u32 %v2438, 2147483648
        %v2818 = vor.u32 1.1754944e-38, %v2817
        %v2819 = vsel %vm2816, %v2818, %v2814
        %v2820 = vmul.f32 1.0, %v2819
        %v2821 = vrcp.pop %v2439
        %v2822 = vmul.f32 %v2439, %v2821
        %v2823 = vsub.f32 1.0, %v2822
        %v2824 = vmul.f32 %v2821, %v2823
        %v2825 = vadd.f32 %v2821, %v2824
        %vm2826 = vweird.f32 %v2439
        %vm2827 = vweird.f32 %v2821
        %vm2828 = vmor %vm2826, %vm2827
        %v2829 = vsel %vm2828, %v2821, %v2825
        %v2830 = vand.u32 2147483647, %v2439
        %vm2831 = vcmp.eq.f32.partialorder %v2830, 8.507059e+37
        %v2832 = vand.u32 %v2439, 2147483648
        %v2833 = vor.u32 1.1754944e-38, %v2832
        %v2834 = vsel %vm2831, %v2833, %v2829
        %v2835 = vmul.f32 1.0, %v2834
        %v2836 = vrcp.pop %v2440
        %v2837 = vmul.f32 %v2440, %v2836
        %v2838 = vsub.f32 1.0, %v2837
        %v2839 = vmul.f32 %v2836, %v2838
        %v2840 = vadd.f32 %v2836, %v2839
        %vm2841 = vweird.f32 %v2440
        %vm2842 = vweird.f32 %v2836
        %vm2843 = vmor %vm2841, %vm2842
        %v2844 = vsel %vm2843, %v2836, %v2840
        %v2845 = vand.u32 2147483647, %v2440
        %vm2846 = vcmp.eq.f32.partialorder %v2845, 8.507059e+37
        %v2847 = vand.u32 %v2440, 2147483648
        %v2848 = vor.u32 1.1754944e-38, %v2847
        %v2849 = vsel %vm2846, %v2848, %v2844
        %v2850 = vmul.f32 1.0, %v2849
        %v2851 = vrcp.pop %v2441
        %v2852 = vmul.f32 %v2441, %v2851
        %v2853 = vsub.f32 1.0, %v2852
        %v2854 = vmul.f32 %v2851, %v2853
        %v2855 = vadd.f32 %v2851, %v2854
        %vm2856 = vweird.f32 %v2441
        %vm2857 = vweird.f32 %v2851
        %vm2858 = vmor %vm2856, %vm2857
        %v2859 = vsel %vm2858, %v2851, %v2855
        %v2860 = vand.u32 2147483647, %v2441
        %vm2861 = vcmp.eq.f32.partialorder %v2860, 8.507059e+37
        %v2862 = vand.u32 %v2441, 2147483648
        %v2863 = vor.u32 1.1754944e-38, %v2862
        %v2864 = vsel %vm2861, %v2863, %v2859
        %v2865 = vmul.f32 1.0, %v2864
        %v2866 = vrcp.pop %v2442
        %v2867 = vmul.f32 %v2442, %v2866
        %v2868 = vsub.f32 1.0, %v2867
        %v2869 = vmul.f32 %v2866, %v2868
        %v2870 = vadd.f32 %v2866, %v2869
        %vm2871 = vweird.f32 %v2442
        %vm2872 = vweird.f32 %v2866
        %vm2873 = vmor %vm2871, %vm2872
        %v2874 = vsel %vm2873, %v2866, %v2870
        %v2875 = vand.u32 2147483647, %v2442
        %vm2876 = vcmp.eq.f32.partialorder %v2875, 8.507059e+37
        %v2877 = vand.u32 %v2442, 2147483648
        %v2878 = vor.u32 1.1754944e-38, %v2877
        %v2879 = vsel %vm2876, %v2878, %v2874
        %v2880 = vmul.f32 1.0, %v2879
        %v2881 = vrcp.pop %v2443
        %v2882 = vmul.f32 %v2443, %v2881
        %v2883 = vsub.f32 1.0, %v2882
        %v2884 = vmul.f32 %v2881, %v2883
        %v2885 = vadd.f32 %v2881, %v2884
        %vm2886 = vweird.f32 %v2443
        %vm2887 = vweird.f32 %v2881
        %vm2888 = vmor %vm2886, %vm2887
        %v2889 = vsel %vm2888, %v2881, %v2885
        %v2890 = vand.u32 2147483647, %v2443
        %vm2891 = vcmp.eq.f32.partialorder %v2890, 8.507059e+37
        %v2892 = vand.u32 %v2443, 2147483648
        %v2893 = vor.u32 1.1754944e-38, %v2892
        %v2894 = vsel %vm2891, %v2893, %v2889
        %v2895 = vmul.f32 1.0, %v2894
        %v2896 = vrcp.pop %v2444
        %v2897 = vmul.f32 %v2444, %v2896
        %v2898 = vsub.f32 1.0, %v2897
        %v2899 = vmul.f32 %v2896, %v2898
        %v2900 = vadd.f32 %v2896, %v2899
        %vm2901 = vweird.f32 %v2444
        %vm2902 = vweird.f32 %v2896
        %vm2903 = vmor %vm2901, %vm2902
        %v2904 = vsel %vm2903, %v2896, %v2900
        %v2905 = vand.u32 2147483647, %v2444
        %vm2906 = vcmp.eq.f32.partialorder %v2905, 8.507059e+37
        %v2907 = vand.u32 %v2444, 2147483648
        %v2908 = vor.u32 1.1754944e-38, %v2907
        %v2909 = vsel %vm2906, %v2908, %v2904
        %v2910 = vmul.f32 1.0, %v2909
        %v2911 = vrcp.pop %v2445
        %v2912 = vmul.f32 %v2445, %v2911
        %v2913 = vsub.f32 1.0, %v2912
        %v2914 = vmul.f32 %v2911, %v2913
        %v2915 = vadd.f32 %v2911, %v2914
        %vm2916 = vweird.f32 %v2445
        %vm2917 = vweird.f32 %v2911
        %vm2918 = vmor %vm2916, %vm2917
        %v2919 = vsel %vm2918, %v2911, %v2915
        %v2920 = vand.u32 2147483647, %v2445
        %vm2921 = vcmp.eq.f32.partialorder %v2920, 8.507059e+37
        %v2922 = vand.u32 %v2445, 2147483648
        %v2923 = vor.u32 1.1754944e-38, %v2922
        %v2924 = vsel %vm2921, %v2923, %v2919
        %v2925 = vmul.f32 1.0, %v2924
        %v2926 = vmul.f32 %v2286, %v2460
        %v2927 = vmul.f32 %v2287, %v2475
        %v2928 = vmul.f32 %v2288, %v2490
        %v2929 = vmul.f32 %v2289, %v2505
        %v2930 = vmul.f32 %v2290, %v2520
        %v2931 = vmul.f32 %v2291, %v2535
        %v2932 = vmul.f32 %v2292, %v2550
        %v2933 = vmul.f32 %v2293, %v2565
        %v2934 = vmul.f32 %v2294, %v2580
        %v2935 = vmul.f32 %v2295, %v2595
        %v2936 = vmul.f32 %v2296, %v2610
        %v2937 = vmul.f32 %v2297, %v2625
        %v2938 = vmul.f32 %v2298, %v2640
        %v2939 = vmul.f32 %v2299, %v2655
        %v2940 = vmul.f32 %v2300, %v2670
        %v2941 = vmul.f32 %v2301, %v2685
        %v2942 = vmul.f32 %v2302, %v2700
        %v2943 = vmul.f32 %v2303, %v2715
        %v2944 = vmul.f32 %v2304, %v2730
        %v2945 = vmul.f32 %v2305, %v2745
        %v2946 = vmul.f32 %v2306, %v2760
        %v2947 = vmul.f32 %v2307, %v2775
        %v2948 = vmul.f32 %v2308, %v2790
        %v2949 = vmul.f32 %v2309, %v2805
        %v2950 = vmul.f32 %v2310, %v2820
        %v2951 = vmul.f32 %v2311, %v2835
        %v2952 = vmul.f32 %v2312, %v2850
        %v2953 = vmul.f32 %v2313, %v2865
        %v2954 = vmul.f32 %v2314, %v2880
        %v2955 = vmul.f32 %v2315, %v2895
        %v2956 = vmul.f32 %v2316, %v2910
        %v2957 = vmul.f32 %v2317, %v2925
        %2958 = vst.msk [vmem:[%s315] sm:$0xff] %vm316, %v2926
        %2959 = vst.msk [vmem:[%s315 + $0x8] sm:$0xff] %vm316, %v2927
        %2960 = vst.msk [vmem:[%s315 + $0x10] sm:$0xff] %vm316, %v2928
        %2961 = vst.msk [vmem:[%s315 + $0x18] sm:$0xff] %vm316, %v2929
        %2962 = vst.msk [vmem:[%s315 + $0x20] sm:$0xff] %vm316, %v2930
        %2963 = vst.msk [vmem:[%s315 + $0x28] sm:$0xff] %vm316, %v2931
        %2964 = vst.msk [vmem:[%s315 + $0x30] sm:$0xff] %vm316, %v2932
        %2965 = vst.msk [vmem:[%s315 + $0x38] sm:$0xff] %vm316, %v2933
        %2966 = vst.msk [vmem:[%s315 + $0x40] sm:$0xff] %vm316, %v2934
        %2967 = vst.msk [vmem:[%s315 + $0x48] sm:$0xff] %vm316, %v2935
        %2968 = vst.msk [vmem:[%s315 + $0x50] sm:$0xff] %vm316, %v2936
        %2969 = vst.msk [vmem:[%s315 + $0x58] sm:$0xff] %vm316, %v2937
        %2970 = vst.msk [vmem:[%s315 + $0x60] sm:$0xff] %vm316, %v2938
        %2971 = vst.msk [vmem:[%s315 + $0x68] sm:$0xff] %vm316, %v2939
        %2972 = vst.msk [vmem:[%s315 + $0x70] sm:$0xff] %vm316, %v2940
        %2973 = vst.msk [vmem:[%s315 + $0x78] sm:$0xff] %vm316, %v2941
        %2974 = vst.msk [vmem:[%s315 + $0x80] sm:$0xff] %vm316, %v2942
        %2975 = vst.msk [vmem:[%s315 + $0x88] sm:$0xff] %vm316, %v2943
        %2976 = vst.msk [vmem:[%s315 + $0x90] sm:$0xff] %vm316, %v2944
        %2977 = vst.msk [vmem:[%s315 + $0x98] sm:$0xff] %vm316, %v2945
        %2978 = vst.msk [vmem:[%s315 + $0xa0] sm:$0xff] %vm316, %v2946
        %2979 = vst.msk [vmem:[%s315 + $0xa8] sm:$0xff] %vm316, %v2947
        %2980 = vst.msk [vmem:[%s315 + $0xb0] sm:$0xff] %vm316, %v2948
        %2981 = vst.msk [vmem:[%s315 + $0xb8] sm:$0xff] %vm316, %v2949
        %2982 = vst.msk [vmem:[%s315 + $0xc0] sm:$0xff] %vm316, %v2950
        %2983 = vst.msk [vmem:[%s315 + $0xc8] sm:$0xff] %vm316, %v2951
        %2984 = vst.msk [vmem:[%s315 + $0xd0] sm:$0xff] %vm316, %v2952
        %2985 = vst.msk [vmem:[%s315 + $0xd8] sm:$0xff] %vm316, %v2953
        %2986 = vst.msk [vmem:[%s315 + $0xe0] sm:$0xff] %vm316, %v2954
        %2987 = vst.msk [vmem:[%s315 + $0xe8] sm:$0xff] %vm316, %v2955
        %2988 = vst.msk [vmem:[%s315 + $0xf0] sm:$0xff] %vm316, %v2956
        %2989 = vst.msk [vmem:[%s315 + $0xf8] sm:$0xff] %vm316, %v2957
        %v2990 = vsel %vm316, %v2926, 0.0
        %v2991 = vsel %vm316, %v2927, 0.0
        %v2992 = vadd.f32 %v2990, %v2991
        %v2993 = vsel %vm316, %v2928, 0.0
        %v2994 = vadd.f32 %v2992, %v2993
        %v2995 = vsel %vm316, %v2929, 0.0
        %v2996 = vadd.f32 %v2994, %v2995
        %v2997 = vsel %vm316, %v2930, 0.0
        %v2998 = vadd.f32 %v2996, %v2997
        %v2999 = vsel %vm316, %v2931, 0.0
        %v3000 = vadd.f32 %v2998, %v2999
        %v3001 = vsel %vm316, %v2932, 0.0
        %v3002 = vadd.f32 %v3000, %v3001
        %v3003 = vsel %vm316, %v2933, 0.0
        %v3004 = vadd.f32 %v3002, %v3003
        %v3005 = vsel %vm316, %v2934, 0.0
        %v3006 = vadd.f32 %v3004, %v3005
        %v3007 = vsel %vm316, %v2935, 0.0
        %v3008 = vadd.f32 %v3006, %v3007
        %v3009 = vsel %vm316, %v2936, 0.0
        %v3010 = vadd.f32 %v3008, %v3009
        %v3011 = vsel %vm316, %v2937, 0.0
        %v3012 = vadd.f32 %v3010, %v3011
        %v3013 = vsel %vm316, %v2938, 0.0
        %v3014 = vadd.f32 %v3012, %v3013
        %v3015 = vsel %vm316, %v2939, 0.0
        %v3016 = vadd.f32 %v3014, %v3015
        %v3017 = vsel %vm316, %v2940, 0.0
        %v3018 = vadd.f32 %v3016, %v3017
        %v3019 = vsel %vm316, %v2941, 0.0
        %v3020 = vadd.f32 %v3018, %v3019
        %v3021 = vsel %vm316, %v2942, 0.0
        %v3022 = vadd.f32 %v3020, %v3021
        %v3023 = vsel %vm316, %v2943, 0.0
        %v3024 = vadd.f32 %v3022, %v3023
        %v3025 = vsel %vm316, %v2944, 0.0
        %v3026 = vadd.f32 %v3024, %v3025
        %v3027 = vsel %vm316, %v2945, 0.0
        %v3028 = vadd.f32 %v3026, %v3027
        %v3029 = vsel %vm316, %v2946, 0.0
        %v3030 = vadd.f32 %v3028, %v3029
        %v3031 = vsel %vm316, %v2947, 0.0
        %v3032 = vadd.f32 %v3030, %v3031
        %v3033 = vsel %vm316, %v2948, 0.0
        %v3034 = vadd.f32 %v3032, %v3033
        %v3035 = vsel %vm316, %v2949, 0.0
        %v3036 = vadd.f32 %v3034, %v3035
        %v3037 = vsel %vm316, %v2950, 0.0
        %v3038 = vadd.f32 %v3036, %v3037
        %v3039 = vsel %vm316, %v2951, 0.0
        %v3040 = vadd.f32 %v3038, %v3039
        %v3041 = vsel %vm316, %v2952, 0.0
        %v3042 = vadd.f32 %v3040, %v3041
        %v3043 = vsel %vm316, %v2953, 0.0
        %v3044 = vadd.f32 %v3042, %v3043
        %v3045 = vsel %vm316, %v2954, 0.0
        %v3046 = vadd.f32 %v3044, %v3045
        %v3047 = vsel %vm316, %v2955, 0.0
        %v3048 = vadd.f32 %v3046, %v3047
        %v3049 = vsel %vm316, %v2956, 0.0
        %v3050 = vadd.f32 %v3048, %v3049
        %v3051 = vsel %vm316, %v2957, 0.0
        %v3052 = vadd.f32 %v3050, %v3051
        %v3053 = vrot.slane %v3052, 4
        %v3054 = vadd.f32 %v3052, %v3053
        %v3055 = vrot.slane %v3054, 2
        %v3056 = vadd.f32 %v3054, %v3055
        %v3057 = vrot.slane %v3056, 1
        %v3058 = vadd.f32 %v3056, %v3057
        %3059 = vst.msk [vmem:[%s305] sm:$0x1] %vm326, %v3058
        %p3060 = scmp.lt.s32.totalorder %s23, 1
        %s3061 = scalar_select %p3060, %s23, 1
        %s3062 = smul.addr %s3061, 32
        %s3063 = smul.addr %s3062, 8
        %s3064 = scalar_lea.vmem %s7, %s3063
        %s3065 = sand.u32 %s209, 1
        %s3066 = scalar_lea.sflag [#allocation4], %s3065
        %s3067 = sand.u32 %s209, 1
        %s3068 = scalar_lea.vmem [#allocation3], %s3067
        // Predicated region
        $region49: #{tpu_custom_call.1} parent=47 // pred_check
          %p3069 = pneg %p193
        $region50: #{tpu_custom_call.1} parent=47 // pred_check_branch
          %3071 = sbr.rel (%p3069) target = $region52
        $region51: #{tpu_custom_call.1} parent=47 // pred_region
          _
        $region52: #{tpu_custom_call.1} parent=47 // pred_fallthru
          _
        // Predicated region
        $region53: #{tpu_custom_call.1} parent=47 // pred_check
          %p3072 = pneg %p219
        $region54: #{tpu_custom_call.1} parent=47 // pred_check_branch
          %3074 = sbr.rel (%p3072) target = $region56
        $region55: #{tpu_custom_call.1} parent=47 // pred_region
          %3076 = vsyncadd %s3066, 0
          %s3077 = scalar_lea.hbm %s8, %s23
          %s3079 = sshll.u32 %s3068, 4
          %s3080 = int_to_ptr.vmem [resolvable:$true] %s3079
          %s3081 = sshll.u32 %s3077, 4
          %s3082 = int_to_ptr.hbm [resolvable:$true] %s3081
          %3084 = dma.vmem_to_hbm [thread:$0]  %s3080, 16, %s3082, %s3066
        $region56: #{tpu_custom_call.1} parent=47 // pred_fallthru
          _
      $region48: #{tpu_custom_call.1} parent=5 // pred_fallthru
        _
      %p3085 = scmp.le.s32.totalorder 2, %s18
      // Predicated region
      $region57: #{tpu_custom_call.1} parent=5 // pred_check
        %p3086 = pneg %p3085
      $region58: #{tpu_custom_call.1} parent=5 // pred_check_branch
        %3088 = sbr.rel (%p3086) target = $region60
      $region59: #{tpu_custom_call.1} parent=5 // pred_region
        %s3089 = ssub.s32 %s18, 2
        // Predicated region
        $region61: #{tpu_custom_call.1} parent=59 // pred_check
          %p3090 = pneg %p199
        $region62: #{tpu_custom_call.1} parent=59 // pred_check_branch
          %3092 = sbr.rel (%p3090) target = $region64
        $region63: #{tpu_custom_call.1} parent=59 // pred_region
          %p3093 = scmp.lt.s32.totalorder %s24, 1
          %s3094 = scalar_select %p3093, %s24, 1
          %s3095 = smul.addr %s3094, 32
          %s3096 = smul.addr %s3095, 8
          %s3097 = scalar_lea.vmem %s7, %s3096
        $region64: #{tpu_custom_call.1} parent=59 // pred_fallthru
          _
        // Predicated region
        $region65: #{tpu_custom_call.1} parent=59 // pred_check
          %p3098 = pneg %p225
        $region66: #{tpu_custom_call.1} parent=59 // pred_check_branch
          %3100 = sbr.rel (%p3098) target = $region68
        $region67: #{tpu_custom_call.1} parent=59 // pred_region
          %s3101 = sand.u32 %s210, 1
          %s3102 = scalar_lea.sflag [#allocation4], %s3101
          %s3103 = sand.u32 %s210, 1
          %s3104 = scalar_lea.vmem [#allocation3], %s3103
          %3106 = dma.done %s3102, 16
        $region68: #{tpu_custom_call.1} parent=59 // pred_fallthru
          _
      $region60: #{tpu_custom_call.1} parent=5 // pred_fallthru
        _
    $region6: #{tpu_custom_call.1} parent=1 // loop_footer
      %s22 = sadd.s32 1, %s18
    $region7: #{tpu_custom_call.1} parent=1 // loop_footer_branch
      %17 = sbr.rel target = $region3
    $region8: #{tpu_custom_call.1} parent=1 // loop_exit
      _
    %3107 = vsyncpa [#allocation4], 1
    %s3108 = scalar_lea.sflag [#allocation4], 1
    %3109 = vsyncpa %s3108, 1

</llo_original>
